<compile_context>
chip_gen: v7x
topology: tpu7x:2x2x1
jax: 0.10.0
libtpu: 0.0.40
codegen_flags: <defaults>
</compile_context>

<pallas_src>
import functools

import jax
import jax.numpy as jnp
from jax.experimental import pallas as pl
from jax.experimental.pallas import tpu as pltpu


def _conv_block_kernel(x_ref, w1_ref, b1_ref, w2_ref, b2_ref, *rest,
                       H, W, Cin, Cout, apply_dropout, keep_threshold,
                       keep_scale):
    """One batch element per grid step (all refs in VMEM).

    x_ref  : (1, Cin, H*W)      input (NCHW, spatial flattened -> lane-dense)
    w1_ref : (Cout, 9*Cin)      conv1 weights, tap-major (dy, dx, cin) columns
    b1_ref : (Cout, 1)          conv1 bias
    w2_ref : (Cout, 9*Cout)     conv2 weights
    b2_ref : (Cout, 1)          conv2 bias
    bits_ref (optional, if apply_dropout): (1, Cout, H*W) uint32 random bits
    o_ref  : (1, Cout, H*W)     output (lane-dense store)
    """
    if apply_dropout:
        bits_ref, o_ref = rest
    else:
        (o_ref,) = rest

    def pad_hw(t):
        # (C, H, W) -> (C, H+2, W+2), zero border, built in VMEM (no HBM pad).
        C = t.shape[0]
        z_col = jnp.zeros((C, H, 1), jnp.float32)
        z_row = jnp.zeros((C, 1, W + 2), jnp.float32)
        t = jnp.concatenate([z_col, t, z_col], axis=2)
        return jnp.concatenate([z_row, t, z_row], axis=1)

    def conv3x3_relu(t, w_ref_, b_ref_):
        # t: (C, H, W) -> (Cout_, H*W); one im2col + ONE MXU matmul.
        C = t.shape[0]
        tp = pad_hw(t)
        patches = jnp.concatenate(
            [tp[:, dy:dy + H, dx:dx + W].reshape(C, H * W)
             for dy in range(3) for dx in range(3)],
            axis=0)                                        # (9*C, H*W)
        y = jnp.dot(w_ref_[...], patches,
                    preferred_element_type=jnp.float32)    # (Cout_, H*W)
        return jnp.maximum(y + b_ref_[...], 0.0)

    x = x_ref[0].astype(jnp.float32).reshape(Cin, H, W)
    h = conv3x3_relu(x, w1_ref, b1_ref)                    # stays in VMEM
    y = conv3x3_relu(h.reshape(Cout, H, W), w2_ref, b2_ref)

    if apply_dropout:
        # Integer-threshold dropout: keep with prob (1-p), scale survivors.
        # TODO(synk): RNG stream differs from torch.nn.Dropout (same expectation).
        keep = bits_ref[0] < jnp.uint32(keep_threshold)
        y = jnp.where(keep, y * jnp.float32(keep_scale), 0.0)

    o_ref[0] = y.astype(o_ref.dtype)


def init_conv_block_params(key, in_channels, out_channels):
    """Mimics PyTorch Conv2d default init; stores weights pre-reshaped for the kernel."""
    def conv_init(k, cin, cout):
        kw, kb = jax.random.split(k)
        fan_in = cin * 9
        bound = float(1.0 / (fan_in ** 0.5))
        # PyTorch layout (Cout, Cin, kH, kW) -> (Cout, kH, kW, Cin) -> (Cout, 9*Cin)
        # so that column index == (dy*3 + dx)*Cin + c, matching the im2col order.
        w_pt = jax.random.uniform(kw, (cout, cin, 3, 3), jnp.float32, -bound, bound)
        w = jnp.transpose(w_pt, (0, 2, 3, 1)).reshape(cout, 9 * cin)
        b = jax.random.uniform(kb, (cout,), jnp.float32, -bound, bound)
        return w, b

    k1, k2 = jax.random.split(key)
    w1, b1 = conv_init(k1, in_channels, out_channels)
    w2, b2 = conv_init(k2, out_channels, out_channels)
    return {"w1": w1, "b1": b1, "w2": w2, "b2": b2}


def conv_block_forward(x_nchw, params, *, dropout_p=0.3, training=True,
                       rng_key=None):
    """Equivalent of ConvBlock.forward on NCHW input. Single fused pallas_call."""
    N, Cin, H, W = x_nchw.shape
    Cout = params["b1"].shape[0]
    p = float(dropout_p)
    apply_dropout = bool(training) and p > 0.0

    if apply_dropout and p >= 1.0:           # torch.nn.Dropout(p=1) -> all zeros
        keep_threshold, keep_scale = 0, 0.0
    elif apply_dropout:
        keep_threshold = min(int(round((1.0 - p) * 2.0**32)), 2**32 - 1)
        keep_scale = 1.0 / (1.0 - p)
    else:
        keep_threshold, keep_scale = 0, 1.0

    x_flat = x_nchw.reshape(N, Cin, H * W)          # free reshape, lane-dense DMA
    b1 = params["b1"].reshape(Cout, 1)
    b2 = params["b2"].reshape(Cout, 1)

    kernel = functools.partial(
        _conv_block_kernel, H=H, W=W, Cin=Cin, Cout=Cout,
        apply_dropout=apply_dropout, keep_threshold=keep_threshold,
        keep_scale=keep_scale)

    # Weights/bias index_maps are constant across the grid (loaded once,
    # trivially cheap to pipeline).
    in_specs = [
        pl.BlockSpec((1, Cin, H * W), lambda n: (n, 0, 0)),
        pl.BlockSpec((Cout, 9 * Cin), lambda n: (0, 0)),
        pl.BlockSpec((Cout, 1), lambda n: (0, 0)),
        pl.BlockSpec((Cout, 9 * Cout), lambda n: (0, 0)),
        pl.BlockSpec((Cout, 1), lambda n: (0, 0)),
    ]
    inputs = [x_flat, params["w1"], b1, params["w2"], b2]

    if apply_dropout:
        if rng_key is None:
            rng_key = jax.random.PRNGKey(0)
        # Random bits generated directly in the kernel's lane-dense layout.
        bits = jax.random.bits(rng_key, (N, Cout, H * W), jnp.uint32)
        in_specs.append(pl.BlockSpec((1, Cout, H * W), lambda n: (n, 0, 0)))
        inputs.append(bits)

    out = pl.pallas_call(
        kernel,
        out_shape=jax.ShapeDtypeStruct((N, Cout, H * W), x_nchw.dtype),
        grid=(N,),
        in_specs=in_specs,
        out_specs=pl.BlockSpec((1, Cout, H * W), lambda n: (n, 0, 0)),
        compiler_params=pltpu.CompilerParams(
            dimension_semantics=("parallel",)),
    )(*inputs)

    return out.reshape(N, Cout, H, W)               # free reshape to NCHW


def _reference_forward(x_nchw, params):
    """Pure-JAX reference (no dropout) for a correctness check."""
    def conv(x, wf, b, cin):
        cout = wf.shape[0]
        w_oihw = jnp.transpose(wf.reshape(cout, 3, 3, cin), (0, 3, 1, 2))
        y = jax.lax.conv_general_dilated(
            x, w_oihw, window_strides=(1, 1), padding=((1, 1), (1, 1)),
            dimension_numbers=("NCHW", "OIHW", "NCHW"),
            precision=jax.lax.Precision.HIGHEST)
        return jax.nn.relu(y + b.reshape(1, cout, 1, 1))

    cin = x_nchw.shape[1]
    cout = params["b1"].shape[0]
    h = conv(x_nchw, params["w1"], params["b1"], cin)
    return conv(h, params["w2"], params["b2"], cout)


if __name__ == "__main__":
    key = jax.random.PRNGKey(0)
    k_x, k_p, k_d = jax.random.split(key, 3)

    N, Cin, Cout, H, W = 2, 4, 8, 16, 16
    x = jax.random.normal(k_x, (N, Cin, H, W), jnp.float32)
    params = init_conv_block_params(k_p, Cin, Cout)

    # Eval mode: compare against a pure-JAX conv reference.
    out_eval = jax.block_until_ready(
        conv_block_forward(x, params, dropout_p=0.3, training=False))
    ref = _reference_forward(x, params)
    assert out_eval.shape == (N, Cout, H, W), out_eval.shape
    assert jnp.allclose(out_eval, ref, atol=1e-3, rtol=1e-3), "mismatch vs reference"

    # Training mode: dropout active (seeded via rng_key; vary per step at call site).
    out_train = jax.block_until_ready(
        conv_block_forward(x, params, dropout_p=0.3, training=True, rng_key=k_d))
    assert out_train.shape == (N, Cout, H, W), out_train.shape
    assert bool(jnp.all(jnp.isfinite(out_train)))

    print("KERNEL_OK")
</pallas_src>

<mosaic_0001>
module attributes {stable_mosaic.version = 11 : i64} {
  func.func @_conv_block_kernel(%arg0: i32, %arg1: memref<1x4x256xf32, #tpu.memory_space<vmem>>, %arg2: memref<8x36xf32, #tpu.memory_space<vmem>>, %arg3: memref<8x1xf32, #tpu.memory_space<vmem>>, %arg4: memref<8x72xf32, #tpu.memory_space<vmem>>, %arg5: memref<8x1xf32, #tpu.memory_space<vmem>>, %arg6: memref<1x8x256xf32, #tpu.memory_space<vmem>>) attributes {dimension_semantics = [#tpu.dimension_semantics<parallel>], iteration_bounds = array<i64: 2>, scalar_prefetch = 0 : i64, scratch_operands = 0 : i64, tpu.core_type = #tpu.core_type<tc>, window_params = [{transform_indices = @transform_0, window_bounds = array<i64: 1, 4, 256>}, {pipeline_mode = #tpu.pipeline_mode<synchronous>, transform_indices = @transform_1, window_bounds = array<i64: 8, 36>}, {pipeline_mode = #tpu.pipeline_mode<synchronous>, transform_indices = @transform_2, window_bounds = array<i64: 8, 1>}, {pipeline_mode = #tpu.pipeline_mode<synchronous>, transform_indices = @transform_3, window_bounds = array<i64: 8, 72>}, {pipeline_mode = #tpu.pipeline_mode<synchronous>, transform_indices = @transform_4, window_bounds = array<i64: 8, 1>}, {transform_indices = @transform_5, window_bounds = array<i64: 1, 8, 256>}]} {
    %c0 = arith.constant 0 : index
    %c0_0 = arith.constant 0 : index
    %c0_1 = arith.constant 0 : index
    %0 = vector.load %arg1[%c0, %c0_0, %c0_1] : memref<1x4x256xf32, #tpu.memory_space<vmem>>, vector<1x4x256xf32>
    %1 = vector.shape_cast %0 : vector<1x4x256xf32> to vector<4x256xf32>
    %2 = vector.shape_cast %1 : vector<4x256xf32> to vector<4x16x16xf32>
    %cst = arith.constant 0.000000e+00 : f32
    %3 = vector.broadcast %cst : f32 to vector<4x16x1xf32>
    %cst_2 = arith.constant 0.000000e+00 : f32
    %4 = vector.broadcast %cst_2 : f32 to vector<4x1x18xf32>
    %5 = tpu.concatenate %3, %2, %3 in 2 : vector<4x16x1xf32>, vector<4x16x16xf32>, vector<4x16x1xf32> -> vector<4x16x18xf32>
    %6 = tpu.concatenate %4, %5, %4 in 1 : vector<4x1x18xf32>, vector<4x16x18xf32>, vector<4x1x18xf32> -> vector<4x18x18xf32>
    %7 = vector.extract_strided_slice %6 {offsets = [0, 0, 0], sizes = [4, 16, 16], strides = [1, 1, 1]} : vector<4x18x18xf32> to vector<4x16x16xf32>
    %8 = vector.shape_cast %7 : vector<4x16x16xf32> to vector<4x256xf32>
    %9 = vector.extract_strided_slice %6 {offsets = [0, 0, 1], sizes = [4, 16, 16], strides = [1, 1, 1]} : vector<4x18x18xf32> to vector<4x16x16xf32>
    %10 = vector.shape_cast %9 : vector<4x16x16xf32> to vector<4x256xf32>
    %11 = vector.extract_strided_slice %6 {offsets = [0, 0, 2], sizes = [4, 16, 16], strides = [1, 1, 1]} : vector<4x18x18xf32> to vector<4x16x16xf32>
    %12 = vector.shape_cast %11 : vector<4x16x16xf32> to vector<4x256xf32>
    %13 = vector.extract_strided_slice %6 {offsets = [0, 1, 0], sizes = [4, 16, 16], strides = [1, 1, 1]} : vector<4x18x18xf32> to vector<4x16x16xf32>
    %14 = vector.shape_cast %13 : vector<4x16x16xf32> to vector<4x256xf32>
    %15 = vector.extract_strided_slice %6 {offsets = [0, 1, 1], sizes = [4, 16, 16], strides = [1, 1, 1]} : vector<4x18x18xf32> to vector<4x16x16xf32>
    %16 = vector.shape_cast %15 : vector<4x16x16xf32> to vector<4x256xf32>
    %17 = vector.extract_strided_slice %6 {offsets = [0, 1, 2], sizes = [4, 16, 16], strides = [1, 1, 1]} : vector<4x18x18xf32> to vector<4x16x16xf32>
    %18 = vector.shape_cast %17 : vector<4x16x16xf32> to vector<4x256xf32>
    %19 = vector.extract_strided_slice %6 {offsets = [0, 2, 0], sizes = [4, 16, 16], strides = [1, 1, 1]} : vector<4x18x18xf32> to vector<4x16x16xf32>
    %20 = vector.shape_cast %19 : vector<4x16x16xf32> to vector<4x256xf32>
    %21 = vector.extract_strided_slice %6 {offsets = [0, 2, 1], sizes = [4, 16, 16], strides = [1, 1, 1]} : vector<4x18x18xf32> to vector<4x16x16xf32>
    %22 = vector.shape_cast %21 : vector<4x16x16xf32> to vector<4x256xf32>
    %23 = vector.extract_strided_slice %6 {offsets = [0, 2, 2], sizes = [4, 16, 16], strides = [1, 1, 1]} : vector<4x18x18xf32> to vector<4x16x16xf32>
    %24 = vector.shape_cast %23 : vector<4x16x16xf32> to vector<4x256xf32>
    %25 = tpu.concatenate %8, %10, %12, %14, %16, %18, %20, %22, %24 in 0 : vector<4x256xf32>, vector<4x256xf32>, vector<4x256xf32>, vector<4x256xf32>, vector<4x256xf32>, vector<4x256xf32>, vector<4x256xf32>, vector<4x256xf32>, vector<4x256xf32> -> vector<36x256xf32>
    %c0_3 = arith.constant 0 : index
    %c0_4 = arith.constant 0 : index
    %26 = vector.load %arg2[%c0_3, %c0_4] : memref<8x36xf32, #tpu.memory_space<vmem>>, vector<8x36xf32>
    %cst_5 = arith.constant dense<0.000000e+00> : vector<8x256xf32>
    %27 = tpu.matmul %26, %25, %cst_5 {dimension_numbers = #tpu.dot_dimension_numbers<[1], [0], [0], [1], [0, 0, 1, 1], [], []>} : vector<8x36xf32>, vector<36x256xf32>, vector<8x256xf32> -> vector<8x256xf32>
    %c0_6 = arith.constant 0 : index
    %c0_7 = arith.constant 0 : index
    %28 = vector.load %arg3[%c0_6, %c0_7] : memref<8x1xf32, #tpu.memory_space<vmem>>, vector<8x1xf32>
    %29 = vector.broadcast %28 : vector<8x1xf32> to vector<8x256xf32>
    %30 = arith.addf %27, %29 : vector<8x256xf32>
    %cst_8 = arith.constant 0.000000e+00 : f32
    %31 = vector.broadcast %cst_8 : f32 to vector<8x256xf32>
    %32 = arith.maximumf %30, %31 : vector<8x256xf32>
    %33 = vector.shape_cast %32 : vector<8x256xf32> to vector<8x16x16xf32>
    %cst_9 = arith.constant 0.000000e+00 : f32
    %34 = vector.broadcast %cst_9 : f32 to vector<8x16x1xf32>
    %cst_10 = arith.constant 0.000000e+00 : f32
    %35 = vector.broadcast %cst_10 : f32 to vector<8x1x18xf32>
    %36 = tpu.concatenate %34, %33, %34 in 2 : vector<8x16x1xf32>, vector<8x16x16xf32>, vector<8x16x1xf32> -> vector<8x16x18xf32>
    %37 = tpu.concatenate %35, %36, %35 in 1 : vector<8x1x18xf32>, vector<8x16x18xf32>, vector<8x1x18xf32> -> vector<8x18x18xf32>
    %38 = vector.extract_strided_slice %37 {offsets = [0, 0, 0], sizes = [8, 16, 16], strides = [1, 1, 1]} : vector<8x18x18xf32> to vector<8x16x16xf32>
    %39 = vector.shape_cast %38 : vector<8x16x16xf32> to vector<8x256xf32>
    %40 = vector.extract_strided_slice %37 {offsets = [0, 0, 1], sizes = [8, 16, 16], strides = [1, 1, 1]} : vector<8x18x18xf32> to vector<8x16x16xf32>
    %41 = vector.shape_cast %40 : vector<8x16x16xf32> to vector<8x256xf32>
    %42 = vector.extract_strided_slice %37 {offsets = [0, 0, 2], sizes = [8, 16, 16], strides = [1, 1, 1]} : vector<8x18x18xf32> to vector<8x16x16xf32>
    %43 = vector.shape_cast %42 : vector<8x16x16xf32> to vector<8x256xf32>
    %44 = vector.extract_strided_slice %37 {offsets = [0, 1, 0], sizes = [8, 16, 16], strides = [1, 1, 1]} : vector<8x18x18xf32> to vector<8x16x16xf32>
    %45 = vector.shape_cast %44 : vector<8x16x16xf32> to vector<8x256xf32>
    %46 = vector.extract_strided_slice %37 {offsets = [0, 1, 1], sizes = [8, 16, 16], strides = [1, 1, 1]} : vector<8x18x18xf32> to vector<8x16x16xf32>
    %47 = vector.shape_cast %46 : vector<8x16x16xf32> to vector<8x256xf32>
    %48 = vector.extract_strided_slice %37 {offsets = [0, 1, 2], sizes = [8, 16, 16], strides = [1, 1, 1]} : vector<8x18x18xf32> to vector<8x16x16xf32>
    %49 = vector.shape_cast %48 : vector<8x16x16xf32> to vector<8x256xf32>
    %50 = vector.extract_strided_slice %37 {offsets = [0, 2, 0], sizes = [8, 16, 16], strides = [1, 1, 1]} : vector<8x18x18xf32> to vector<8x16x16xf32>
    %51 = vector.shape_cast %50 : vector<8x16x16xf32> to vector<8x256xf32>
    %52 = vector.extract_strided_slice %37 {offsets = [0, 2, 1], sizes = [8, 16, 16], strides = [1, 1, 1]} : vector<8x18x18xf32> to vector<8x16x16xf32>
    %53 = vector.shape_cast %52 : vector<8x16x16xf32> to vector<8x256xf32>
    %54 = vector.extract_strided_slice %37 {offsets = [0, 2, 2], sizes = [8, 16, 16], strides = [1, 1, 1]} : vector<8x18x18xf32> to vector<8x16x16xf32>
    %55 = vector.shape_cast %54 : vector<8x16x16xf32> to vector<8x256xf32>
    %56 = tpu.concatenate %39, %41, %43, %45, %47, %49, %51, %53, %55 in 0 : vector<8x256xf32>, vector<8x256xf32>, vector<8x256xf32>, vector<8x256xf32>, vector<8x256xf32>, vector<8x256xf32>, vector<8x256xf32>, vector<8x256xf32>, vector<8x256xf32> -> vector<72x256xf32>
    %c0_11 = arith.constant 0 : index
    %c0_12 = arith.constant 0 : index
    %57 = vector.load %arg4[%c0_11, %c0_12] : memref<8x72xf32, #tpu.memory_space<vmem>>, vector<8x72xf32>
    %cst_13 = arith.constant dense<0.000000e+00> : vector<8x256xf32>
    %58 = tpu.matmul %57, %56, %cst_13 {dimension_numbers = #tpu.dot_dimension_numbers<[1], [0], [0], [1], [0, 0, 1, 1], [], []>} : vector<8x72xf32>, vector<72x256xf32>, vector<8x256xf32> -> vector<8x256xf32>
    %c0_14 = arith.constant 0 : index
    %c0_15 = arith.constant 0 : index
    %59 = vector.load %arg5[%c0_14, %c0_15] : memref<8x1xf32, #tpu.memory_space<vmem>>, vector<8x1xf32>
    %60 = vector.broadcast %59 : vector<8x1xf32> to vector<8x256xf32>
    %61 = arith.addf %58, %60 : vector<8x256xf32>
    %cst_16 = arith.constant 0.000000e+00 : f32
    %62 = vector.broadcast %cst_16 : f32 to vector<8x256xf32>
    %63 = arith.maximumf %61, %62 : vector<8x256xf32>
    %c0_17 = arith.constant 0 : index
    %c0_18 = arith.constant 0 : index
    %c0_19 = arith.constant 0 : index
    %64 = vector.load %arg6[%c0_17, %c0_18, %c0_19] : memref<1x8x256xf32, #tpu.memory_space<vmem>>, vector<1x8x256xf32>
    %65 = vector.shape_cast %64 : vector<1x8x256xf32> to vector<8x256xf32>
    %66 = vector.shape_cast %63 : vector<8x256xf32> to vector<1x8x256xf32>
    tpu.vector_store %arg6[%c0_17, %c0_18, %c0_19], %66 {strides = array<i32>} : memref<1x8x256xf32, #tpu.memory_space<vmem>>, vector<1x8x256xf32>,
    return
  }
  func.func @transform_0(%arg0: i32) -> (i32, i32, i32) {
    %c0_i32 = arith.constant 0 : i32
    %c0_i32_0 = arith.constant 0 : i32
    %c0_i32_1 = arith.constant 0 : i32
    return %arg0, %c0_i32, %c0_i32_0 : i32, i32, i32
  }
  func.func @transform_1(%arg0: i32) -> (i32, i32) {
    %c0_i32 = arith.constant 0 : i32
    %c0_i32_0 = arith.constant 0 : i32
    %c0_i32_1 = arith.constant 0 : i32
    return %c0_i32, %c0_i32_0 : i32, i32
  }
  func.func @transform_2(%arg0: i32) -> (i32, i32) {
    %c0_i32 = arith.constant 0 : i32
    %c0_i32_0 = arith.constant 0 : i32
    %c0_i32_1 = arith.constant 0 : i32
    return %c0_i32, %c0_i32_0 : i32, i32
  }
  func.func @transform_3(%arg0: i32) -> (i32, i32) {
    %c0_i32 = arith.constant 0 : i32
    %c0_i32_0 = arith.constant 0 : i32
    %c0_i32_1 = arith.constant 0 : i32
    return %c0_i32, %c0_i32_0 : i32, i32
  }
  func.func @transform_4(%arg0: i32) -> (i32, i32) {
    %c0_i32 = arith.constant 0 : i32
    %c0_i32_0 = arith.constant 0 : i32
    %c0_i32_1 = arith.constant 0 : i32
    return %c0_i32, %c0_i32_0 : i32, i32
  }
  func.func @transform_5(%arg0: i32) -> (i32, i32, i32) {
    %c0_i32 = arith.constant 0 : i32
    %c0_i32_0 = arith.constant 0 : i32
    %c0_i32_1 = arith.constant 0 : i32
    return %arg0, %c0_i32, %c0_i32_0 : i32, i32, i32
  }
}

</mosaic_0001>

<llo_original>
// kernel: tpu_custom_call.1
$region0: #{tpu_custom_call.1}
  #allocation0 [shape = 'u32[]', space=smem, size = 0x4, offset = 0x4, fixed_abs, tag = 'smem constant byte address 0x4 - core index']
  #allocation1 [shape = 'u32[144,128]{1,0:T(1,128)}', space=vmem, size = 0x12000, scoped, tag = 'internal scratch']
  %s0 = inlined_call_operand.vmem [shape: f32[2,4,256], index: 0, kind: input, shape index: {}]
  %s1 = inlined_call_operand.hbm [shape: f32[8,36], index: 1, kind: input, shape index: {}]
  %s2 = inlined_call_operand.vmem [shape: f32[8,1], index: 2, kind: input, shape index: {}]
  %s3 = inlined_call_operand.vmem [shape: f32[8,72], index: 3, kind: input, shape index: {}]
  %s4 = inlined_call_operand.vmem [shape: f32[8,1], index: 4, kind: input, shape index: {}]
  %s5 = inlined_call_operand.hbm [shape: f32[2,8,256], index: 5, kind: output, shape index: {}]
  %s6 = sld [smem:[#allocation0]]
  $region57: #{tpu_custom_call.1} parent=0
    _
  %s8 = ssub.s32 1, %s6
  %s9 = scalar_select 0, %s8, %s6
  $region1: #{tpu_custom_call.1} parent=0
    #allocation2 [shape = 'u8[4096]{0}', space=vmem, size = 0x1000, scoped, tag = 'input window, operand 1, single buffered']
    #allocation3 [shape = 's32[2]{0}', space=sflag, size = 0x8, scoped, tag = 'scoped memory for tpu_custom_call.1']
    #allocation4 [shape = 's32[2]{0}', space=sflag, size = 0x8, scoped, tag = 'scoped memory for tpu_custom_call.1']
    #allocation5 [shape = 'u8[16384]{0}', space=vmem, size = 0x4000, scoped, tag = 'output window, operand 0']
    %10 = vsyncpa [#allocation3], 0
    %11 = vsyncpa [#allocation4], 0
    %s12 = scalar_lea.sflag [#allocation4], 1
    %13 = vsyncpa %s12, 0
    loop: start=0, step=1, limit=4
    $region2: #{tpu_custom_call.1} parent=1 // loop_pre_header
      _
    $region3: #{tpu_custom_call.1} parent=1 // loop_header
      %s15 = sphi 0, %s19
      %p16 = scmp.ge.s32.totalorder %s15, 4
      %s25 = sphi 0, %s27
      %s28 = sphi 0, %s25
      %s29 = sphi 0, %s28
      %s45 = sphi 0, %s29
      %s49 = sphi 0, %s49
      %s51 = sphi 0, %s49
      %s52 = sphi 0, %s51
      %s66 = sphi 0, %s52
      %s70 = sphi 0, %s70
      %s72 = sphi 0, %s70
      %s73 = sphi 0, %s72
      %s87 = sphi 0, %s73
      %s91 = sphi 0, %s91
      %s93 = sphi 0, %s91
      %s94 = sphi 0, %s93
      %s108 = sphi 0, %s94
      %s112 = sphi 0, %s112
      %s114 = sphi 0, %s112
      %s115 = sphi 0, %s114
      %s129 = sphi 0, %s115
      %s135 = sphi 0, %s137
      %s138 = sphi 0, %s135
      %s139 = sphi 0, %s138
      %s155 = sphi 0, %s139
    $region4: #{tpu_custom_call.1} parent=1 // loop_header_branch
      %18 = sbr.rel (%p16) target = $region8
    $region5: #{tpu_custom_call.1} parent=1 // loop_body
      %s20 = ssub.s32 %s15, 1
      %s21 = ssub.s32 %s15, 2
      %s22 = sadd.s32 %s15, 1
      %s23 = ssub.s32 %s15, %s22
      %p24 = scmp.eq.s32.totalorder %s23, 0
      %s26 = sadd.s32 %s25, 1
      %s27 = scalar_select %p24, %s25, %s26
      %p30 = pneg %p24
      %p31 = scmp.eq.s32.totalorder %s15, 1
      %p32 = por %p30, %p31
      %p33 = scmp.ne.s32.totalorder %s25, %s28
      %p34 = scmp.eq.s32.totalorder %s15, 0
      %p35 = por %p33, %p34
      %p36 = scmp.ne.s32.totalorder %s25, %s28
      %p37 = scmp.eq.s32.totalorder %s20, 1
      %p38 = por %p36, %p37
      %p39 = scmp.ne.s32.totalorder %s28, %s29
      %p40 = scmp.eq.s32.totalorder %s20, 0
      %p41 = por %p39, %p40
      %p42 = scmp.ne.s32.totalorder %s28, %s29
      %p43 = scmp.eq.s32.totalorder %s21, 1
      %p44 = por %p42, %p43
      %p46 = scmp.ne.s32.totalorder %s29, %s45
      %p47 = scmp.eq.s32.totalorder %s21, 0
      %p48 = por %p46, %p47
      %s50 = sadd.s32 %s49, 1
      %p53 = scmp.eq.s32.totalorder %s15, 1
      %p54 = scmp.ne.s32.totalorder %s49, %s51
      %p55 = scmp.eq.s32.totalorder %s15, 0
      %p56 = por %p54, %p55
      %p57 = scmp.ne.s32.totalorder %s49, %s51
      %p58 = scmp.eq.s32.totalorder %s20, 1
      %p59 = por %p57, %p58
      %p60 = scmp.ne.s32.totalorder %s51, %s52
      %p61 = scmp.eq.s32.totalorder %s20, 0
      %p62 = por %p60, %p61
      %p63 = scmp.ne.s32.totalorder %s51, %s52
      %p64 = scmp.eq.s32.totalorder %s21, 1
      %p65 = por %p63, %p64
      %p67 = scmp.ne.s32.totalorder %s52, %s66
      %p68 = scmp.eq.s32.totalorder %s21, 0
      %p69 = por %p67, %p68
      %s71 = sadd.s32 %s70, 1
      %p74 = scmp.eq.s32.totalorder %s15, 1
      %p75 = scmp.ne.s32.totalorder %s70, %s72
      %p76 = scmp.eq.s32.totalorder %s15, 0
      %p77 = por %p75, %p76
      %p78 = scmp.ne.s32.totalorder %s70, %s72
      %p79 = scmp.eq.s32.totalorder %s20, 1
      %p80 = por %p78, %p79
      %p81 = scmp.ne.s32.totalorder %s72, %s73
      %p82 = scmp.eq.s32.totalorder %s20, 0
      %p83 = por %p81, %p82
      %p84 = scmp.ne.s32.totalorder %s72, %s73
      %p85 = scmp.eq.s32.totalorder %s21, 1
      %p86 = por %p84, %p85
      %p88 = scmp.ne.s32.totalorder %s73, %s87
      %p89 = scmp.eq.s32.totalorder %s21, 0
      %p90 = por %p88, %p89
      %s92 = sadd.s32 %s91, 1
      %p95 = scmp.eq.s32.totalorder %s15, 1
      %p96 = scmp.ne.s32.totalorder %s91, %s93
      %p97 = scmp.eq.s32.totalorder %s15, 0
      %p98 = por %p96, %p97
      %p99 = scmp.ne.s32.totalorder %s91, %s93
      %p100 = scmp.eq.s32.totalorder %s20, 1
      %p101 = por %p99, %p100
      %p102 = scmp.ne.s32.totalorder %s93, %s94
      %p103 = scmp.eq.s32.totalorder %s20, 0
      %p104 = por %p102, %p103
      %p105 = scmp.ne.s32.totalorder %s93, %s94
      %p106 = scmp.eq.s32.totalorder %s21, 1
      %p107 = por %p105, %p106
      %p109 = scmp.ne.s32.totalorder %s94, %s108
      %p110 = scmp.eq.s32.totalorder %s21, 0
      %p111 = por %p109, %p110
      %s113 = sadd.s32 %s112, 1
      %p116 = scmp.eq.s32.totalorder %s15, 1
      %p117 = scmp.ne.s32.totalorder %s112, %s114
      %p118 = scmp.eq.s32.totalorder %s15, 0
      %p119 = por %p117, %p118
      %p120 = scmp.ne.s32.totalorder %s112, %s114
      %p121 = scmp.eq.s32.totalorder %s20, 1
      %p122 = por %p120, %p121
      %p123 = scmp.ne.s32.totalorder %s114, %s115
      %p124 = scmp.eq.s32.totalorder %s20, 0
      %p125 = por %p123, %p124
      %p126 = scmp.ne.s32.totalorder %s114, %s115
      %p127 = scmp.eq.s32.totalorder %s21, 1
      %p128 = por %p126, %p127
      %p130 = scmp.ne.s32.totalorder %s115, %s129
      %p131 = scmp.eq.s32.totalorder %s21, 0
      %p132 = por %p130, %p131
      %s133 = ssub.s32 %s15, %s22
      %p134 = scmp.eq.s32.totalorder %s133, 0
      %s136 = sadd.s32 %s135, 1
      %s137 = scalar_select %p134, %s135, %s136
      %p140 = pneg %p134
      %p141 = scmp.eq.s32.totalorder %s15, 1
      %p142 = por %p140, %p141
      %p143 = scmp.ne.s32.totalorder %s135, %s138
      %p144 = scmp.eq.s32.totalorder %s15, 0
      %p145 = por %p143, %p144
      %p146 = scmp.ne.s32.totalorder %s135, %s138
      %p147 = scmp.eq.s32.totalorder %s20, 1
      %p148 = por %p146, %p147
      %p149 = scmp.ne.s32.totalorder %s138, %s139
      %p150 = scmp.eq.s32.totalorder %s20, 0
      %p151 = por %p149, %p150
      %p152 = scmp.ne.s32.totalorder %s138, %s139
      %p153 = scmp.eq.s32.totalorder %s21, 1
      %p154 = por %p152, %p153
      %p156 = scmp.ne.s32.totalorder %s139, %s155
      %p157 = scmp.eq.s32.totalorder %s21, 0
      %p158 = por %p156, %p157
      %p159 = scmp.le.s32.totalorder 1, %s15
      %p160 = scmp.lt.s32.totalorder %s15, 3
      %p161 = pnand %p159, %p160
      %p162 = pneg %p161
      // Predicated region
      $region9: #{tpu_custom_call.1} parent=5 // pred_check
        _
      $region10: #{tpu_custom_call.1} parent=5 // pred_check_branch
        %164 = sbr.rel (%p161) target = $region12
      $region11: #{tpu_custom_call.1} parent=5 // pred_region
        %s165 = ssub.s32 %s15, 1
        // Predicated region
        $region13: #{tpu_custom_call.1} parent=11 // pred_check
          %p166 = pneg %p62
        $region14: #{tpu_custom_call.1} parent=11 // pred_check_branch
          %168 = sbr.rel (%p166) target = $region16
        $region15: #{tpu_custom_call.1} parent=11 // pred_region
          %s170 = ssub.s32 128, 128
          %171 = vsyncadd [#allocation3], %s170
          %s173 = sshll.u32 [#allocation2], 4
          %s174 = int_to_ptr.vmem [resolvable:$true] %s173
          %176 = dma.hbm_to_vmem [thread:$0]  %s1, 128, %s174, [#allocation3]
        $region16: #{tpu_custom_call.1} parent=11 // pred_fallthru
          _
        // Predicated region
        $region17: #{tpu_custom_call.1} parent=11 // pred_check
          %p177 = pneg %p83
        $region18: #{tpu_custom_call.1} parent=11 // pred_check_branch
          %179 = sbr.rel (%p177) target = $region20
        $region19: #{tpu_custom_call.1} parent=11 // pred_region
          _
        $region20: #{tpu_custom_call.1} parent=11 // pred_fallthru
          _
        // Predicated region
        $region21: #{tpu_custom_call.1} parent=11 // pred_check
          %p180 = pneg %p104
        $region22: #{tpu_custom_call.1} parent=11 // pred_check_branch
          %182 = sbr.rel (%p180) target = $region24
        $region23: #{tpu_custom_call.1} parent=11 // pred_region
          _
        $region24: #{tpu_custom_call.1} parent=11 // pred_fallthru
          _
        // Predicated region
        $region25: #{tpu_custom_call.1} parent=11 // pred_check
          %p183 = pneg %p125
        $region26: #{tpu_custom_call.1} parent=11 // pred_check_branch
          %185 = sbr.rel (%p183) target = $region28
        $region27: #{tpu_custom_call.1} parent=11 // pred_region
          _
        $region28: #{tpu_custom_call.1} parent=11 // pred_fallthru
          _
      $region12: #{tpu_custom_call.1} parent=5 // pred_fallthru
        _
      %p186 = scmp.lt.s32.totalorder %s15, 2
      // Predicated region
      $region29: #{tpu_custom_call.1} parent=5 // pred_check
        %p187 = pneg %p186
      $region30: #{tpu_custom_call.1} parent=5 // pred_check_branch
        %189 = sbr.rel (%p187) target = $region32
      $region31: #{tpu_custom_call.1} parent=5 // pred_region
        // Predicated region
        $region33: #{tpu_custom_call.1} parent=31 // pred_check
          %p190 = pneg %p35
        $region34: #{tpu_custom_call.1} parent=31 // pred_check_branch
          %192 = sbr.rel (%p190) target = $region36
        $region35: #{tpu_custom_call.1} parent=31 // pred_region
          %p193 = scmp.lt.s32.totalorder %s15, 1
          %s194 = scalar_select %p193, %s15, 1
          %s195 = smul.addr %s194, 2
          %s196 = smul.addr %s195, 4
          %s197 = scalar_lea.vmem %s0, %s196
        $region36: #{tpu_custom_call.1} parent=31 // pred_fallthru
          _
      $region32: #{tpu_custom_call.1} parent=5 // pred_fallthru
        _
      %p198 = scmp.le.s32.totalorder 1, %s15
      %p199 = scmp.lt.s32.totalorder %s15, 3
      %p200 = pnand %p198, %p199
      %p201 = pneg %p200
      // Predicated region
      $region37: #{tpu_custom_call.1} parent=5 // pred_check
        _
      $region38: #{tpu_custom_call.1} parent=5 // pred_check_branch
        %203 = sbr.rel (%p200) target = $region40
      $region39: #{tpu_custom_call.1} parent=5 // pred_region
        %s204 = ssub.s32 %s15, 1
        // Predicated region
        $region41: #{tpu_custom_call.1} parent=39 // pred_check
          %p205 = pneg %p62
        $region42: #{tpu_custom_call.1} parent=39 // pred_check_branch
          %207 = sbr.rel (%p205) target = $region44
        $region43: #{tpu_custom_call.1} parent=39 // pred_region
          %208 = dma.done [#allocation3], 128
        $region44: #{tpu_custom_call.1} parent=39 // pred_fallthru
          _
        %p209 = scmp.lt.s32.totalorder %s20, 1
        %s210 = scalar_select %p209, %s20, 1
        %s211 = smul.addr %s210, 2
        %s212 = smul.addr %s211, 4
        %s213 = scalar_lea.vmem %s0, %s212
        %p214 = pneg %p41
        %p215 = pneg %p38
        %p216 = pneg %p62
        %p217 = pneg %p59
        %p218 = pneg %p83
        %p219 = pneg %p80
        %p220 = pneg %p104
        %p221 = pneg %p101
        %p222 = pneg %p125
        %p223 = pneg %p122
        %p224 = pneg %p151
        %p225 = pneg %p148
        %s226 = sand.u32 %s138, 1
        %s227 = scalar_lea.sflag [#allocation4], %s226
        %s228 = sand.u32 %s138, 1
        %s229 = smul.addr %s228, 16
        %s230 = scalar_lea.vmem [#allocation5], %s229
        %p231 = scmp.lt.s32.totalorder %s20, 1
        %s232 = scalar_select %p231, %s20, 1
        %s233 = smul.addr %s232, 2
        %s234 = smul.addr %s233, 4
        %s235 = scalar_lea.vmem %s0, %s234
        %v236 = vld [vmem:[%s235] sm:$0xff]
        %v238 = vrot.slane %v236, 4
        %240 = vrot.lane.b32.xlu0 %v236, 112
        %v241 = vpop.permute.xlu0 %240
        %v242 = vrot.slane %v241, 4
        %244 = vrot.lane.b32.xlu0 %v236, 96
        %v245 = vpop.permute.xlu0 %244
        %v246 = vrot.slane %v245, 4
        %248 = vrot.lane.b32.xlu0 %v236, 80
        %v249 = vpop.permute.xlu0 %248
        %v250 = vrot.slane %v249, 4
        %252 = vrot.lane.b32.xlu0 %v236, 64
        %v253 = vpop.permute.xlu0 %252
        %v254 = vrot.slane %v253, 4
        %256 = vrot.lane.b32.xlu0 %v236, 48
        %v257 = vpop.permute.xlu0 %256
        %v258 = vrot.slane %v257, 4
        %260 = vrot.lane.b32.xlu0 %v236, 32
        %v261 = vpop.permute.xlu0 %260
        %v262 = vrot.slane %v261, 4
        %264 = vrot.lane.b32.xlu0 %v236, 16
        %v265 = vpop.permute.xlu0 %264
        %v266 = vrot.slane %v265, 4
        %v275 = vcombine.low %v236, %v245
        %v277 = vunpack.c.l.s4 1983009808
        %v278 = vunpack.c.0.s8 %v277
        %v279 = vlaneseq
        %v280 = vshrl.u32 %v279, 7
        %v281 = vsub.s32 %v278, %v280
        %v282 = vrot.slane %v275, %v281
        %v283 = vcombine.low %v241, %v249
        %v285 = vunpack.c.l.s4 1983009808
        %v286 = vunpack.c.0.s8 %v285
        %v287 = vlaneseq
        %v288 = vshrl.u32 %v287, 7
        %v289 = vsub.s32 %v286, %v288
        %v290 = vrot.slane %v283, %v289
        %v291 = vcombine.low %v282, %v290
        %v292 = vcombine.high %v282, %v290
        %v294 = vunpack.c.l.s4 1934713408
        %v295 = vunpack.c.0.s8 %v294
        %v296 = vlaneseq
        %v297 = vshrl.u32 %v296, 7
        %v298 = vsub.s32 %v295, %v297
        %v299 = vrot.slane %v291, %v298
        %v301 = vunpack.c.l.s4 1934713408
        %v302 = vunpack.c.0.s8 %v301
        %v303 = vlaneseq
        %v304 = vshrl.u32 %v303, 7
        %v305 = vsub.s32 %v302, %v304
        %v306 = vrot.slane %v292, %v305
        %v307 = vcombine.high %v299, 0.0
        %v308 = vcombine.high %v306, 0.0
        %v309 = vcombine.low %v253, %v261
        %v311 = vunpack.c.l.s4 1983009808
        %v312 = vunpack.c.0.s8 %v311
        %v313 = vlaneseq
        %v314 = vshrl.u32 %v313, 7
        %v315 = vsub.s32 %v312, %v314
        %v316 = vrot.slane %v309, %v315
        %v317 = vcombine.low %v257, %v265
        %v319 = vunpack.c.l.s4 1983009808
        %v320 = vunpack.c.0.s8 %v319
        %v321 = vlaneseq
        %v322 = vshrl.u32 %v321, 7
        %v323 = vsub.s32 %v320, %v322
        %v324 = vrot.slane %v317, %v323
        %v325 = vcombine.low %v316, %v324
        %v326 = vcombine.high %v316, %v324
        %v328 = vunpack.c.l.s4 1934713408
        %v329 = vunpack.c.0.s8 %v328
        %v330 = vlaneseq
        %v331 = vshrl.u32 %v330, 7
        %v332 = vsub.s32 %v329, %v331
        %v333 = vrot.slane %v325, %v332
        %v335 = vunpack.c.l.s4 1934713408
        %v336 = vunpack.c.0.s8 %v335
        %v337 = vlaneseq
        %v338 = vshrl.u32 %v337, 7
        %v339 = vsub.s32 %v336, %v338
        %v340 = vrot.slane %v326, %v339
        %v341 = vcombine.high %v333, 0.0
        %v342 = vcombine.high %v340, 0.0
        %v343 = vcombine.low %v238, %v246
        %v345 = vunpack.c.l.s4 1983009808
        %v346 = vunpack.c.0.s8 %v345
        %v347 = vlaneseq
        %v348 = vshrl.u32 %v347, 7
        %v349 = vsub.s32 %v346, %v348
        %v350 = vrot.slane %v343, %v349
        %v351 = vcombine.low %v242, %v250
        %v353 = vunpack.c.l.s4 1983009808
        %v354 = vunpack.c.0.s8 %v353
        %v355 = vlaneseq
        %v356 = vshrl.u32 %v355, 7
        %v357 = vsub.s32 %v354, %v356
        %v358 = vrot.slane %v351, %v357
        %v359 = vcombine.low %v350, %v358
        %v360 = vcombine.high %v350, %v358
        %v362 = vunpack.c.l.s4 1934713408
        %v363 = vunpack.c.0.s8 %v362
        %v364 = vlaneseq
        %v365 = vshrl.u32 %v364, 7
        %v366 = vsub.s32 %v363, %v365
        %v367 = vrot.slane %v359, %v366
        %v369 = vunpack.c.l.s4 1934713408
        %v370 = vunpack.c.0.s8 %v369
        %v371 = vlaneseq
        %v372 = vshrl.u32 %v371, 7
        %v373 = vsub.s32 %v370, %v372
        %v374 = vrot.slane %v360, %v373
        %v375 = vcombine.high %v367, 0.0
        %v376 = vcombine.high %v374, 0.0
        %v377 = vcombine.low %v254, %v262
        %v379 = vunpack.c.l.s4 1983009808
        %v380 = vunpack.c.0.s8 %v379
        %v381 = vlaneseq
        %v382 = vshrl.u32 %v381, 7
        %v383 = vsub.s32 %v380, %v382
        %v384 = vrot.slane %v377, %v383
        %v385 = vcombine.low %v258, %v266
        %v387 = vunpack.c.l.s4 1983009808
        %v388 = vunpack.c.0.s8 %v387
        %v389 = vlaneseq
        %v390 = vshrl.u32 %v389, 7
        %v391 = vsub.s32 %v388, %v390
        %v392 = vrot.slane %v385, %v391
        %v393 = vcombine.low %v384, %v392
        %v394 = vcombine.high %v384, %v392
        %v396 = vunpack.c.l.s4 1934713408
        %v397 = vunpack.c.0.s8 %v396
        %v398 = vlaneseq
        %v399 = vshrl.u32 %v398, 7
        %v400 = vsub.s32 %v397, %v399
        %v401 = vrot.slane %v393, %v400
        %v403 = vunpack.c.l.s4 1934713408
        %v404 = vunpack.c.0.s8 %v403
        %v405 = vlaneseq
        %v406 = vshrl.u32 %v405, 7
        %v407 = vsub.s32 %v404, %v406
        %v408 = vrot.slane %v394, %v407
        %v409 = vcombine.high %v401, 0.0
        %v410 = vcombine.high %v408, 0.0
        %v427 = vcombine.low %v299, %v333
        %v428 = vcombine.low %v367, %v401
        %v429 = vcombine.low %v307, %v341
        %v430 = vcombine.low %v375, %v409
        %v431 = vcombine.low %v306, %v340
        %v432 = vcombine.low %v374, %v408
        %v433 = vcombine.low %v308, %v342
        %v434 = vcombine.low %v376, %v410
        %435 = vrot.lane.b32.xlu0 %v427, 1
        %v436 = vpop.permute.xlu0 %435
        %437 = vrot.lane.b32.xlu0 %v428, 1
        %v438 = vpop.permute.xlu0 %437
        %439 = vrot.lane.b32.xlu0 %v429, 1
        %v440 = vpop.permute.xlu0 %439
        %441 = vrot.lane.b32.xlu0 %v430, 1
        %v442 = vpop.permute.xlu0 %441
        %443 = vrot.lane.b32.xlu0 %v431, 1
        %v444 = vpop.permute.xlu0 %443
        %445 = vrot.lane.b32.xlu0 %v432, 1
        %v446 = vpop.permute.xlu0 %445
        %447 = vrot.lane.b32.xlu0 %v433, 1
        %v448 = vpop.permute.xlu0 %447
        %449 = vrot.lane.b32.xlu0 %v434, 1
        %v450 = vpop.permute.xlu0 %449
        %vm459 = vcmask 7168
        %v460 = vsel %vm459, 0.0, %v436
        %v461 = vsel %vm459, 0.0, %v438
        %v462 = vsel %vm459, 0.0, %v440
        %v463 = vsel %vm459, 0.0, %v442
        %v464 = vsel %vm459, 0.0, %v444
        %v465 = vsel %vm459, 0.0, %v446
        %v466 = vsel %vm459, 0.0, %v448
        %v467 = vsel %vm459, 0.0, %v450
        %vm468 = vcmask 138240
        %v469 = vsel %vm468, %v460, 0.0
        %v470 = vsel %vm468, %v461, 0.0
        %v471 = vsel %vm468, %v462, 0.0
        %v472 = vsel %vm468, %v463, 0.0
        %v473 = vsel %vm468, %v464, 0.0
        %v474 = vsel %vm468, %v465, 0.0
        %v475 = vsel %vm468, %v466, 0.0
        %v476 = vsel %vm468, %v467, 0.0
        %vm485 = vcmask 1040384
        %v486 = vrot.slane %v469, 7
        %v487 = vrot.slane %v470, 7
        %v488 = vsel %vm485, %v486, %v487
        %v489 = vrot.slane %v471, 7
        %v490 = vrot.slane %v472, 7
        %v491 = vsel %vm485, %v489, %v490
        %v492 = vrot.slane %v473, 7
        %v493 = vrot.slane %v474, 7
        %v494 = vsel %vm485, %v492, %v493
        %v495 = vrot.slane %v475, 7
        %v496 = vrot.slane %v476, 7
        %v497 = vsel %vm485, %v495, %v496
        %v510 = vsel %vm485, 0.0, %v486
        %v511 = vsel %vm485, 0.0, %v489
        %v512 = vsel %vm485, 0.0, %v492
        %v513 = vsel %vm485, 0.0, %v495
        %v514 = vsel %vm485, %v487, 0.0
        %v515 = vsel %vm485, %v490, 0.0
        %v516 = vsel %vm485, %v493, 0.0
        %v517 = vsel %vm485, %v496, 0.0
        %v518 = vcombine.low %v510, %v512
        %v519 = vcombine.high %v510, %v512
        %v521 = vunpack.c.l.s4 1983009808
        %v522 = vunpack.c.0.s8 %v521
        %v523 = vlaneseq
        %v524 = vshrl.u32 %v523, 7
        %v525 = vsub.s32 %v522, %v524
        %v526 = vrot.slane %v518, %v525
        %v528 = vunpack.c.l.s4 1983009808
        %v529 = vunpack.c.0.s8 %v528
        %v530 = vlaneseq
        %v531 = vshrl.u32 %v530, 7
        %v532 = vsub.s32 %v529, %v531
        %v533 = vrot.slane %v519, %v532
        %v534 = vcombine.low %v511, %v513
        %v535 = vcombine.high %v511, %v513
        %v537 = vunpack.c.l.s4 1983009808
        %v538 = vunpack.c.0.s8 %v537
        %v539 = vlaneseq
        %v540 = vshrl.u32 %v539, 7
        %v541 = vsub.s32 %v538, %v540
        %v542 = vrot.slane %v534, %v541
        %v544 = vunpack.c.l.s4 1983009808
        %v545 = vunpack.c.0.s8 %v544
        %v546 = vlaneseq
        %v547 = vshrl.u32 %v546, 7
        %v548 = vsub.s32 %v545, %v547
        %v549 = vrot.slane %v535, %v548
        %v550 = vcombine.low %v526, %v542
        %v551 = vcombine.high %v526, %v542
        %v553 = vunpack.c.l.s4 1934713408
        %v554 = vunpack.c.0.s8 %v553
        %v555 = vlaneseq
        %v556 = vshrl.u32 %v555, 7
        %v557 = vsub.s32 %v554, %v556
        %v558 = vrot.slane %v550, %v557
        %v560 = vunpack.c.l.s4 1934713408
        %v561 = vunpack.c.0.s8 %v560
        %v562 = vlaneseq
        %v563 = vshrl.u32 %v562, 7
        %v564 = vsub.s32 %v561, %v563
        %v565 = vrot.slane %v551, %v564
        %v566 = vcombine.low %v533, %v549
        %v567 = vcombine.high %v533, %v549
        %v569 = vunpack.c.l.s4 1934713408
        %v570 = vunpack.c.0.s8 %v569
        %v571 = vlaneseq
        %v572 = vshrl.u32 %v571, 7
        %v573 = vsub.s32 %v570, %v572
        %v574 = vrot.slane %v566, %v573
        %v576 = vunpack.c.l.s4 1934713408
        %v577 = vunpack.c.0.s8 %v576
        %v578 = vlaneseq
        %v579 = vshrl.u32 %v578, 7
        %v580 = vsub.s32 %v577, %v579
        %v581 = vrot.slane %v567, %v580
        %v582 = vcombine.high %v558, 0.0
        %v583 = vcombine.high %v565, 0.0
        %v584 = vcombine.high %v574, 0.0
        %v585 = vcombine.high %v581, 0.0
        %v586 = vcombine.low %v488, %v494
        %v587 = vcombine.high %v488, %v494
        %v589 = vunpack.c.l.s4 1983009808
        %v590 = vunpack.c.0.s8 %v589
        %v591 = vlaneseq
        %v592 = vshrl.u32 %v591, 7
        %v593 = vsub.s32 %v590, %v592
        %v594 = vrot.slane %v586, %v593
        %v596 = vunpack.c.l.s4 1983009808
        %v597 = vunpack.c.0.s8 %v596
        %v598 = vlaneseq
        %v599 = vshrl.u32 %v598, 7
        %v600 = vsub.s32 %v597, %v599
        %v601 = vrot.slane %v587, %v600
        %v602 = vcombine.low %v491, %v497
        %v603 = vcombine.high %v491, %v497
        %v605 = vunpack.c.l.s4 1983009808
        %v606 = vunpack.c.0.s8 %v605
        %v607 = vlaneseq
        %v608 = vshrl.u32 %v607, 7
        %v609 = vsub.s32 %v606, %v608
        %v610 = vrot.slane %v602, %v609
        %v612 = vunpack.c.l.s4 1983009808
        %v613 = vunpack.c.0.s8 %v612
        %v614 = vlaneseq
        %v615 = vshrl.u32 %v614, 7
        %v616 = vsub.s32 %v613, %v615
        %v617 = vrot.slane %v603, %v616
        %v618 = vcombine.low %v594, %v610
        %v619 = vcombine.high %v594, %v610
        %v621 = vunpack.c.l.s4 1934713408
        %v622 = vunpack.c.0.s8 %v621
        %v623 = vlaneseq
        %v624 = vshrl.u32 %v623, 7
        %v625 = vsub.s32 %v622, %v624
        %v626 = vrot.slane %v618, %v625
        %v628 = vunpack.c.l.s4 1934713408
        %v629 = vunpack.c.0.s8 %v628
        %v630 = vlaneseq
        %v631 = vshrl.u32 %v630, 7
        %v632 = vsub.s32 %v629, %v631
        %v633 = vrot.slane %v619, %v632
        %v634 = vcombine.low %v601, %v617
        %v635 = vcombine.high %v601, %v617
        %v637 = vunpack.c.l.s4 1934713408
        %v638 = vunpack.c.0.s8 %v637
        %v639 = vlaneseq
        %v640 = vshrl.u32 %v639, 7
        %v641 = vsub.s32 %v638, %v640
        %v642 = vrot.slane %v634, %v641
        %v644 = vunpack.c.l.s4 1934713408
        %v645 = vunpack.c.0.s8 %v644
        %v646 = vlaneseq
        %v647 = vshrl.u32 %v646, 7
        %v648 = vsub.s32 %v645, %v647
        %v649 = vrot.slane %v635, %v648
        %v650 = vcombine.high %v626, 0.0
        %v651 = vcombine.high %v633, 0.0
        %v652 = vcombine.high %v642, 0.0
        %v653 = vcombine.high %v649, 0.0
        %655 = vrot.lane.b32.xlu0 %v582, 16
        %v656 = vpop.permute.xlu0 %655
        %659 = vrot.lane.b32.xlu0 %v565, 32
        %v660 = vpop.permute.xlu0 %659
        %663 = vrot.lane.b32.xlu0 %v583, 48
        %v664 = vpop.permute.xlu0 %663
        %667 = vrot.lane.b32.xlu0 %v574, 64
        %v668 = vpop.permute.xlu0 %667
        %671 = vrot.lane.b32.xlu0 %v584, 80
        %v672 = vpop.permute.xlu0 %671
        %675 = vrot.lane.b32.xlu0 %v581, 96
        %v676 = vpop.permute.xlu0 %675
        %679 = vrot.lane.b32.xlu0 %v585, 112
        %v680 = vpop.permute.xlu0 %679
        %683 = vrot.lane.b32.xlu0 %v650, 16
        %v684 = vpop.permute.xlu0 %683
        %687 = vrot.lane.b32.xlu0 %v633, 32
        %v688 = vpop.permute.xlu0 %687
        %691 = vrot.lane.b32.xlu0 %v651, 48
        %v692 = vpop.permute.xlu0 %691
        %695 = vrot.lane.b32.xlu0 %v642, 64
        %v696 = vpop.permute.xlu0 %695
        %699 = vrot.lane.b32.xlu0 %v652, 80
        %v700 = vpop.permute.xlu0 %699
        %703 = vrot.lane.b32.xlu0 %v649, 96
        %v704 = vpop.permute.xlu0 %703
        %707 = vrot.lane.b32.xlu0 %v653, 112
        %v708 = vpop.permute.xlu0 %707
        %vm710 = vcmask 130048
        %v711 = vsel %vm710, %v558, %v656
        %vm712 = vcmask 261120
        %v713 = vsel %vm712, %v711, %v660
        %vm714 = vcmask 392192
        %v715 = vsel %vm714, %v713, %v664
        %vm716 = vcmask 523264
        %v717 = vsel %vm716, %v715, %v668
        %vm718 = vcmask 654336
        %v719 = vsel %vm718, %v717, %v672
        %vm720 = vcmask 785408
        %v721 = vsel %vm720, %v719, %v676
        %vm722 = vcmask 916480
        %v723 = vsel %vm722, %v721, %v680
        %v724 = vsel %vm710, %v626, %v684
        %v725 = vsel %vm712, %v724, %v688
        %v726 = vsel %vm714, %v725, %v692
        %v727 = vsel %vm716, %v726, %v696
        %v728 = vsel %vm718, %v727, %v700
        %v729 = vsel %vm720, %v728, %v704
        %v730 = vsel %vm722, %v729, %v708
        %735 = vrot.lane.b32.xlu0 %v510, 127
        %v736 = vpop.permute.xlu0 %735
        %737 = vrot.lane.b32.xlu0 %v488, 127
        %v738 = vpop.permute.xlu0 %737
        %739 = vrot.lane.b32.xlu0 %v511, 127
        %v740 = vpop.permute.xlu0 %739
        %741 = vrot.lane.b32.xlu0 %v491, 127
        %v742 = vpop.permute.xlu0 %741
        %743 = vrot.lane.b32.xlu0 %v512, 127
        %v744 = vpop.permute.xlu0 %743
        %745 = vrot.lane.b32.xlu0 %v494, 127
        %v746 = vpop.permute.xlu0 %745
        %747 = vrot.lane.b32.xlu0 %v513, 127
        %v748 = vpop.permute.xlu0 %747
        %749 = vrot.lane.b32.xlu0 %v497, 127
        %v750 = vpop.permute.xlu0 %749
        %v759 = vcombine.low %v736, %v744
        %v760 = vcombine.high %v736, %v744
        %v762 = vunpack.c.l.s4 1983009808
        %v763 = vunpack.c.0.s8 %v762
        %v764 = vlaneseq
        %v765 = vshrl.u32 %v764, 7
        %v766 = vsub.s32 %v763, %v765
        %v767 = vrot.slane %v759, %v766
        %v769 = vunpack.c.l.s4 1983009808
        %v770 = vunpack.c.0.s8 %v769
        %v771 = vlaneseq
        %v772 = vshrl.u32 %v771, 7
        %v773 = vsub.s32 %v770, %v772
        %v774 = vrot.slane %v760, %v773
        %v775 = vcombine.low %v740, %v748
        %v776 = vcombine.high %v740, %v748
        %v778 = vunpack.c.l.s4 1983009808
        %v779 = vunpack.c.0.s8 %v778
        %v780 = vlaneseq
        %v781 = vshrl.u32 %v780, 7
        %v782 = vsub.s32 %v779, %v781
        %v783 = vrot.slane %v775, %v782
        %v785 = vunpack.c.l.s4 1983009808
        %v786 = vunpack.c.0.s8 %v785
        %v787 = vlaneseq
        %v788 = vshrl.u32 %v787, 7
        %v789 = vsub.s32 %v786, %v788
        %v790 = vrot.slane %v776, %v789
        %v791 = vcombine.low %v767, %v783
        %v792 = vcombine.high %v767, %v783
        %v794 = vunpack.c.l.s4 1934713408
        %v795 = vunpack.c.0.s8 %v794
        %v796 = vlaneseq
        %v797 = vshrl.u32 %v796, 7
        %v798 = vsub.s32 %v795, %v797
        %v799 = vrot.slane %v791, %v798
        %v801 = vunpack.c.l.s4 1934713408
        %v802 = vunpack.c.0.s8 %v801
        %v803 = vlaneseq
        %v804 = vshrl.u32 %v803, 7
        %v805 = vsub.s32 %v802, %v804
        %v806 = vrot.slane %v792, %v805
        %v807 = vcombine.low %v774, %v790
        %v808 = vcombine.high %v774, %v790
        %v810 = vunpack.c.l.s4 1934713408
        %v811 = vunpack.c.0.s8 %v810
        %v812 = vlaneseq
        %v813 = vshrl.u32 %v812, 7
        %v814 = vsub.s32 %v811, %v813
        %v815 = vrot.slane %v807, %v814
        %v817 = vunpack.c.l.s4 1934713408
        %v818 = vunpack.c.0.s8 %v817
        %v819 = vlaneseq
        %v820 = vshrl.u32 %v819, 7
        %v821 = vsub.s32 %v818, %v820
        %v822 = vrot.slane %v808, %v821
        %v823 = vcombine.high %v799, 0.0
        %v824 = vcombine.high %v806, 0.0
        %v825 = vcombine.high %v815, 0.0
        %v826 = vcombine.high %v822, 0.0
        %v827 = vcombine.low %v738, %v746
        %v828 = vcombine.high %v738, %v746
        %v830 = vunpack.c.l.s4 1983009808
        %v831 = vunpack.c.0.s8 %v830
        %v832 = vlaneseq
        %v833 = vshrl.u32 %v832, 7
        %v834 = vsub.s32 %v831, %v833
        %v835 = vrot.slane %v827, %v834
        %v837 = vunpack.c.l.s4 1983009808
        %v838 = vunpack.c.0.s8 %v837
        %v839 = vlaneseq
        %v840 = vshrl.u32 %v839, 7
        %v841 = vsub.s32 %v838, %v840
        %v842 = vrot.slane %v828, %v841
        %v843 = vcombine.low %v742, %v750
        %v844 = vcombine.high %v742, %v750
        %v846 = vunpack.c.l.s4 1983009808
        %v847 = vunpack.c.0.s8 %v846
        %v848 = vlaneseq
        %v849 = vshrl.u32 %v848, 7
        %v850 = vsub.s32 %v847, %v849
        %v851 = vrot.slane %v843, %v850
        %v853 = vunpack.c.l.s4 1983009808
        %v854 = vunpack.c.0.s8 %v853
        %v855 = vlaneseq
        %v856 = vshrl.u32 %v855, 7
        %v857 = vsub.s32 %v854, %v856
        %v858 = vrot.slane %v844, %v857
        %v859 = vcombine.low %v835, %v851
        %v860 = vcombine.high %v835, %v851
        %v862 = vunpack.c.l.s4 1934713408
        %v863 = vunpack.c.0.s8 %v862
        %v864 = vlaneseq
        %v865 = vshrl.u32 %v864, 7
        %v866 = vsub.s32 %v863, %v865
        %v867 = vrot.slane %v859, %v866
        %v869 = vunpack.c.l.s4 1934713408
        %v870 = vunpack.c.0.s8 %v869
        %v871 = vlaneseq
        %v872 = vshrl.u32 %v871, 7
        %v873 = vsub.s32 %v870, %v872
        %v874 = vrot.slane %v860, %v873
        %v875 = vcombine.low %v842, %v858
        %v876 = vcombine.high %v842, %v858
        %v878 = vunpack.c.l.s4 1934713408
        %v879 = vunpack.c.0.s8 %v878
        %v880 = vlaneseq
        %v881 = vshrl.u32 %v880, 7
        %v882 = vsub.s32 %v879, %v881
        %v883 = vrot.slane %v875, %v882
        %v885 = vunpack.c.l.s4 1934713408
        %v886 = vunpack.c.0.s8 %v885
        %v887 = vlaneseq
        %v888 = vshrl.u32 %v887, 7
        %v889 = vsub.s32 %v886, %v888
        %v890 = vrot.slane %v876, %v889
        %v891 = vcombine.high %v867, 0.0
        %v892 = vcombine.high %v874, 0.0
        %v893 = vcombine.high %v883, 0.0
        %v894 = vcombine.high %v890, 0.0
        %896 = vrot.lane.b32.xlu0 %v823, 16
        %v897 = vpop.permute.xlu0 %896
        %900 = vrot.lane.b32.xlu0 %v806, 32
        %v901 = vpop.permute.xlu0 %900
        %904 = vrot.lane.b32.xlu0 %v824, 48
        %v905 = vpop.permute.xlu0 %904
        %908 = vrot.lane.b32.xlu0 %v815, 64
        %v909 = vpop.permute.xlu0 %908
        %912 = vrot.lane.b32.xlu0 %v825, 80
        %v913 = vpop.permute.xlu0 %912
        %916 = vrot.lane.b32.xlu0 %v822, 96
        %v917 = vpop.permute.xlu0 %916
        %920 = vrot.lane.b32.xlu0 %v826, 112
        %v921 = vpop.permute.xlu0 %920
        %924 = vrot.lane.b32.xlu0 %v891, 16
        %v925 = vpop.permute.xlu0 %924
        %928 = vrot.lane.b32.xlu0 %v874, 32
        %v929 = vpop.permute.xlu0 %928
        %932 = vrot.lane.b32.xlu0 %v892, 48
        %v933 = vpop.permute.xlu0 %932
        %936 = vrot.lane.b32.xlu0 %v883, 64
        %v937 = vpop.permute.xlu0 %936
        %940 = vrot.lane.b32.xlu0 %v893, 80
        %v941 = vpop.permute.xlu0 %940
        %944 = vrot.lane.b32.xlu0 %v890, 96
        %v945 = vpop.permute.xlu0 %944
        %948 = vrot.lane.b32.xlu0 %v894, 112
        %v949 = vpop.permute.xlu0 %948
        %v951 = vsel %vm710, %v799, %v897
        %v952 = vsel %vm712, %v951, %v901
        %v953 = vsel %vm714, %v952, %v905
        %v954 = vsel %vm716, %v953, %v909
        %v955 = vsel %vm718, %v954, %v913
        %v956 = vsel %vm720, %v955, %v917
        %v957 = vsel %vm722, %v956, %v921
        %v958 = vsel %vm710, %v867, %v925
        %v959 = vsel %vm712, %v958, %v929
        %v960 = vsel %vm714, %v959, %v933
        %v961 = vsel %vm716, %v960, %v937
        %v962 = vsel %vm718, %v961, %v941
        %v963 = vsel %vm720, %v962, %v945
        %v964 = vsel %vm722, %v963, %v949
        %965 = vrot.lane.b32.xlu0 %v510, 126
        %v966 = vpop.permute.xlu0 %965
        %967 = vrot.lane.b32.xlu0 %v488, 126
        %v968 = vpop.permute.xlu0 %967
        %969 = vrot.lane.b32.xlu0 %v511, 126
        %v970 = vpop.permute.xlu0 %969
        %971 = vrot.lane.b32.xlu0 %v491, 126
        %v972 = vpop.permute.xlu0 %971
        %973 = vrot.lane.b32.xlu0 %v512, 126
        %v974 = vpop.permute.xlu0 %973
        %975 = vrot.lane.b32.xlu0 %v494, 126
        %v976 = vpop.permute.xlu0 %975
        %977 = vrot.lane.b32.xlu0 %v513, 126
        %v978 = vpop.permute.xlu0 %977
        %979 = vrot.lane.b32.xlu0 %v497, 126
        %v980 = vpop.permute.xlu0 %979
        %v989 = vcombine.low %v966, %v974
        %v990 = vcombine.high %v966, %v974
        %v992 = vunpack.c.l.s4 1983009808
        %v993 = vunpack.c.0.s8 %v992
        %v994 = vlaneseq
        %v995 = vshrl.u32 %v994, 7
        %v996 = vsub.s32 %v993, %v995
        %v997 = vrot.slane %v989, %v996
        %v999 = vunpack.c.l.s4 1983009808
        %v1000 = vunpack.c.0.s8 %v999
        %v1001 = vlaneseq
        %v1002 = vshrl.u32 %v1001, 7
        %v1003 = vsub.s32 %v1000, %v1002
        %v1004 = vrot.slane %v990, %v1003
        %v1005 = vcombine.low %v970, %v978
        %v1006 = vcombine.high %v970, %v978
        %v1008 = vunpack.c.l.s4 1983009808
        %v1009 = vunpack.c.0.s8 %v1008
        %v1010 = vlaneseq
        %v1011 = vshrl.u32 %v1010, 7
        %v1012 = vsub.s32 %v1009, %v1011
        %v1013 = vrot.slane %v1005, %v1012
        %v1015 = vunpack.c.l.s4 1983009808
        %v1016 = vunpack.c.0.s8 %v1015
        %v1017 = vlaneseq
        %v1018 = vshrl.u32 %v1017, 7
        %v1019 = vsub.s32 %v1016, %v1018
        %v1020 = vrot.slane %v1006, %v1019
        %v1021 = vcombine.low %v997, %v1013
        %v1022 = vcombine.high %v997, %v1013
        %v1024 = vunpack.c.l.s4 1934713408
        %v1025 = vunpack.c.0.s8 %v1024
        %v1026 = vlaneseq
        %v1027 = vshrl.u32 %v1026, 7
        %v1028 = vsub.s32 %v1025, %v1027
        %v1029 = vrot.slane %v1021, %v1028
        %v1031 = vunpack.c.l.s4 1934713408
        %v1032 = vunpack.c.0.s8 %v1031
        %v1033 = vlaneseq
        %v1034 = vshrl.u32 %v1033, 7
        %v1035 = vsub.s32 %v1032, %v1034
        %v1036 = vrot.slane %v1022, %v1035
        %v1037 = vcombine.low %v1004, %v1020
        %v1038 = vcombine.high %v1004, %v1020
        %v1040 = vunpack.c.l.s4 1934713408
        %v1041 = vunpack.c.0.s8 %v1040
        %v1042 = vlaneseq
        %v1043 = vshrl.u32 %v1042, 7
        %v1044 = vsub.s32 %v1041, %v1043
        %v1045 = vrot.slane %v1037, %v1044
        %v1047 = vunpack.c.l.s4 1934713408
        %v1048 = vunpack.c.0.s8 %v1047
        %v1049 = vlaneseq
        %v1050 = vshrl.u32 %v1049, 7
        %v1051 = vsub.s32 %v1048, %v1050
        %v1052 = vrot.slane %v1038, %v1051
        %v1053 = vcombine.high %v1029, 0.0
        %v1054 = vcombine.high %v1036, 0.0
        %v1055 = vcombine.high %v1045, 0.0
        %v1056 = vcombine.high %v1052, 0.0
        %v1057 = vcombine.low %v968, %v976
        %v1058 = vcombine.high %v968, %v976
        %v1060 = vunpack.c.l.s4 1983009808
        %v1061 = vunpack.c.0.s8 %v1060
        %v1062 = vlaneseq
        %v1063 = vshrl.u32 %v1062, 7
        %v1064 = vsub.s32 %v1061, %v1063
        %v1065 = vrot.slane %v1057, %v1064
        %v1067 = vunpack.c.l.s4 1983009808
        %v1068 = vunpack.c.0.s8 %v1067
        %v1069 = vlaneseq
        %v1070 = vshrl.u32 %v1069, 7
        %v1071 = vsub.s32 %v1068, %v1070
        %v1072 = vrot.slane %v1058, %v1071
        %v1073 = vcombine.low %v972, %v980
        %v1074 = vcombine.high %v972, %v980
        %v1076 = vunpack.c.l.s4 1983009808
        %v1077 = vunpack.c.0.s8 %v1076
        %v1078 = vlaneseq
        %v1079 = vshrl.u32 %v1078, 7
        %v1080 = vsub.s32 %v1077, %v1079
        %v1081 = vrot.slane %v1073, %v1080
        %v1083 = vunpack.c.l.s4 1983009808
        %v1084 = vunpack.c.0.s8 %v1083
        %v1085 = vlaneseq
        %v1086 = vshrl.u32 %v1085, 7
        %v1087 = vsub.s32 %v1084, %v1086
        %v1088 = vrot.slane %v1074, %v1087
        %v1089 = vcombine.low %v1065, %v1081
        %v1090 = vcombine.high %v1065, %v1081
        %v1092 = vunpack.c.l.s4 1934713408
        %v1093 = vunpack.c.0.s8 %v1092
        %v1094 = vlaneseq
        %v1095 = vshrl.u32 %v1094, 7
        %v1096 = vsub.s32 %v1093, %v1095
        %v1097 = vrot.slane %v1089, %v1096
        %v1099 = vunpack.c.l.s4 1934713408
        %v1100 = vunpack.c.0.s8 %v1099
        %v1101 = vlaneseq
        %v1102 = vshrl.u32 %v1101, 7
        %v1103 = vsub.s32 %v1100, %v1102
        %v1104 = vrot.slane %v1090, %v1103
        %v1105 = vcombine.low %v1072, %v1088
        %v1106 = vcombine.high %v1072, %v1088
        %v1108 = vunpack.c.l.s4 1934713408
        %v1109 = vunpack.c.0.s8 %v1108
        %v1110 = vlaneseq
        %v1111 = vshrl.u32 %v1110, 7
        %v1112 = vsub.s32 %v1109, %v1111
        %v1113 = vrot.slane %v1105, %v1112
        %v1115 = vunpack.c.l.s4 1934713408
        %v1116 = vunpack.c.0.s8 %v1115
        %v1117 = vlaneseq
        %v1118 = vshrl.u32 %v1117, 7
        %v1119 = vsub.s32 %v1116, %v1118
        %v1120 = vrot.slane %v1106, %v1119
        %v1121 = vcombine.high %v1097, 0.0
        %v1122 = vcombine.high %v1104, 0.0
        %v1123 = vcombine.high %v1113, 0.0
        %v1124 = vcombine.high %v1120, 0.0
        %1126 = vrot.lane.b32.xlu0 %v1053, 16
        %v1127 = vpop.permute.xlu0 %1126
        %1130 = vrot.lane.b32.xlu0 %v1036, 32
        %v1131 = vpop.permute.xlu0 %1130
        %1134 = vrot.lane.b32.xlu0 %v1054, 48
        %v1135 = vpop.permute.xlu0 %1134
        %1138 = vrot.lane.b32.xlu0 %v1045, 64
        %v1139 = vpop.permute.xlu0 %1138
        %1142 = vrot.lane.b32.xlu0 %v1055, 80
        %v1143 = vpop.permute.xlu0 %1142
        %1146 = vrot.lane.b32.xlu0 %v1052, 96
        %v1147 = vpop.permute.xlu0 %1146
        %1150 = vrot.lane.b32.xlu0 %v1056, 112
        %v1151 = vpop.permute.xlu0 %1150
        %1154 = vrot.lane.b32.xlu0 %v1121, 16
        %v1155 = vpop.permute.xlu0 %1154
        %1158 = vrot.lane.b32.xlu0 %v1104, 32
        %v1159 = vpop.permute.xlu0 %1158
        %1162 = vrot.lane.b32.xlu0 %v1122, 48
        %v1163 = vpop.permute.xlu0 %1162
        %1166 = vrot.lane.b32.xlu0 %v1113, 64
        %v1167 = vpop.permute.xlu0 %1166
        %1170 = vrot.lane.b32.xlu0 %v1123, 80
        %v1171 = vpop.permute.xlu0 %1170
        %1174 = vrot.lane.b32.xlu0 %v1120, 96
        %v1175 = vpop.permute.xlu0 %1174
        %1178 = vrot.lane.b32.xlu0 %v1124, 112
        %v1179 = vpop.permute.xlu0 %1178
        %v1181 = vsel %vm710, %v1029, %v1127
        %v1182 = vsel %vm712, %v1181, %v1131
        %v1183 = vsel %vm714, %v1182, %v1135
        %v1184 = vsel %vm716, %v1183, %v1139
        %v1185 = vsel %vm718, %v1184, %v1143
        %v1186 = vsel %vm720, %v1185, %v1147
        %v1187 = vsel %vm722, %v1186, %v1151
        %v1188 = vsel %vm710, %v1097, %v1155
        %v1189 = vsel %vm712, %v1188, %v1159
        %v1190 = vsel %vm714, %v1189, %v1163
        %v1191 = vsel %vm716, %v1190, %v1167
        %v1192 = vsel %vm718, %v1191, %v1171
        %v1193 = vsel %vm720, %v1192, %v1175
        %v1194 = vsel %vm722, %v1193, %v1179
        %vm1199 = vcmask 1046528
        %v1200 = vrot.slane %v510, 1
        %v1201 = vrot.slane %v488, 1
        %v1202 = vsel %vm1199, %v1200, %v1201
        %v1203 = vrot.slane %v514, 1
        %v1204 = vsel %vm1199, %v1201, %v1203
        %v1205 = vrot.slane %v511, 1
        %v1206 = vrot.slane %v491, 1
        %v1207 = vsel %vm1199, %v1205, %v1206
        %v1208 = vrot.slane %v515, 1
        %v1209 = vsel %vm1199, %v1206, %v1208
        %v1210 = vrot.slane %v512, 1
        %v1211 = vrot.slane %v494, 1
        %v1212 = vsel %vm1199, %v1210, %v1211
        %v1213 = vrot.slane %v516, 1
        %v1214 = vsel %vm1199, %v1211, %v1213
        %v1215 = vrot.slane %v513, 1
        %v1216 = vrot.slane %v497, 1
        %v1217 = vsel %vm1199, %v1215, %v1216
        %v1218 = vrot.slane %v517, 1
        %v1219 = vsel %vm1199, %v1216, %v1218
        %v1228 = vcombine.low %v1202, %v1212
        %v1229 = vcombine.high %v1202, %v1212
        %v1231 = vunpack.c.l.s4 1983009808
        %v1232 = vunpack.c.0.s8 %v1231
        %v1233 = vlaneseq
        %v1234 = vshrl.u32 %v1233, 7
        %v1235 = vsub.s32 %v1232, %v1234
        %v1236 = vrot.slane %v1228, %v1235
        %v1238 = vunpack.c.l.s4 1983009808
        %v1239 = vunpack.c.0.s8 %v1238
        %v1240 = vlaneseq
        %v1241 = vshrl.u32 %v1240, 7
        %v1242 = vsub.s32 %v1239, %v1241
        %v1243 = vrot.slane %v1229, %v1242
        %v1244 = vcombine.low %v1207, %v1217
        %v1245 = vcombine.high %v1207, %v1217
        %v1247 = vunpack.c.l.s4 1983009808
        %v1248 = vunpack.c.0.s8 %v1247
        %v1249 = vlaneseq
        %v1250 = vshrl.u32 %v1249, 7
        %v1251 = vsub.s32 %v1248, %v1250
        %v1252 = vrot.slane %v1244, %v1251
        %v1254 = vunpack.c.l.s4 1983009808
        %v1255 = vunpack.c.0.s8 %v1254
        %v1256 = vlaneseq
        %v1257 = vshrl.u32 %v1256, 7
        %v1258 = vsub.s32 %v1255, %v1257
        %v1259 = vrot.slane %v1245, %v1258
        %v1260 = vcombine.low %v1236, %v1252
        %v1261 = vcombine.high %v1236, %v1252
        %v1263 = vunpack.c.l.s4 1934713408
        %v1264 = vunpack.c.0.s8 %v1263
        %v1265 = vlaneseq
        %v1266 = vshrl.u32 %v1265, 7
        %v1267 = vsub.s32 %v1264, %v1266
        %v1268 = vrot.slane %v1260, %v1267
        %v1270 = vunpack.c.l.s4 1934713408
        %v1271 = vunpack.c.0.s8 %v1270
        %v1272 = vlaneseq
        %v1273 = vshrl.u32 %v1272, 7
        %v1274 = vsub.s32 %v1271, %v1273
        %v1275 = vrot.slane %v1261, %v1274
        %v1276 = vcombine.low %v1243, %v1259
        %v1277 = vcombine.high %v1243, %v1259
        %v1279 = vunpack.c.l.s4 1934713408
        %v1280 = vunpack.c.0.s8 %v1279
        %v1281 = vlaneseq
        %v1282 = vshrl.u32 %v1281, 7
        %v1283 = vsub.s32 %v1280, %v1282
        %v1284 = vrot.slane %v1276, %v1283
        %v1286 = vunpack.c.l.s4 1934713408
        %v1287 = vunpack.c.0.s8 %v1286
        %v1288 = vlaneseq
        %v1289 = vshrl.u32 %v1288, 7
        %v1290 = vsub.s32 %v1287, %v1289
        %v1291 = vrot.slane %v1277, %v1290
        %v1292 = vcombine.high %v1268, 0.0
        %v1293 = vcombine.high %v1275, 0.0
        %v1294 = vcombine.high %v1284, 0.0
        %v1295 = vcombine.high %v1291, 0.0
        %v1296 = vcombine.low %v1204, %v1214
        %v1297 = vcombine.high %v1204, %v1214
        %v1299 = vunpack.c.l.s4 1983009808
        %v1300 = vunpack.c.0.s8 %v1299
        %v1301 = vlaneseq
        %v1302 = vshrl.u32 %v1301, 7
        %v1303 = vsub.s32 %v1300, %v1302
        %v1304 = vrot.slane %v1296, %v1303
        %v1306 = vunpack.c.l.s4 1983009808
        %v1307 = vunpack.c.0.s8 %v1306
        %v1308 = vlaneseq
        %v1309 = vshrl.u32 %v1308, 7
        %v1310 = vsub.s32 %v1307, %v1309
        %v1311 = vrot.slane %v1297, %v1310
        %v1312 = vcombine.low %v1209, %v1219
        %v1313 = vcombine.high %v1209, %v1219
        %v1315 = vunpack.c.l.s4 1983009808
        %v1316 = vunpack.c.0.s8 %v1315
        %v1317 = vlaneseq
        %v1318 = vshrl.u32 %v1317, 7
        %v1319 = vsub.s32 %v1316, %v1318
        %v1320 = vrot.slane %v1312, %v1319
        %v1322 = vunpack.c.l.s4 1983009808
        %v1323 = vunpack.c.0.s8 %v1322
        %v1324 = vlaneseq
        %v1325 = vshrl.u32 %v1324, 7
        %v1326 = vsub.s32 %v1323, %v1325
        %v1327 = vrot.slane %v1313, %v1326
        %v1328 = vcombine.low %v1304, %v1320
        %v1329 = vcombine.high %v1304, %v1320
        %v1331 = vunpack.c.l.s4 1934713408
        %v1332 = vunpack.c.0.s8 %v1331
        %v1333 = vlaneseq
        %v1334 = vshrl.u32 %v1333, 7
        %v1335 = vsub.s32 %v1332, %v1334
        %v1336 = vrot.slane %v1328, %v1335
        %v1338 = vunpack.c.l.s4 1934713408
        %v1339 = vunpack.c.0.s8 %v1338
        %v1340 = vlaneseq
        %v1341 = vshrl.u32 %v1340, 7
        %v1342 = vsub.s32 %v1339, %v1341
        %v1343 = vrot.slane %v1329, %v1342
        %v1344 = vcombine.low %v1311, %v1327
        %v1345 = vcombine.high %v1311, %v1327
        %v1347 = vunpack.c.l.s4 1934713408
        %v1348 = vunpack.c.0.s8 %v1347
        %v1349 = vlaneseq
        %v1350 = vshrl.u32 %v1349, 7
        %v1351 = vsub.s32 %v1348, %v1350
        %v1352 = vrot.slane %v1344, %v1351
        %v1354 = vunpack.c.l.s4 1934713408
        %v1355 = vunpack.c.0.s8 %v1354
        %v1356 = vlaneseq
        %v1357 = vshrl.u32 %v1356, 7
        %v1358 = vsub.s32 %v1355, %v1357
        %v1359 = vrot.slane %v1345, %v1358
        %v1360 = vcombine.high %v1336, 0.0
        %v1361 = vcombine.high %v1343, 0.0
        %v1362 = vcombine.high %v1352, 0.0
        %v1363 = vcombine.high %v1359, 0.0
        %1365 = vrot.lane.b32.xlu0 %v1292, 16
        %v1366 = vpop.permute.xlu0 %1365
        %1369 = vrot.lane.b32.xlu0 %v1275, 32
        %v1370 = vpop.permute.xlu0 %1369
        %1373 = vrot.lane.b32.xlu0 %v1293, 48
        %v1374 = vpop.permute.xlu0 %1373
        %1377 = vrot.lane.b32.xlu0 %v1284, 64
        %v1378 = vpop.permute.xlu0 %1377
        %1381 = vrot.lane.b32.xlu0 %v1294, 80
        %v1382 = vpop.permute.xlu0 %1381
        %1385 = vrot.lane.b32.xlu0 %v1291, 96
        %v1386 = vpop.permute.xlu0 %1385
        %1389 = vrot.lane.b32.xlu0 %v1295, 112
        %v1390 = vpop.permute.xlu0 %1389
        %1393 = vrot.lane.b32.xlu0 %v1360, 16
        %v1394 = vpop.permute.xlu0 %1393
        %1397 = vrot.lane.b32.xlu0 %v1343, 32
        %v1398 = vpop.permute.xlu0 %1397
        %1401 = vrot.lane.b32.xlu0 %v1361, 48
        %v1402 = vpop.permute.xlu0 %1401
        %1405 = vrot.lane.b32.xlu0 %v1352, 64
        %v1406 = vpop.permute.xlu0 %1405
        %1409 = vrot.lane.b32.xlu0 %v1362, 80
        %v1410 = vpop.permute.xlu0 %1409
        %1413 = vrot.lane.b32.xlu0 %v1359, 96
        %v1414 = vpop.permute.xlu0 %1413
        %1417 = vrot.lane.b32.xlu0 %v1363, 112
        %v1418 = vpop.permute.xlu0 %1417
        %v1420 = vsel %vm710, %v1268, %v1366
        %v1421 = vsel %vm712, %v1420, %v1370
        %v1422 = vsel %vm714, %v1421, %v1374
        %v1423 = vsel %vm716, %v1422, %v1378
        %v1424 = vsel %vm718, %v1423, %v1382
        %v1425 = vsel %vm720, %v1424, %v1386
        %v1426 = vsel %vm722, %v1425, %v1390
        %v1427 = vsel %vm710, %v1336, %v1394
        %v1428 = vsel %vm712, %v1427, %v1398
        %v1429 = vsel %vm714, %v1428, %v1402
        %v1430 = vsel %vm716, %v1429, %v1406
        %v1431 = vsel %vm718, %v1430, %v1410
        %v1432 = vsel %vm720, %v1431, %v1414
        %v1433 = vsel %vm722, %v1432, %v1418
        %1434 = vrot.lane.b32.xlu0 %v1202, 127
        %v1435 = vpop.permute.xlu0 %1434
        %1436 = vrot.lane.b32.xlu0 %v1204, 127
        %v1437 = vpop.permute.xlu0 %1436
        %1438 = vrot.lane.b32.xlu0 %v1207, 127
        %v1439 = vpop.permute.xlu0 %1438
        %1440 = vrot.lane.b32.xlu0 %v1209, 127
        %v1441 = vpop.permute.xlu0 %1440
        %1442 = vrot.lane.b32.xlu0 %v1212, 127
        %v1443 = vpop.permute.xlu0 %1442
        %1444 = vrot.lane.b32.xlu0 %v1214, 127
        %v1445 = vpop.permute.xlu0 %1444
        %1446 = vrot.lane.b32.xlu0 %v1217, 127
        %v1447 = vpop.permute.xlu0 %1446
        %1448 = vrot.lane.b32.xlu0 %v1219, 127
        %v1449 = vpop.permute.xlu0 %1448
        %v1458 = vcombine.low %v1435, %v1443
        %v1459 = vcombine.high %v1435, %v1443
        %v1461 = vunpack.c.l.s4 1983009808
        %v1462 = vunpack.c.0.s8 %v1461
        %v1463 = vlaneseq
        %v1464 = vshrl.u32 %v1463, 7
        %v1465 = vsub.s32 %v1462, %v1464
        %v1466 = vrot.slane %v1458, %v1465
        %v1468 = vunpack.c.l.s4 1983009808
        %v1469 = vunpack.c.0.s8 %v1468
        %v1470 = vlaneseq
        %v1471 = vshrl.u32 %v1470, 7
        %v1472 = vsub.s32 %v1469, %v1471
        %v1473 = vrot.slane %v1459, %v1472
        %v1474 = vcombine.low %v1439, %v1447
        %v1475 = vcombine.high %v1439, %v1447
        %v1477 = vunpack.c.l.s4 1983009808
        %v1478 = vunpack.c.0.s8 %v1477
        %v1479 = vlaneseq
        %v1480 = vshrl.u32 %v1479, 7
        %v1481 = vsub.s32 %v1478, %v1480
        %v1482 = vrot.slane %v1474, %v1481
        %v1484 = vunpack.c.l.s4 1983009808
        %v1485 = vunpack.c.0.s8 %v1484
        %v1486 = vlaneseq
        %v1487 = vshrl.u32 %v1486, 7
        %v1488 = vsub.s32 %v1485, %v1487
        %v1489 = vrot.slane %v1475, %v1488
        %v1490 = vcombine.low %v1466, %v1482
        %v1491 = vcombine.high %v1466, %v1482
        %v1493 = vunpack.c.l.s4 1934713408
        %v1494 = vunpack.c.0.s8 %v1493
        %v1495 = vlaneseq
        %v1496 = vshrl.u32 %v1495, 7
        %v1497 = vsub.s32 %v1494, %v1496
        %v1498 = vrot.slane %v1490, %v1497
        %v1500 = vunpack.c.l.s4 1934713408
        %v1501 = vunpack.c.0.s8 %v1500
        %v1502 = vlaneseq
        %v1503 = vshrl.u32 %v1502, 7
        %v1504 = vsub.s32 %v1501, %v1503
        %v1505 = vrot.slane %v1491, %v1504
        %v1506 = vcombine.low %v1473, %v1489
        %v1507 = vcombine.high %v1473, %v1489
        %v1509 = vunpack.c.l.s4 1934713408
        %v1510 = vunpack.c.0.s8 %v1509
        %v1511 = vlaneseq
        %v1512 = vshrl.u32 %v1511, 7
        %v1513 = vsub.s32 %v1510, %v1512
        %v1514 = vrot.slane %v1506, %v1513
        %v1516 = vunpack.c.l.s4 1934713408
        %v1517 = vunpack.c.0.s8 %v1516
        %v1518 = vlaneseq
        %v1519 = vshrl.u32 %v1518, 7
        %v1520 = vsub.s32 %v1517, %v1519
        %v1521 = vrot.slane %v1507, %v1520
        %v1522 = vcombine.high %v1498, 0.0
        %v1523 = vcombine.high %v1505, 0.0
        %v1524 = vcombine.high %v1514, 0.0
        %v1525 = vcombine.high %v1521, 0.0
        %v1526 = vcombine.low %v1437, %v1445
        %v1527 = vcombine.high %v1437, %v1445
        %v1529 = vunpack.c.l.s4 1983009808
        %v1530 = vunpack.c.0.s8 %v1529
        %v1531 = vlaneseq
        %v1532 = vshrl.u32 %v1531, 7
        %v1533 = vsub.s32 %v1530, %v1532
        %v1534 = vrot.slane %v1526, %v1533
        %v1536 = vunpack.c.l.s4 1983009808
        %v1537 = vunpack.c.0.s8 %v1536
        %v1538 = vlaneseq
        %v1539 = vshrl.u32 %v1538, 7
        %v1540 = vsub.s32 %v1537, %v1539
        %v1541 = vrot.slane %v1527, %v1540
        %v1542 = vcombine.low %v1441, %v1449
        %v1543 = vcombine.high %v1441, %v1449
        %v1545 = vunpack.c.l.s4 1983009808
        %v1546 = vunpack.c.0.s8 %v1545
        %v1547 = vlaneseq
        %v1548 = vshrl.u32 %v1547, 7
        %v1549 = vsub.s32 %v1546, %v1548
        %v1550 = vrot.slane %v1542, %v1549
        %v1552 = vunpack.c.l.s4 1983009808
        %v1553 = vunpack.c.0.s8 %v1552
        %v1554 = vlaneseq
        %v1555 = vshrl.u32 %v1554, 7
        %v1556 = vsub.s32 %v1553, %v1555
        %v1557 = vrot.slane %v1543, %v1556
        %v1558 = vcombine.low %v1534, %v1550
        %v1559 = vcombine.high %v1534, %v1550
        %v1561 = vunpack.c.l.s4 1934713408
        %v1562 = vunpack.c.0.s8 %v1561
        %v1563 = vlaneseq
        %v1564 = vshrl.u32 %v1563, 7
        %v1565 = vsub.s32 %v1562, %v1564
        %v1566 = vrot.slane %v1558, %v1565
        %v1568 = vunpack.c.l.s4 1934713408
        %v1569 = vunpack.c.0.s8 %v1568
        %v1570 = vlaneseq
        %v1571 = vshrl.u32 %v1570, 7
        %v1572 = vsub.s32 %v1569, %v1571
        %v1573 = vrot.slane %v1559, %v1572
        %v1574 = vcombine.low %v1541, %v1557
        %v1575 = vcombine.high %v1541, %v1557
        %v1577 = vunpack.c.l.s4 1934713408
        %v1578 = vunpack.c.0.s8 %v1577
        %v1579 = vlaneseq
        %v1580 = vshrl.u32 %v1579, 7
        %v1581 = vsub.s32 %v1578, %v1580
        %v1582 = vrot.slane %v1574, %v1581
        %v1584 = vunpack.c.l.s4 1934713408
        %v1585 = vunpack.c.0.s8 %v1584
        %v1586 = vlaneseq
        %v1587 = vshrl.u32 %v1586, 7
        %v1588 = vsub.s32 %v1585, %v1587
        %v1589 = vrot.slane %v1575, %v1588
        %v1590 = vcombine.high %v1566, 0.0
        %v1591 = vcombine.high %v1573, 0.0
        %v1592 = vcombine.high %v1582, 0.0
        %v1593 = vcombine.high %v1589, 0.0
        %1595 = vrot.lane.b32.xlu0 %v1522, 16
        %v1596 = vpop.permute.xlu0 %1595
        %1599 = vrot.lane.b32.xlu0 %v1505, 32
        %v1600 = vpop.permute.xlu0 %1599
        %1603 = vrot.lane.b32.xlu0 %v1523, 48
        %v1604 = vpop.permute.xlu0 %1603
        %1607 = vrot.lane.b32.xlu0 %v1514, 64
        %v1608 = vpop.permute.xlu0 %1607
        %1611 = vrot.lane.b32.xlu0 %v1524, 80
        %v1612 = vpop.permute.xlu0 %1611
        %1615 = vrot.lane.b32.xlu0 %v1521, 96
        %v1616 = vpop.permute.xlu0 %1615
        %1619 = vrot.lane.b32.xlu0 %v1525, 112
        %v1620 = vpop.permute.xlu0 %1619
        %1623 = vrot.lane.b32.xlu0 %v1590, 16
        %v1624 = vpop.permute.xlu0 %1623
        %1627 = vrot.lane.b32.xlu0 %v1573, 32
        %v1628 = vpop.permute.xlu0 %1627
        %1631 = vrot.lane.b32.xlu0 %v1591, 48
        %v1632 = vpop.permute.xlu0 %1631
        %1635 = vrot.lane.b32.xlu0 %v1582, 64
        %v1636 = vpop.permute.xlu0 %1635
        %1639 = vrot.lane.b32.xlu0 %v1592, 80
        %v1640 = vpop.permute.xlu0 %1639
        %1643 = vrot.lane.b32.xlu0 %v1589, 96
        %v1644 = vpop.permute.xlu0 %1643
        %1647 = vrot.lane.b32.xlu0 %v1593, 112
        %v1648 = vpop.permute.xlu0 %1647
        %v1650 = vsel %vm710, %v1498, %v1596
        %v1651 = vsel %vm712, %v1650, %v1600
        %v1652 = vsel %vm714, %v1651, %v1604
        %v1653 = vsel %vm716, %v1652, %v1608
        %v1654 = vsel %vm718, %v1653, %v1612
        %v1655 = vsel %vm720, %v1654, %v1616
        %v1656 = vsel %vm722, %v1655, %v1620
        %v1657 = vsel %vm710, %v1566, %v1624
        %v1658 = vsel %vm712, %v1657, %v1628
        %v1659 = vsel %vm714, %v1658, %v1632
        %v1660 = vsel %vm716, %v1659, %v1636
        %v1661 = vsel %vm718, %v1660, %v1640
        %v1662 = vsel %vm720, %v1661, %v1644
        %v1663 = vsel %vm722, %v1662, %v1648
        %1664 = vrot.lane.b32.xlu0 %v1202, 126
        %v1665 = vpop.permute.xlu0 %1664
        %1666 = vrot.lane.b32.xlu0 %v1204, 126
        %v1667 = vpop.permute.xlu0 %1666
        %1668 = vrot.lane.b32.xlu0 %v1207, 126
        %v1669 = vpop.permute.xlu0 %1668
        %1670 = vrot.lane.b32.xlu0 %v1209, 126
        %v1671 = vpop.permute.xlu0 %1670
        %1672 = vrot.lane.b32.xlu0 %v1212, 126
        %v1673 = vpop.permute.xlu0 %1672
        %1674 = vrot.lane.b32.xlu0 %v1214, 126
        %v1675 = vpop.permute.xlu0 %1674
        %1676 = vrot.lane.b32.xlu0 %v1217, 126
        %v1677 = vpop.permute.xlu0 %1676
        %1678 = vrot.lane.b32.xlu0 %v1219, 126
        %v1679 = vpop.permute.xlu0 %1678
        %v1688 = vcombine.low %v1665, %v1673
        %v1689 = vcombine.high %v1665, %v1673
        %v1691 = vunpack.c.l.s4 1983009808
        %v1692 = vunpack.c.0.s8 %v1691
        %v1693 = vlaneseq
        %v1694 = vshrl.u32 %v1693, 7
        %v1695 = vsub.s32 %v1692, %v1694
        %v1696 = vrot.slane %v1688, %v1695
        %v1698 = vunpack.c.l.s4 1983009808
        %v1699 = vunpack.c.0.s8 %v1698
        %v1700 = vlaneseq
        %v1701 = vshrl.u32 %v1700, 7
        %v1702 = vsub.s32 %v1699, %v1701
        %v1703 = vrot.slane %v1689, %v1702
        %v1704 = vcombine.low %v1669, %v1677
        %v1705 = vcombine.high %v1669, %v1677
        %v1707 = vunpack.c.l.s4 1983009808
        %v1708 = vunpack.c.0.s8 %v1707
        %v1709 = vlaneseq
        %v1710 = vshrl.u32 %v1709, 7
        %v1711 = vsub.s32 %v1708, %v1710
        %v1712 = vrot.slane %v1704, %v1711
        %v1714 = vunpack.c.l.s4 1983009808
        %v1715 = vunpack.c.0.s8 %v1714
        %v1716 = vlaneseq
        %v1717 = vshrl.u32 %v1716, 7
        %v1718 = vsub.s32 %v1715, %v1717
        %v1719 = vrot.slane %v1705, %v1718
        %v1720 = vcombine.low %v1696, %v1712
        %v1721 = vcombine.high %v1696, %v1712
        %v1723 = vunpack.c.l.s4 1934713408
        %v1724 = vunpack.c.0.s8 %v1723
        %v1725 = vlaneseq
        %v1726 = vshrl.u32 %v1725, 7
        %v1727 = vsub.s32 %v1724, %v1726
        %v1728 = vrot.slane %v1720, %v1727
        %v1730 = vunpack.c.l.s4 1934713408
        %v1731 = vunpack.c.0.s8 %v1730
        %v1732 = vlaneseq
        %v1733 = vshrl.u32 %v1732, 7
        %v1734 = vsub.s32 %v1731, %v1733
        %v1735 = vrot.slane %v1721, %v1734
        %v1736 = vcombine.low %v1703, %v1719
        %v1737 = vcombine.high %v1703, %v1719
        %v1739 = vunpack.c.l.s4 1934713408
        %v1740 = vunpack.c.0.s8 %v1739
        %v1741 = vlaneseq
        %v1742 = vshrl.u32 %v1741, 7
        %v1743 = vsub.s32 %v1740, %v1742
        %v1744 = vrot.slane %v1736, %v1743
        %v1746 = vunpack.c.l.s4 1934713408
        %v1747 = vunpack.c.0.s8 %v1746
        %v1748 = vlaneseq
        %v1749 = vshrl.u32 %v1748, 7
        %v1750 = vsub.s32 %v1747, %v1749
        %v1751 = vrot.slane %v1737, %v1750
        %v1752 = vcombine.high %v1728, 0.0
        %v1753 = vcombine.high %v1735, 0.0
        %v1754 = vcombine.high %v1744, 0.0
        %v1755 = vcombine.high %v1751, 0.0
        %v1756 = vcombine.low %v1667, %v1675
        %v1757 = vcombine.high %v1667, %v1675
        %v1759 = vunpack.c.l.s4 1983009808
        %v1760 = vunpack.c.0.s8 %v1759
        %v1761 = vlaneseq
        %v1762 = vshrl.u32 %v1761, 7
        %v1763 = vsub.s32 %v1760, %v1762
        %v1764 = vrot.slane %v1756, %v1763
        %v1766 = vunpack.c.l.s4 1983009808
        %v1767 = vunpack.c.0.s8 %v1766
        %v1768 = vlaneseq
        %v1769 = vshrl.u32 %v1768, 7
        %v1770 = vsub.s32 %v1767, %v1769
        %v1771 = vrot.slane %v1757, %v1770
        %v1772 = vcombine.low %v1671, %v1679
        %v1773 = vcombine.high %v1671, %v1679
        %v1775 = vunpack.c.l.s4 1983009808
        %v1776 = vunpack.c.0.s8 %v1775
        %v1777 = vlaneseq
        %v1778 = vshrl.u32 %v1777, 7
        %v1779 = vsub.s32 %v1776, %v1778
        %v1780 = vrot.slane %v1772, %v1779
        %v1782 = vunpack.c.l.s4 1983009808
        %v1783 = vunpack.c.0.s8 %v1782
        %v1784 = vlaneseq
        %v1785 = vshrl.u32 %v1784, 7
        %v1786 = vsub.s32 %v1783, %v1785
        %v1787 = vrot.slane %v1773, %v1786
        %v1788 = vcombine.low %v1764, %v1780
        %v1789 = vcombine.high %v1764, %v1780
        %v1791 = vunpack.c.l.s4 1934713408
        %v1792 = vunpack.c.0.s8 %v1791
        %v1793 = vlaneseq
        %v1794 = vshrl.u32 %v1793, 7
        %v1795 = vsub.s32 %v1792, %v1794
        %v1796 = vrot.slane %v1788, %v1795
        %v1798 = vunpack.c.l.s4 1934713408
        %v1799 = vunpack.c.0.s8 %v1798
        %v1800 = vlaneseq
        %v1801 = vshrl.u32 %v1800, 7
        %v1802 = vsub.s32 %v1799, %v1801
        %v1803 = vrot.slane %v1789, %v1802
        %v1804 = vcombine.low %v1771, %v1787
        %v1805 = vcombine.high %v1771, %v1787
        %v1807 = vunpack.c.l.s4 1934713408
        %v1808 = vunpack.c.0.s8 %v1807
        %v1809 = vlaneseq
        %v1810 = vshrl.u32 %v1809, 7
        %v1811 = vsub.s32 %v1808, %v1810
        %v1812 = vrot.slane %v1804, %v1811
        %v1814 = vunpack.c.l.s4 1934713408
        %v1815 = vunpack.c.0.s8 %v1814
        %v1816 = vlaneseq
        %v1817 = vshrl.u32 %v1816, 7
        %v1818 = vsub.s32 %v1815, %v1817
        %v1819 = vrot.slane %v1805, %v1818
        %v1820 = vcombine.high %v1796, 0.0
        %v1821 = vcombine.high %v1803, 0.0
        %v1822 = vcombine.high %v1812, 0.0
        %v1823 = vcombine.high %v1819, 0.0
        %1825 = vrot.lane.b32.xlu0 %v1752, 16
        %v1826 = vpop.permute.xlu0 %1825
        %1829 = vrot.lane.b32.xlu0 %v1735, 32
        %v1830 = vpop.permute.xlu0 %1829
        %1833 = vrot.lane.b32.xlu0 %v1753, 48
        %v1834 = vpop.permute.xlu0 %1833
        %1837 = vrot.lane.b32.xlu0 %v1744, 64
        %v1838 = vpop.permute.xlu0 %1837
        %1841 = vrot.lane.b32.xlu0 %v1754, 80
        %v1842 = vpop.permute.xlu0 %1841
        %1845 = vrot.lane.b32.xlu0 %v1751, 96
        %v1846 = vpop.permute.xlu0 %1845
        %1849 = vrot.lane.b32.xlu0 %v1755, 112
        %v1850 = vpop.permute.xlu0 %1849
        %1853 = vrot.lane.b32.xlu0 %v1820, 16
        %v1854 = vpop.permute.xlu0 %1853
        %1857 = vrot.lane.b32.xlu0 %v1803, 32
        %v1858 = vpop.permute.xlu0 %1857
        %1861 = vrot.lane.b32.xlu0 %v1821, 48
        %v1862 = vpop.permute.xlu0 %1861
        %1865 = vrot.lane.b32.xlu0 %v1812, 64
        %v1866 = vpop.permute.xlu0 %1865
        %1869 = vrot.lane.b32.xlu0 %v1822, 80
        %v1870 = vpop.permute.xlu0 %1869
        %1873 = vrot.lane.b32.xlu0 %v1819, 96
        %v1874 = vpop.permute.xlu0 %1873
        %1877 = vrot.lane.b32.xlu0 %v1823, 112
        %v1878 = vpop.permute.xlu0 %1877
        %v1880 = vsel %vm710, %v1728, %v1826
        %v1881 = vsel %vm712, %v1880, %v1830
        %v1882 = vsel %vm714, %v1881, %v1834
        %v1883 = vsel %vm716, %v1882, %v1838
        %v1884 = vsel %vm718, %v1883, %v1842
        %v1885 = vsel %vm720, %v1884, %v1846
        %v1886 = vsel %vm722, %v1885, %v1850
        %v1887 = vsel %vm710, %v1796, %v1854
        %v1888 = vsel %vm712, %v1887, %v1858
        %v1889 = vsel %vm714, %v1888, %v1862
        %v1890 = vsel %vm716, %v1889, %v1866
        %v1891 = vsel %vm718, %v1890, %v1870
        %v1892 = vsel %vm720, %v1891, %v1874
        %v1893 = vsel %vm722, %v1892, %v1878
        %vm1894 = vcmask 1045504
        %v1895 = vrot.slane %v510, 2
        %v1896 = vrot.slane %v488, 2
        %v1897 = vsel %vm1894, %v1895, %v1896
        %v1898 = vrot.slane %v514, 2
        %v1899 = vsel %vm1894, %v1896, %v1898
        %v1900 = vrot.slane %v511, 2
        %v1901 = vrot.slane %v491, 2
        %v1902 = vsel %vm1894, %v1900, %v1901
        %v1903 = vrot.slane %v515, 2
        %v1904 = vsel %vm1894, %v1901, %v1903
        %v1905 = vrot.slane %v512, 2
        %v1906 = vrot.slane %v494, 2
        %v1907 = vsel %vm1894, %v1905, %v1906
        %v1908 = vrot.slane %v516, 2
        %v1909 = vsel %vm1894, %v1906, %v1908
        %v1910 = vrot.slane %v513, 2
        %v1911 = vrot.slane %v497, 2
        %v1912 = vsel %vm1894, %v1910, %v1911
        %v1913 = vrot.slane %v517, 2
        %v1914 = vsel %vm1894, %v1911, %v1913
        %v1923 = vcombine.low %v1897, %v1907
        %v1924 = vcombine.high %v1897, %v1907
        %v1926 = vunpack.c.l.s4 1983009808
        %v1927 = vunpack.c.0.s8 %v1926
        %v1928 = vlaneseq
        %v1929 = vshrl.u32 %v1928, 7
        %v1930 = vsub.s32 %v1927, %v1929
        %v1931 = vrot.slane %v1923, %v1930
        %v1933 = vunpack.c.l.s4 1983009808
        %v1934 = vunpack.c.0.s8 %v1933
        %v1935 = vlaneseq
        %v1936 = vshrl.u32 %v1935, 7
        %v1937 = vsub.s32 %v1934, %v1936
        %v1938 = vrot.slane %v1924, %v1937
        %v1939 = vcombine.low %v1902, %v1912
        %v1940 = vcombine.high %v1902, %v1912
        %v1942 = vunpack.c.l.s4 1983009808
        %v1943 = vunpack.c.0.s8 %v1942
        %v1944 = vlaneseq
        %v1945 = vshrl.u32 %v1944, 7
        %v1946 = vsub.s32 %v1943, %v1945
        %v1947 = vrot.slane %v1939, %v1946
        %v1949 = vunpack.c.l.s4 1983009808
        %v1950 = vunpack.c.0.s8 %v1949
        %v1951 = vlaneseq
        %v1952 = vshrl.u32 %v1951, 7
        %v1953 = vsub.s32 %v1950, %v1952
        %v1954 = vrot.slane %v1940, %v1953
        %v1955 = vcombine.low %v1931, %v1947
        %v1956 = vcombine.high %v1931, %v1947
        %v1958 = vunpack.c.l.s4 1934713408
        %v1959 = vunpack.c.0.s8 %v1958
        %v1960 = vlaneseq
        %v1961 = vshrl.u32 %v1960, 7
        %v1962 = vsub.s32 %v1959, %v1961
        %v1963 = vrot.slane %v1955, %v1962
        %v1965 = vunpack.c.l.s4 1934713408
        %v1966 = vunpack.c.0.s8 %v1965
        %v1967 = vlaneseq
        %v1968 = vshrl.u32 %v1967, 7
        %v1969 = vsub.s32 %v1966, %v1968
        %v1970 = vrot.slane %v1956, %v1969
        %v1971 = vcombine.low %v1938, %v1954
        %v1972 = vcombine.high %v1938, %v1954
        %v1974 = vunpack.c.l.s4 1934713408
        %v1975 = vunpack.c.0.s8 %v1974
        %v1976 = vlaneseq
        %v1977 = vshrl.u32 %v1976, 7
        %v1978 = vsub.s32 %v1975, %v1977
        %v1979 = vrot.slane %v1971, %v1978
        %v1981 = vunpack.c.l.s4 1934713408
        %v1982 = vunpack.c.0.s8 %v1981
        %v1983 = vlaneseq
        %v1984 = vshrl.u32 %v1983, 7
        %v1985 = vsub.s32 %v1982, %v1984
        %v1986 = vrot.slane %v1972, %v1985
        %v1987 = vcombine.high %v1963, 0.0
        %v1988 = vcombine.high %v1970, 0.0
        %v1989 = vcombine.high %v1979, 0.0
        %v1990 = vcombine.high %v1986, 0.0
        %v1991 = vcombine.low %v1899, %v1909
        %v1992 = vcombine.high %v1899, %v1909
        %v1994 = vunpack.c.l.s4 1983009808
        %v1995 = vunpack.c.0.s8 %v1994
        %v1996 = vlaneseq
        %v1997 = vshrl.u32 %v1996, 7
        %v1998 = vsub.s32 %v1995, %v1997
        %v1999 = vrot.slane %v1991, %v1998
        %v2001 = vunpack.c.l.s4 1983009808
        %v2002 = vunpack.c.0.s8 %v2001
        %v2003 = vlaneseq
        %v2004 = vshrl.u32 %v2003, 7
        %v2005 = vsub.s32 %v2002, %v2004
        %v2006 = vrot.slane %v1992, %v2005
        %v2007 = vcombine.low %v1904, %v1914
        %v2008 = vcombine.high %v1904, %v1914
        %v2010 = vunpack.c.l.s4 1983009808
        %v2011 = vunpack.c.0.s8 %v2010
        %v2012 = vlaneseq
        %v2013 = vshrl.u32 %v2012, 7
        %v2014 = vsub.s32 %v2011, %v2013
        %v2015 = vrot.slane %v2007, %v2014
        %v2017 = vunpack.c.l.s4 1983009808
        %v2018 = vunpack.c.0.s8 %v2017
        %v2019 = vlaneseq
        %v2020 = vshrl.u32 %v2019, 7
        %v2021 = vsub.s32 %v2018, %v2020
        %v2022 = vrot.slane %v2008, %v2021
        %v2023 = vcombine.low %v1999, %v2015
        %v2024 = vcombine.high %v1999, %v2015
        %v2026 = vunpack.c.l.s4 1934713408
        %v2027 = vunpack.c.0.s8 %v2026
        %v2028 = vlaneseq
        %v2029 = vshrl.u32 %v2028, 7
        %v2030 = vsub.s32 %v2027, %v2029
        %v2031 = vrot.slane %v2023, %v2030
        %v2033 = vunpack.c.l.s4 1934713408
        %v2034 = vunpack.c.0.s8 %v2033
        %v2035 = vlaneseq
        %v2036 = vshrl.u32 %v2035, 7
        %v2037 = vsub.s32 %v2034, %v2036
        %v2038 = vrot.slane %v2024, %v2037
        %v2039 = vcombine.low %v2006, %v2022
        %v2040 = vcombine.high %v2006, %v2022
        %v2042 = vunpack.c.l.s4 1934713408
        %v2043 = vunpack.c.0.s8 %v2042
        %v2044 = vlaneseq
        %v2045 = vshrl.u32 %v2044, 7
        %v2046 = vsub.s32 %v2043, %v2045
        %v2047 = vrot.slane %v2039, %v2046
        %v2049 = vunpack.c.l.s4 1934713408
        %v2050 = vunpack.c.0.s8 %v2049
        %v2051 = vlaneseq
        %v2052 = vshrl.u32 %v2051, 7
        %v2053 = vsub.s32 %v2050, %v2052
        %v2054 = vrot.slane %v2040, %v2053
        %v2055 = vcombine.high %v2031, 0.0
        %v2056 = vcombine.high %v2038, 0.0
        %v2057 = vcombine.high %v2047, 0.0
        %v2058 = vcombine.high %v2054, 0.0
        %2060 = vrot.lane.b32.xlu0 %v1987, 16
        %v2061 = vpop.permute.xlu0 %2060
        %2064 = vrot.lane.b32.xlu0 %v1970, 32
        %v2065 = vpop.permute.xlu0 %2064
        %2068 = vrot.lane.b32.xlu0 %v1988, 48
        %v2069 = vpop.permute.xlu0 %2068
        %2072 = vrot.lane.b32.xlu0 %v1979, 64
        %v2073 = vpop.permute.xlu0 %2072
        %2076 = vrot.lane.b32.xlu0 %v1989, 80
        %v2077 = vpop.permute.xlu0 %2076
        %2080 = vrot.lane.b32.xlu0 %v1986, 96
        %v2081 = vpop.permute.xlu0 %2080
        %2084 = vrot.lane.b32.xlu0 %v1990, 112
        %v2085 = vpop.permute.xlu0 %2084
        %2088 = vrot.lane.b32.xlu0 %v2055, 16
        %v2089 = vpop.permute.xlu0 %2088
        %2092 = vrot.lane.b32.xlu0 %v2038, 32
        %v2093 = vpop.permute.xlu0 %2092
        %2096 = vrot.lane.b32.xlu0 %v2056, 48
        %v2097 = vpop.permute.xlu0 %2096
        %2100 = vrot.lane.b32.xlu0 %v2047, 64
        %v2101 = vpop.permute.xlu0 %2100
        %2104 = vrot.lane.b32.xlu0 %v2057, 80
        %v2105 = vpop.permute.xlu0 %2104
        %2108 = vrot.lane.b32.xlu0 %v2054, 96
        %v2109 = vpop.permute.xlu0 %2108
        %2112 = vrot.lane.b32.xlu0 %v2058, 112
        %v2113 = vpop.permute.xlu0 %2112
        %v2115 = vsel %vm710, %v1963, %v2061
        %v2116 = vsel %vm712, %v2115, %v2065
        %v2117 = vsel %vm714, %v2116, %v2069
        %v2118 = vsel %vm716, %v2117, %v2073
        %v2119 = vsel %vm718, %v2118, %v2077
        %v2120 = vsel %vm720, %v2119, %v2081
        %v2121 = vsel %vm722, %v2120, %v2085
        %v2122 = vsel %vm710, %v2031, %v2089
        %v2123 = vsel %vm712, %v2122, %v2093
        %v2124 = vsel %vm714, %v2123, %v2097
        %v2125 = vsel %vm716, %v2124, %v2101
        %v2126 = vsel %vm718, %v2125, %v2105
        %v2127 = vsel %vm720, %v2126, %v2109
        %v2128 = vsel %vm722, %v2127, %v2113
        %2129 = vrot.lane.b32.xlu0 %v1897, 127
        %v2130 = vpop.permute.xlu0 %2129
        %2131 = vrot.lane.b32.xlu0 %v1899, 127
        %v2132 = vpop.permute.xlu0 %2131
        %2133 = vrot.lane.b32.xlu0 %v1902, 127
        %v2134 = vpop.permute.xlu0 %2133
        %2135 = vrot.lane.b32.xlu0 %v1904, 127
        %v2136 = vpop.permute.xlu0 %2135
        %2137 = vrot.lane.b32.xlu0 %v1907, 127
        %v2138 = vpop.permute.xlu0 %2137
        %2139 = vrot.lane.b32.xlu0 %v1909, 127
        %v2140 = vpop.permute.xlu0 %2139
        %2141 = vrot.lane.b32.xlu0 %v1912, 127
        %v2142 = vpop.permute.xlu0 %2141
        %2143 = vrot.lane.b32.xlu0 %v1914, 127
        %v2144 = vpop.permute.xlu0 %2143
        %v2153 = vcombine.low %v2130, %v2138
        %v2154 = vcombine.high %v2130, %v2138
        %v2156 = vunpack.c.l.s4 1983009808
        %v2157 = vunpack.c.0.s8 %v2156
        %v2158 = vlaneseq
        %v2159 = vshrl.u32 %v2158, 7
        %v2160 = vsub.s32 %v2157, %v2159
        %v2161 = vrot.slane %v2153, %v2160
        %v2163 = vunpack.c.l.s4 1983009808
        %v2164 = vunpack.c.0.s8 %v2163
        %v2165 = vlaneseq
        %v2166 = vshrl.u32 %v2165, 7
        %v2167 = vsub.s32 %v2164, %v2166
        %v2168 = vrot.slane %v2154, %v2167
        %v2169 = vcombine.low %v2134, %v2142
        %v2170 = vcombine.high %v2134, %v2142
        %v2172 = vunpack.c.l.s4 1983009808
        %v2173 = vunpack.c.0.s8 %v2172
        %v2174 = vlaneseq
        %v2175 = vshrl.u32 %v2174, 7
        %v2176 = vsub.s32 %v2173, %v2175
        %v2177 = vrot.slane %v2169, %v2176
        %v2179 = vunpack.c.l.s4 1983009808
        %v2180 = vunpack.c.0.s8 %v2179
        %v2181 = vlaneseq
        %v2182 = vshrl.u32 %v2181, 7
        %v2183 = vsub.s32 %v2180, %v2182
        %v2184 = vrot.slane %v2170, %v2183
        %v2185 = vcombine.low %v2161, %v2177
        %v2186 = vcombine.high %v2161, %v2177
        %v2188 = vunpack.c.l.s4 1934713408
        %v2189 = vunpack.c.0.s8 %v2188
        %v2190 = vlaneseq
        %v2191 = vshrl.u32 %v2190, 7
        %v2192 = vsub.s32 %v2189, %v2191
        %v2193 = vrot.slane %v2185, %v2192
        %v2195 = vunpack.c.l.s4 1934713408
        %v2196 = vunpack.c.0.s8 %v2195
        %v2197 = vlaneseq
        %v2198 = vshrl.u32 %v2197, 7
        %v2199 = vsub.s32 %v2196, %v2198
        %v2200 = vrot.slane %v2186, %v2199
        %v2201 = vcombine.low %v2168, %v2184
        %v2202 = vcombine.high %v2168, %v2184
        %v2204 = vunpack.c.l.s4 1934713408
        %v2205 = vunpack.c.0.s8 %v2204
        %v2206 = vlaneseq
        %v2207 = vshrl.u32 %v2206, 7
        %v2208 = vsub.s32 %v2205, %v2207
        %v2209 = vrot.slane %v2201, %v2208
        %v2211 = vunpack.c.l.s4 1934713408
        %v2212 = vunpack.c.0.s8 %v2211
        %v2213 = vlaneseq
        %v2214 = vshrl.u32 %v2213, 7
        %v2215 = vsub.s32 %v2212, %v2214
        %v2216 = vrot.slane %v2202, %v2215
        %v2217 = vcombine.high %v2193, 0.0
        %v2218 = vcombine.high %v2200, 0.0
        %v2219 = vcombine.high %v2209, 0.0
        %v2220 = vcombine.high %v2216, 0.0
        %v2221 = vcombine.low %v2132, %v2140
        %v2222 = vcombine.high %v2132, %v2140
        %v2224 = vunpack.c.l.s4 1983009808
        %v2225 = vunpack.c.0.s8 %v2224
        %v2226 = vlaneseq
        %v2227 = vshrl.u32 %v2226, 7
        %v2228 = vsub.s32 %v2225, %v2227
        %v2229 = vrot.slane %v2221, %v2228
        %v2231 = vunpack.c.l.s4 1983009808
        %v2232 = vunpack.c.0.s8 %v2231
        %v2233 = vlaneseq
        %v2234 = vshrl.u32 %v2233, 7
        %v2235 = vsub.s32 %v2232, %v2234
        %v2236 = vrot.slane %v2222, %v2235
        %v2237 = vcombine.low %v2136, %v2144
        %v2238 = vcombine.high %v2136, %v2144
        %v2240 = vunpack.c.l.s4 1983009808
        %v2241 = vunpack.c.0.s8 %v2240
        %v2242 = vlaneseq
        %v2243 = vshrl.u32 %v2242, 7
        %v2244 = vsub.s32 %v2241, %v2243
        %v2245 = vrot.slane %v2237, %v2244
        %v2247 = vunpack.c.l.s4 1983009808
        %v2248 = vunpack.c.0.s8 %v2247
        %v2249 = vlaneseq
        %v2250 = vshrl.u32 %v2249, 7
        %v2251 = vsub.s32 %v2248, %v2250
        %v2252 = vrot.slane %v2238, %v2251
        %v2253 = vcombine.low %v2229, %v2245
        %v2254 = vcombine.high %v2229, %v2245
        %v2256 = vunpack.c.l.s4 1934713408
        %v2257 = vunpack.c.0.s8 %v2256
        %v2258 = vlaneseq
        %v2259 = vshrl.u32 %v2258, 7
        %v2260 = vsub.s32 %v2257, %v2259
        %v2261 = vrot.slane %v2253, %v2260
        %v2263 = vunpack.c.l.s4 1934713408
        %v2264 = vunpack.c.0.s8 %v2263
        %v2265 = vlaneseq
        %v2266 = vshrl.u32 %v2265, 7
        %v2267 = vsub.s32 %v2264, %v2266
        %v2268 = vrot.slane %v2254, %v2267
        %v2269 = vcombine.low %v2236, %v2252
        %v2270 = vcombine.high %v2236, %v2252
        %v2272 = vunpack.c.l.s4 1934713408
        %v2273 = vunpack.c.0.s8 %v2272
        %v2274 = vlaneseq
        %v2275 = vshrl.u32 %v2274, 7
        %v2276 = vsub.s32 %v2273, %v2275
        %v2277 = vrot.slane %v2269, %v2276
        %v2279 = vunpack.c.l.s4 1934713408
        %v2280 = vunpack.c.0.s8 %v2279
        %v2281 = vlaneseq
        %v2282 = vshrl.u32 %v2281, 7
        %v2283 = vsub.s32 %v2280, %v2282
        %v2284 = vrot.slane %v2270, %v2283
        %v2285 = vcombine.high %v2261, 0.0
        %v2286 = vcombine.high %v2268, 0.0
        %v2287 = vcombine.high %v2277, 0.0
        %v2288 = vcombine.high %v2284, 0.0
        %2290 = vrot.lane.b32.xlu0 %v2217, 16
        %v2291 = vpop.permute.xlu0 %2290
        %2294 = vrot.lane.b32.xlu0 %v2200, 32
        %v2295 = vpop.permute.xlu0 %2294
        %2298 = vrot.lane.b32.xlu0 %v2218, 48
        %v2299 = vpop.permute.xlu0 %2298
        %2302 = vrot.lane.b32.xlu0 %v2209, 64
        %v2303 = vpop.permute.xlu0 %2302
        %2306 = vrot.lane.b32.xlu0 %v2219, 80
        %v2307 = vpop.permute.xlu0 %2306
        %2310 = vrot.lane.b32.xlu0 %v2216, 96
        %v2311 = vpop.permute.xlu0 %2310
        %2314 = vrot.lane.b32.xlu0 %v2220, 112
        %v2315 = vpop.permute.xlu0 %2314
        %2318 = vrot.lane.b32.xlu0 %v2285, 16
        %v2319 = vpop.permute.xlu0 %2318
        %2322 = vrot.lane.b32.xlu0 %v2268, 32
        %v2323 = vpop.permute.xlu0 %2322
        %2326 = vrot.lane.b32.xlu0 %v2286, 48
        %v2327 = vpop.permute.xlu0 %2326
        %2330 = vrot.lane.b32.xlu0 %v2277, 64
        %v2331 = vpop.permute.xlu0 %2330
        %2334 = vrot.lane.b32.xlu0 %v2287, 80
        %v2335 = vpop.permute.xlu0 %2334
        %2338 = vrot.lane.b32.xlu0 %v2284, 96
        %v2339 = vpop.permute.xlu0 %2338
        %2342 = vrot.lane.b32.xlu0 %v2288, 112
        %v2343 = vpop.permute.xlu0 %2342
        %v2345 = vsel %vm710, %v2193, %v2291
        %v2346 = vsel %vm712, %v2345, %v2295
        %v2347 = vsel %vm714, %v2346, %v2299
        %v2348 = vsel %vm716, %v2347, %v2303
        %v2349 = vsel %vm718, %v2348, %v2307
        %v2350 = vsel %vm720, %v2349, %v2311
        %v2351 = vsel %vm722, %v2350, %v2315
        %v2352 = vsel %vm710, %v2261, %v2319
        %v2353 = vsel %vm712, %v2352, %v2323
        %v2354 = vsel %vm714, %v2353, %v2327
        %v2355 = vsel %vm716, %v2354, %v2331
        %v2356 = vsel %vm718, %v2355, %v2335
        %v2357 = vsel %vm720, %v2356, %v2339
        %v2358 = vsel %vm722, %v2357, %v2343
        %2359 = vrot.lane.b32.xlu0 %v1897, 126
        %v2360 = vpop.permute.xlu0 %2359
        %2361 = vrot.lane.b32.xlu0 %v1899, 126
        %v2362 = vpop.permute.xlu0 %2361
        %2363 = vrot.lane.b32.xlu0 %v1902, 126
        %v2364 = vpop.permute.xlu0 %2363
        %2365 = vrot.lane.b32.xlu0 %v1904, 126
        %v2366 = vpop.permute.xlu0 %2365
        %2367 = vrot.lane.b32.xlu0 %v1907, 126
        %v2368 = vpop.permute.xlu0 %2367
        %2369 = vrot.lane.b32.xlu0 %v1909, 126
        %v2370 = vpop.permute.xlu0 %2369
        %2371 = vrot.lane.b32.xlu0 %v1912, 126
        %v2372 = vpop.permute.xlu0 %2371
        %2373 = vrot.lane.b32.xlu0 %v1914, 126
        %v2374 = vpop.permute.xlu0 %2373
        %v2383 = vcombine.low %v2360, %v2368
        %v2384 = vcombine.high %v2360, %v2368
        %v2386 = vunpack.c.l.s4 1983009808
        %v2387 = vunpack.c.0.s8 %v2386
        %v2388 = vlaneseq
        %v2389 = vshrl.u32 %v2388, 7
        %v2390 = vsub.s32 %v2387, %v2389
        %v2391 = vrot.slane %v2383, %v2390
        %v2393 = vunpack.c.l.s4 1983009808
        %v2394 = vunpack.c.0.s8 %v2393
        %v2395 = vlaneseq
        %v2396 = vshrl.u32 %v2395, 7
        %v2397 = vsub.s32 %v2394, %v2396
        %v2398 = vrot.slane %v2384, %v2397
        %v2399 = vcombine.low %v2364, %v2372
        %v2400 = vcombine.high %v2364, %v2372
        %v2402 = vunpack.c.l.s4 1983009808
        %v2403 = vunpack.c.0.s8 %v2402
        %v2404 = vlaneseq
        %v2405 = vshrl.u32 %v2404, 7
        %v2406 = vsub.s32 %v2403, %v2405
        %v2407 = vrot.slane %v2399, %v2406
        %v2409 = vunpack.c.l.s4 1983009808
        %v2410 = vunpack.c.0.s8 %v2409
        %v2411 = vlaneseq
        %v2412 = vshrl.u32 %v2411, 7
        %v2413 = vsub.s32 %v2410, %v2412
        %v2414 = vrot.slane %v2400, %v2413
        %v2415 = vcombine.low %v2391, %v2407
        %v2416 = vcombine.high %v2391, %v2407
        %v2418 = vunpack.c.l.s4 1934713408
        %v2419 = vunpack.c.0.s8 %v2418
        %v2420 = vlaneseq
        %v2421 = vshrl.u32 %v2420, 7
        %v2422 = vsub.s32 %v2419, %v2421
        %v2423 = vrot.slane %v2415, %v2422
        %v2425 = vunpack.c.l.s4 1934713408
        %v2426 = vunpack.c.0.s8 %v2425
        %v2427 = vlaneseq
        %v2428 = vshrl.u32 %v2427, 7
        %v2429 = vsub.s32 %v2426, %v2428
        %v2430 = vrot.slane %v2416, %v2429
        %v2431 = vcombine.low %v2398, %v2414
        %v2432 = vcombine.high %v2398, %v2414
        %v2434 = vunpack.c.l.s4 1934713408
        %v2435 = vunpack.c.0.s8 %v2434
        %v2436 = vlaneseq
        %v2437 = vshrl.u32 %v2436, 7
        %v2438 = vsub.s32 %v2435, %v2437
        %v2439 = vrot.slane %v2431, %v2438
        %v2441 = vunpack.c.l.s4 1934713408
        %v2442 = vunpack.c.0.s8 %v2441
        %v2443 = vlaneseq
        %v2444 = vshrl.u32 %v2443, 7
        %v2445 = vsub.s32 %v2442, %v2444
        %v2446 = vrot.slane %v2432, %v2445
        %v2447 = vcombine.high %v2423, 0.0
        %v2448 = vcombine.high %v2430, 0.0
        %v2449 = vcombine.high %v2439, 0.0
        %v2450 = vcombine.high %v2446, 0.0
        %v2451 = vcombine.low %v2362, %v2370
        %v2452 = vcombine.high %v2362, %v2370
        %v2454 = vunpack.c.l.s4 1983009808
        %v2455 = vunpack.c.0.s8 %v2454
        %v2456 = vlaneseq
        %v2457 = vshrl.u32 %v2456, 7
        %v2458 = vsub.s32 %v2455, %v2457
        %v2459 = vrot.slane %v2451, %v2458
        %v2461 = vunpack.c.l.s4 1983009808
        %v2462 = vunpack.c.0.s8 %v2461
        %v2463 = vlaneseq
        %v2464 = vshrl.u32 %v2463, 7
        %v2465 = vsub.s32 %v2462, %v2464
        %v2466 = vrot.slane %v2452, %v2465
        %v2467 = vcombine.low %v2366, %v2374
        %v2468 = vcombine.high %v2366, %v2374
        %v2470 = vunpack.c.l.s4 1983009808
        %v2471 = vunpack.c.0.s8 %v2470
        %v2472 = vlaneseq
        %v2473 = vshrl.u32 %v2472, 7
        %v2474 = vsub.s32 %v2471, %v2473
        %v2475 = vrot.slane %v2467, %v2474
        %v2477 = vunpack.c.l.s4 1983009808
        %v2478 = vunpack.c.0.s8 %v2477
        %v2479 = vlaneseq
        %v2480 = vshrl.u32 %v2479, 7
        %v2481 = vsub.s32 %v2478, %v2480
        %v2482 = vrot.slane %v2468, %v2481
        %v2483 = vcombine.low %v2459, %v2475
        %v2484 = vcombine.high %v2459, %v2475
        %v2486 = vunpack.c.l.s4 1934713408
        %v2487 = vunpack.c.0.s8 %v2486
        %v2488 = vlaneseq
        %v2489 = vshrl.u32 %v2488, 7
        %v2490 = vsub.s32 %v2487, %v2489
        %v2491 = vrot.slane %v2483, %v2490
        %v2493 = vunpack.c.l.s4 1934713408
        %v2494 = vunpack.c.0.s8 %v2493
        %v2495 = vlaneseq
        %v2496 = vshrl.u32 %v2495, 7
        %v2497 = vsub.s32 %v2494, %v2496
        %v2498 = vrot.slane %v2484, %v2497
        %v2499 = vcombine.low %v2466, %v2482
        %v2500 = vcombine.high %v2466, %v2482
        %v2502 = vunpack.c.l.s4 1934713408
        %v2503 = vunpack.c.0.s8 %v2502
        %v2504 = vlaneseq
        %v2505 = vshrl.u32 %v2504, 7
        %v2506 = vsub.s32 %v2503, %v2505
        %v2507 = vrot.slane %v2499, %v2506
        %v2509 = vunpack.c.l.s4 1934713408
        %v2510 = vunpack.c.0.s8 %v2509
        %v2511 = vlaneseq
        %v2512 = vshrl.u32 %v2511, 7
        %v2513 = vsub.s32 %v2510, %v2512
        %v2514 = vrot.slane %v2500, %v2513
        %v2515 = vcombine.high %v2491, 0.0
        %v2516 = vcombine.high %v2498, 0.0
        %v2517 = vcombine.high %v2507, 0.0
        %v2518 = vcombine.high %v2514, 0.0
        %2520 = vrot.lane.b32.xlu0 %v2447, 16
        %v2521 = vpop.permute.xlu0 %2520
        %2524 = vrot.lane.b32.xlu0 %v2430, 32
        %v2525 = vpop.permute.xlu0 %2524
        %2528 = vrot.lane.b32.xlu0 %v2448, 48
        %v2529 = vpop.permute.xlu0 %2528
        %2532 = vrot.lane.b32.xlu0 %v2439, 64
        %v2533 = vpop.permute.xlu0 %2532
        %2536 = vrot.lane.b32.xlu0 %v2449, 80
        %v2537 = vpop.permute.xlu0 %2536
        %2540 = vrot.lane.b32.xlu0 %v2446, 96
        %v2541 = vpop.permute.xlu0 %2540
        %2544 = vrot.lane.b32.xlu0 %v2450, 112
        %v2545 = vpop.permute.xlu0 %2544
        %2548 = vrot.lane.b32.xlu0 %v2515, 16
        %v2549 = vpop.permute.xlu0 %2548
        %2552 = vrot.lane.b32.xlu0 %v2498, 32
        %v2553 = vpop.permute.xlu0 %2552
        %2556 = vrot.lane.b32.xlu0 %v2516, 48
        %v2557 = vpop.permute.xlu0 %2556
        %2560 = vrot.lane.b32.xlu0 %v2507, 64
        %v2561 = vpop.permute.xlu0 %2560
        %2564 = vrot.lane.b32.xlu0 %v2517, 80
        %v2565 = vpop.permute.xlu0 %2564
        %2568 = vrot.lane.b32.xlu0 %v2514, 96
        %v2569 = vpop.permute.xlu0 %2568
        %2572 = vrot.lane.b32.xlu0 %v2518, 112
        %v2573 = vpop.permute.xlu0 %2572
        %v2575 = vsel %vm710, %v2423, %v2521
        %v2576 = vsel %vm712, %v2575, %v2525
        %v2577 = vsel %vm714, %v2576, %v2529
        %v2578 = vsel %vm716, %v2577, %v2533
        %v2579 = vsel %vm718, %v2578, %v2537
        %v2580 = vsel %vm720, %v2579, %v2541
        %v2581 = vsel %vm722, %v2580, %v2545
        %v2582 = vsel %vm710, %v2491, %v2549
        %v2583 = vsel %vm712, %v2582, %v2553
        %v2584 = vsel %vm714, %v2583, %v2557
        %v2585 = vsel %vm716, %v2584, %v2561
        %v2586 = vsel %vm718, %v2585, %v2565
        %v2587 = vsel %vm720, %v2586, %v2569
        %v2588 = vsel %vm722, %v2587, %v2573
        %v2591 = vrot.slane %v957, 4
        %v2592 = vrot.slane %v964, 4
        %v2597 = vrot.slane %v1426, 4
        %v2598 = vrot.slane %v1433, 4
        %v2603 = vrot.slane %v1886, 4
        %v2604 = vrot.slane %v1893, 4
        %v2609 = vrot.slane %v2351, 4
        %v2610 = vrot.slane %v2358, 4
        %vm2613 = vcmask 1043456
        %v2614 = vsel %vm2613, %v723, %v2591
        %v2615 = vsel %vm2613, %v730, %v2592
        %v2616 = vsel %vm2613, %v1187, %v2597
        %v2617 = vsel %vm2613, %v1194, %v2598
        %v2618 = vsel %vm2613, %v1656, %v2603
        %v2619 = vsel %vm2613, %v1663, %v2604
        %v2620 = vsel %vm2613, %v2121, %v2609
        %v2621 = vsel %vm2613, %v2128, %v2610
        %v2622 = vld [vmem:[#allocation2] sm:$0xff]
        %v2623 = vld [vmem:[%s2] sm:$0xff]
        %2625 = vset.pattern.permute.xlu0 0
        %2626 = vperm.xlu0 %2625, %v2623
        %v2627 = vpop.permute.xlu0 %2626
        %vm2629 = vcmask 293888
        %v2631 = vsel %vm2629, %v2622, 0
        %v2634 = vsel %vm2613, %v2581, 0
        %v2637 = vsel %vm2613, %v2588, 0
        %2639 = vmatprep.subr.mxu0 %v2615
        %2640 = vmatpush1.msra.mxu0 %v2614
        %2641 = vmatprep.subr.mxu0 %v2617
        %2642 = vmatpush1.msra.mxu0 %v2616
        %2643 = vmatprep.subr.mxu0 %v2619
        %2644 = vmatpush1.msra.mxu0 %v2618
        %2645 = vmatprep.subr.mxu0 %v2621
        %2646 = vmatpush1.msra.mxu0 %v2620
        %2647 = vmatprep.subr.mxu0 %v2637
        %2648 = vmatpush1.msra.mxu0 %v2634
        %2649 = vmatprep.subr.mxu0 0.0
        %2650 = vmatpush1.msra.mxu0 0.0
        %2651 = vmatprep.subr.mxu0 0.0
        %2652 = vmatpush1.msra.mxu0 0.0
        %2653 = vmatprep.subr.mxu0 0.0
        %2654 = vmatpush1.msra.mxu0 0.0
        %2655 = vmatprep.subr.mxu0 0.0
        %2656 = vmatpush1.msra.mxu0 0.0
        %2657 = vmatprep.subr.mxu0 0.0
        %2658 = vmatpush1.msra.mxu0 0.0
        %2659 = vmatprep.subr.mxu0 0.0
        %2660 = vmatpush1.msra.mxu0 0.0
        %2661 = vmatprep.subr.mxu0 0.0
        %2662 = vmatpush1.msra.mxu0 0.0
        %2663 = vmatprep.subr.mxu0 0.0
        %2664 = vmatpush1.msra.mxu0 0.0
        %2665 = vmatprep.subr.mxu0 0.0
        %2666 = vmatpush1.msra.mxu0 0.0
        %2667 = vmatprep.subr.mxu0 0.0
        %2668 = vmatpush1.msra.mxu0 0.0
        %2669 = vmatprep.subr.mxu0 0.0
        %2670 = vmatpush1.msra.mxu0 0.0
        %2671 = vmatprep.subr.mxu0 0.0
        %2672 = vmatpush1.msra.mxu0 0.0
        %2673 = vmatprep.subr.mxu0 0.0
        %2674 = vmatpush1.msra.mxu0 0.0
        %2675 = vmatprep.subr.mxu0 0.0
        %2676 = vmatpush1.msra.mxu0 0.0
        %2677 = vmatprep.subr.mxu0 0.0
        %2678 = vmatpush1.msra.mxu0 0.0
        %2679 = vmatprep.subr.mxu0 0.0
        %2680 = vmatpush1.msra.mxu0 0.0
        %2681 = vmatprep.subr.mxu0 0.0
        %2682 = vmatpush1.msra.mxu0 0.0
        %2683 = vmatprep.subr.mxu0 0.0
        %2684 = vmatpush1.msra.mxu0 0.0
        %2685 = vmatprep.subr.mxu0 0.0
        %2686 = vmatpush1.msra.mxu0 0.0
        %2687 = vmatprep.subr.mxu0 0.0
        %2688 = vmatpush1.msra.mxu0 0.0
        %2689 = vmatprep.subr.mxu0 0.0
        %2690 = vmatpush1.msra.mxu0 0.0
        %2691 = vmatprep.subr.mxu0 0.0
        %2692 = vmatpush1.msra.mxu0 0.0
        %2693 = vmatprep.subr.mxu0 0.0
        %2694 = vmatpush1.msra.mxu0 0.0
        %2695 = vmatprep.subr.mxu0 0.0
        %2696 = vmatpush1.msra.mxu0 0.0
        %2697 = vmatprep.subr.mxu0 0.0
        %2698 = vmatpush1.msra.mxu0 0.0
        %2699 = vmatprep.subr.mxu0 0.0
        %2700 = vmatpush1.msra.mxu0 0.0
        %2701 = vmatprep.subr.mxu0 0.0
        %2702 = vmatpush1.msra.mxu0 0.0
        %2703 = vmatprep.mubr.f32.mxu0 0.0
        %2704 = vmatmul.mubr.f32.gmra.mrb[0].mxu0 %v2631
        %v2705 = vpop.f32.mrb[0].mxu0
        %v2706 = vadd.f32 %v2627, %v2705
        %v2707 = vpop.f32.mrb[0].mxu0
        %v2708 = vadd.f32 %v2627, %v2707
        %2709 = vdwg.mxu0
        %v2710 = vmax.f32 %v2706, 0.0
        %v2711 = vmax.f32 %v2708, 0.0
        %2713 = vrot.lane.b32.xlu0 %v2710, 112
        %v2714 = vpop.permute.xlu0 %2713
        %2716 = vrot.lane.b32.xlu0 %v2710, 96
        %v2717 = vpop.permute.xlu0 %2716
        %2719 = vrot.lane.b32.xlu0 %v2710, 80
        %v2720 = vpop.permute.xlu0 %2719
        %2722 = vrot.lane.b32.xlu0 %v2710, 64
        %v2723 = vpop.permute.xlu0 %2722
        %2725 = vrot.lane.b32.xlu0 %v2710, 48
        %v2726 = vpop.permute.xlu0 %2725
        %2728 = vrot.lane.b32.xlu0 %v2710, 32
        %v2729 = vpop.permute.xlu0 %2728
        %2731 = vrot.lane.b32.xlu0 %v2710, 16
        %v2732 = vpop.permute.xlu0 %2731
        %2735 = vrot.lane.b32.xlu0 %v2711, 112
        %v2736 = vpop.permute.xlu0 %2735
        %2738 = vrot.lane.b32.xlu0 %v2711, 96
        %v2739 = vpop.permute.xlu0 %2738
        %2741 = vrot.lane.b32.xlu0 %v2711, 80
        %v2742 = vpop.permute.xlu0 %2741
        %2744 = vrot.lane.b32.xlu0 %v2711, 64
        %v2745 = vpop.permute.xlu0 %2744
        %2747 = vrot.lane.b32.xlu0 %v2711, 48
        %v2748 = vpop.permute.xlu0 %2747
        %2750 = vrot.lane.b32.xlu0 %v2711, 32
        %v2751 = vpop.permute.xlu0 %2750
        %2753 = vrot.lane.b32.xlu0 %v2711, 16
        %v2754 = vpop.permute.xlu0 %2753
        %v2756 = vcombine.low %v2710, %v2717
        %v2757 = vcombine.high %v2710, %v2717
        %v2759 = vunpack.c.l.s4 1983009808
        %v2760 = vunpack.c.0.s8 %v2759
        %v2761 = vlaneseq
        %v2762 = vshrl.u32 %v2761, 7
        %v2763 = vsub.s32 %v2760, %v2762
        %v2764 = vrot.slane %v2756, %v2763
        %v2766 = vunpack.c.l.s4 1983009808
        %v2767 = vunpack.c.0.s8 %v2766
        %v2768 = vlaneseq
        %v2769 = vshrl.u32 %v2768, 7
        %v2770 = vsub.s32 %v2767, %v2769
        %v2771 = vrot.slane %v2757, %v2770
        %v2772 = vcombine.low %v2714, %v2720
        %v2773 = vcombine.high %v2714, %v2720
        %v2775 = vunpack.c.l.s4 1983009808
        %v2776 = vunpack.c.0.s8 %v2775
        %v2777 = vlaneseq
        %v2778 = vshrl.u32 %v2777, 7
        %v2779 = vsub.s32 %v2776, %v2778
        %v2780 = vrot.slane %v2772, %v2779
        %v2782 = vunpack.c.l.s4 1983009808
        %v2783 = vunpack.c.0.s8 %v2782
        %v2784 = vlaneseq
        %v2785 = vshrl.u32 %v2784, 7
        %v2786 = vsub.s32 %v2783, %v2785
        %v2787 = vrot.slane %v2773, %v2786
        %v2788 = vcombine.low %v2723, %v2729
        %v2789 = vcombine.high %v2723, %v2729
        %v2791 = vunpack.c.l.s4 1983009808
        %v2792 = vunpack.c.0.s8 %v2791
        %v2793 = vlaneseq
        %v2794 = vshrl.u32 %v2793, 7
        %v2795 = vsub.s32 %v2792, %v2794
        %v2796 = vrot.slane %v2788, %v2795
        %v2798 = vunpack.c.l.s4 1983009808
        %v2799 = vunpack.c.0.s8 %v2798
        %v2800 = vlaneseq
        %v2801 = vshrl.u32 %v2800, 7
        %v2802 = vsub.s32 %v2799, %v2801
        %v2803 = vrot.slane %v2789, %v2802
        %v2804 = vcombine.low %v2726, %v2732
        %v2805 = vcombine.high %v2726, %v2732
        %v2807 = vunpack.c.l.s4 1983009808
        %v2808 = vunpack.c.0.s8 %v2807
        %v2809 = vlaneseq
        %v2810 = vshrl.u32 %v2809, 7
        %v2811 = vsub.s32 %v2808, %v2810
        %v2812 = vrot.slane %v2804, %v2811
        %v2814 = vunpack.c.l.s4 1983009808
        %v2815 = vunpack.c.0.s8 %v2814
        %v2816 = vlaneseq
        %v2817 = vshrl.u32 %v2816, 7
        %v2818 = vsub.s32 %v2815, %v2817
        %v2819 = vrot.slane %v2805, %v2818
        %v2820 = vcombine.low %v2764, %v2780
        %v2821 = vcombine.high %v2764, %v2780
        %v2823 = vunpack.c.l.s4 1934713408
        %v2824 = vunpack.c.0.s8 %v2823
        %v2825 = vlaneseq
        %v2826 = vshrl.u32 %v2825, 7
        %v2827 = vsub.s32 %v2824, %v2826
        %v2828 = vrot.slane %v2820, %v2827
        %v2830 = vunpack.c.l.s4 1934713408
        %v2831 = vunpack.c.0.s8 %v2830
        %v2832 = vlaneseq
        %v2833 = vshrl.u32 %v2832, 7
        %v2834 = vsub.s32 %v2831, %v2833
        %v2835 = vrot.slane %v2821, %v2834
        %v2836 = vcombine.low %v2771, %v2787
        %v2837 = vcombine.high %v2771, %v2787
        %v2839 = vunpack.c.l.s4 1934713408
        %v2840 = vunpack.c.0.s8 %v2839
        %v2841 = vlaneseq
        %v2842 = vshrl.u32 %v2841, 7
        %v2843 = vsub.s32 %v2840, %v2842
        %v2844 = vrot.slane %v2836, %v2843
        %v2846 = vunpack.c.l.s4 1934713408
        %v2847 = vunpack.c.0.s8 %v2846
        %v2848 = vlaneseq
        %v2849 = vshrl.u32 %v2848, 7
        %v2850 = vsub.s32 %v2847, %v2849
        %v2851 = vrot.slane %v2837, %v2850
        %v2852 = vcombine.low %v2796, %v2812
        %v2853 = vcombine.high %v2796, %v2812
        %v2855 = vunpack.c.l.s4 1934713408
        %v2856 = vunpack.c.0.s8 %v2855
        %v2857 = vlaneseq
        %v2858 = vshrl.u32 %v2857, 7
        %v2859 = vsub.s32 %v2856, %v2858
        %v2860 = vrot.slane %v2852, %v2859
        %v2862 = vunpack.c.l.s4 1934713408
        %v2863 = vunpack.c.0.s8 %v2862
        %v2864 = vlaneseq
        %v2865 = vshrl.u32 %v2864, 7
        %v2866 = vsub.s32 %v2863, %v2865
        %v2867 = vrot.slane %v2853, %v2866
        %v2868 = vcombine.low %v2803, %v2819
        %v2869 = vcombine.high %v2803, %v2819
        %v2871 = vunpack.c.l.s4 1934713408
        %v2872 = vunpack.c.0.s8 %v2871
        %v2873 = vlaneseq
        %v2874 = vshrl.u32 %v2873, 7
        %v2875 = vsub.s32 %v2872, %v2874
        %v2876 = vrot.slane %v2868, %v2875
        %v2878 = vunpack.c.l.s4 1934713408
        %v2879 = vunpack.c.0.s8 %v2878
        %v2880 = vlaneseq
        %v2881 = vshrl.u32 %v2880, 7
        %v2882 = vsub.s32 %v2879, %v2881
        %v2883 = vrot.slane %v2869, %v2882
        %v2884 = vcombine.low %v2828, %v2860
        %v2885 = vcombine.high %v2828, %v2860
        %v2886 = vcombine.low %v2835, %v2867
        %v2887 = vcombine.high %v2835, %v2867
        %v2888 = vcombine.low %v2844, %v2876
        %v2889 = vcombine.high %v2844, %v2876
        %v2890 = vcombine.low %v2851, %v2883
        %v2891 = vcombine.high %v2851, %v2883
        %v2892 = vcombine.low %v2711, %v2739
        %v2893 = vcombine.high %v2711, %v2739
        %v2895 = vunpack.c.l.s4 1983009808
        %v2896 = vunpack.c.0.s8 %v2895
        %v2897 = vlaneseq
        %v2898 = vshrl.u32 %v2897, 7
        %v2899 = vsub.s32 %v2896, %v2898
        %v2900 = vrot.slane %v2892, %v2899
        %v2902 = vunpack.c.l.s4 1983009808
        %v2903 = vunpack.c.0.s8 %v2902
        %v2904 = vlaneseq
        %v2905 = vshrl.u32 %v2904, 7
        %v2906 = vsub.s32 %v2903, %v2905
        %v2907 = vrot.slane %v2893, %v2906
        %v2908 = vcombine.low %v2736, %v2742
        %v2909 = vcombine.high %v2736, %v2742
        %v2911 = vunpack.c.l.s4 1983009808
        %v2912 = vunpack.c.0.s8 %v2911
        %v2913 = vlaneseq
        %v2914 = vshrl.u32 %v2913, 7
        %v2915 = vsub.s32 %v2912, %v2914
        %v2916 = vrot.slane %v2908, %v2915
        %v2918 = vunpack.c.l.s4 1983009808
        %v2919 = vunpack.c.0.s8 %v2918
        %v2920 = vlaneseq
        %v2921 = vshrl.u32 %v2920, 7
        %v2922 = vsub.s32 %v2919, %v2921
        %v2923 = vrot.slane %v2909, %v2922
        %v2924 = vcombine.low %v2745, %v2751
        %v2925 = vcombine.high %v2745, %v2751
        %v2927 = vunpack.c.l.s4 1983009808
        %v2928 = vunpack.c.0.s8 %v2927
        %v2929 = vlaneseq
        %v2930 = vshrl.u32 %v2929, 7
        %v2931 = vsub.s32 %v2928, %v2930
        %v2932 = vrot.slane %v2924, %v2931
        %v2934 = vunpack.c.l.s4 1983009808
        %v2935 = vunpack.c.0.s8 %v2934
        %v2936 = vlaneseq
        %v2937 = vshrl.u32 %v2936, 7
        %v2938 = vsub.s32 %v2935, %v2937
        %v2939 = vrot.slane %v2925, %v2938
        %v2940 = vcombine.low %v2748, %v2754
        %v2941 = vcombine.high %v2748, %v2754
        %v2943 = vunpack.c.l.s4 1983009808
        %v2944 = vunpack.c.0.s8 %v2943
        %v2945 = vlaneseq
        %v2946 = vshrl.u32 %v2945, 7
        %v2947 = vsub.s32 %v2944, %v2946
        %v2948 = vrot.slane %v2940, %v2947
        %v2950 = vunpack.c.l.s4 1983009808
        %v2951 = vunpack.c.0.s8 %v2950
        %v2952 = vlaneseq
        %v2953 = vshrl.u32 %v2952, 7
        %v2954 = vsub.s32 %v2951, %v2953
        %v2955 = vrot.slane %v2941, %v2954
        %v2956 = vcombine.low %v2900, %v2916
        %v2957 = vcombine.high %v2900, %v2916
        %v2959 = vunpack.c.l.s4 1934713408
        %v2960 = vunpack.c.0.s8 %v2959
        %v2961 = vlaneseq
        %v2962 = vshrl.u32 %v2961, 7
        %v2963 = vsub.s32 %v2960, %v2962
        %v2964 = vrot.slane %v2956, %v2963
        %v2966 = vunpack.c.l.s4 1934713408
        %v2967 = vunpack.c.0.s8 %v2966
        %v2968 = vlaneseq
        %v2969 = vshrl.u32 %v2968, 7
        %v2970 = vsub.s32 %v2967, %v2969
        %v2971 = vrot.slane %v2957, %v2970
        %v2972 = vcombine.low %v2907, %v2923
        %v2973 = vcombine.high %v2907, %v2923
        %v2975 = vunpack.c.l.s4 1934713408
        %v2976 = vunpack.c.0.s8 %v2975
        %v2977 = vlaneseq
        %v2978 = vshrl.u32 %v2977, 7
        %v2979 = vsub.s32 %v2976, %v2978
        %v2980 = vrot.slane %v2972, %v2979
        %v2982 = vunpack.c.l.s4 1934713408
        %v2983 = vunpack.c.0.s8 %v2982
        %v2984 = vlaneseq
        %v2985 = vshrl.u32 %v2984, 7
        %v2986 = vsub.s32 %v2983, %v2985
        %v2987 = vrot.slane %v2973, %v2986
        %v2988 = vcombine.low %v2932, %v2948
        %v2989 = vcombine.high %v2932, %v2948
        %v2991 = vunpack.c.l.s4 1934713408
        %v2992 = vunpack.c.0.s8 %v2991
        %v2993 = vlaneseq
        %v2994 = vshrl.u32 %v2993, 7
        %v2995 = vsub.s32 %v2992, %v2994
        %v2996 = vrot.slane %v2988, %v2995
        %v2998 = vunpack.c.l.s4 1934713408
        %v2999 = vunpack.c.0.s8 %v2998
        %v3000 = vlaneseq
        %v3001 = vshrl.u32 %v3000, 7
        %v3002 = vsub.s32 %v2999, %v3001
        %v3003 = vrot.slane %v2989, %v3002
        %v3004 = vcombine.low %v2939, %v2955
        %v3005 = vcombine.high %v2939, %v2955
        %v3007 = vunpack.c.l.s4 1934713408
        %v3008 = vunpack.c.0.s8 %v3007
        %v3009 = vlaneseq
        %v3010 = vshrl.u32 %v3009, 7
        %v3011 = vsub.s32 %v3008, %v3010
        %v3012 = vrot.slane %v3004, %v3011
        %v3014 = vunpack.c.l.s4 1934713408
        %v3015 = vunpack.c.0.s8 %v3014
        %v3016 = vlaneseq
        %v3017 = vshrl.u32 %v3016, 7
        %v3018 = vsub.s32 %v3015, %v3017
        %v3019 = vrot.slane %v3005, %v3018
        %v3020 = vcombine.low %v2964, %v2996
        %v3021 = vcombine.high %v2964, %v2996
        %v3022 = vcombine.low %v2971, %v3003
        %v3023 = vcombine.high %v2971, %v3003
        %v3024 = vcombine.low %v2980, %v3012
        %v3025 = vcombine.high %v2980, %v3012
        %v3026 = vcombine.low %v2987, %v3019
        %v3027 = vcombine.high %v2987, %v3019
        %3044 = vrot.lane.b32.xlu0 %v2884, 1
        %v3045 = vpop.permute.xlu0 %3044
        %3046 = vrot.lane.b32.xlu0 %v3020, 1
        %v3047 = vpop.permute.xlu0 %3046
        %3048 = vrot.lane.b32.xlu0 %v2885, 1
        %v3049 = vpop.permute.xlu0 %3048
        %3050 = vrot.lane.b32.xlu0 %v3021, 1
        %v3051 = vpop.permute.xlu0 %3050
        %3052 = vrot.lane.b32.xlu0 %v2886, 1
        %v3053 = vpop.permute.xlu0 %3052
        %3054 = vrot.lane.b32.xlu0 %v3022, 1
        %v3055 = vpop.permute.xlu0 %3054
        %3056 = vrot.lane.b32.xlu0 %v2887, 1
        %v3057 = vpop.permute.xlu0 %3056
        %3058 = vrot.lane.b32.xlu0 %v3023, 1
        %v3059 = vpop.permute.xlu0 %3058
        %3060 = vrot.lane.b32.xlu0 %v2888, 1
        %v3061 = vpop.permute.xlu0 %3060
        %3062 = vrot.lane.b32.xlu0 %v3024, 1
        %v3063 = vpop.permute.xlu0 %3062
        %3064 = vrot.lane.b32.xlu0 %v2889, 1
        %v3065 = vpop.permute.xlu0 %3064
        %3066 = vrot.lane.b32.xlu0 %v3025, 1
        %v3067 = vpop.permute.xlu0 %3066
        %3068 = vrot.lane.b32.xlu0 %v2890, 1
        %v3069 = vpop.permute.xlu0 %3068
        %3070 = vrot.lane.b32.xlu0 %v3026, 1
        %v3071 = vpop.permute.xlu0 %3070
        %3072 = vrot.lane.b32.xlu0 %v2891, 1
        %v3073 = vpop.permute.xlu0 %3072
        %3074 = vrot.lane.b32.xlu0 %v3027, 1
        %v3075 = vpop.permute.xlu0 %3074
        %v3092 = vsel %vm459, 0.0, %v3045
        %v3093 = vsel %vm459, 0.0, %v3047
        %v3094 = vsel %vm459, 0.0, %v3049
        %v3095 = vsel %vm459, 0.0, %v3051
        %v3096 = vsel %vm459, 0.0, %v3053
        %v3097 = vsel %vm459, 0.0, %v3055
        %v3098 = vsel %vm459, 0.0, %v3057
        %v3099 = vsel %vm459, 0.0, %v3059
        %v3100 = vsel %vm459, 0.0, %v3061
        %v3101 = vsel %vm459, 0.0, %v3063
        %v3102 = vsel %vm459, 0.0, %v3065
        %v3103 = vsel %vm459, 0.0, %v3067
        %v3104 = vsel %vm459, 0.0, %v3069
        %v3105 = vsel %vm459, 0.0, %v3071
        %v3106 = vsel %vm459, 0.0, %v3073
        %v3107 = vsel %vm459, 0.0, %v3075
        %v3108 = vsel %vm468, %v3092, 0.0
        %v3109 = vsel %vm468, %v3093, 0.0
        %v3110 = vsel %vm468, %v3094, 0.0
        %v3111 = vsel %vm468, %v3095, 0.0
        %v3112 = vsel %vm468, %v3096, 0.0
        %v3113 = vsel %vm468, %v3097, 0.0
        %v3114 = vsel %vm468, %v3098, 0.0
        %v3115 = vsel %vm468, %v3099, 0.0
        %v3116 = vsel %vm468, %v3100, 0.0
        %v3117 = vsel %vm468, %v3101, 0.0
        %v3118 = vsel %vm468, %v3102, 0.0
        %v3119 = vsel %vm468, %v3103, 0.0
        %v3120 = vsel %vm468, %v3104, 0.0
        %v3121 = vsel %vm468, %v3105, 0.0
        %v3122 = vsel %vm468, %v3106, 0.0
        %v3123 = vsel %vm468, %v3107, 0.0
        %v3140 = vrot.slane %v3108, 7
        %v3141 = vrot.slane %v3109, 7
        %v3142 = vsel %vm485, %v3140, %v3141
        %v3143 = vrot.slane %v3110, 7
        %v3144 = vrot.slane %v3111, 7
        %v3145 = vsel %vm485, %v3143, %v3144
        %v3146 = vrot.slane %v3112, 7
        %v3147 = vrot.slane %v3113, 7
        %v3148 = vsel %vm485, %v3146, %v3147
        %v3149 = vrot.slane %v3114, 7
        %v3150 = vrot.slane %v3115, 7
        %v3151 = vsel %vm485, %v3149, %v3150
        %v3152 = vrot.slane %v3116, 7
        %v3153 = vrot.slane %v3117, 7
        %v3154 = vsel %vm485, %v3152, %v3153
        %v3155 = vrot.slane %v3118, 7
        %v3156 = vrot.slane %v3119, 7
        %v3157 = vsel %vm485, %v3155, %v3156
        %v3158 = vrot.slane %v3120, 7
        %v3159 = vrot.slane %v3121, 7
        %v3160 = vsel %vm485, %v3158, %v3159
        %v3161 = vrot.slane %v3122, 7
        %v3162 = vrot.slane %v3123, 7
        %v3163 = vsel %vm485, %v3161, %v3162
        %v3188 = vsel %vm485, 0.0, %v3140
        %v3189 = vsel %vm485, 0.0, %v3143
        %v3190 = vsel %vm485, 0.0, %v3146
        %v3191 = vsel %vm485, 0.0, %v3149
        %v3192 = vsel %vm485, 0.0, %v3152
        %v3193 = vsel %vm485, 0.0, %v3155
        %v3194 = vsel %vm485, 0.0, %v3158
        %v3195 = vsel %vm485, 0.0, %v3161
        %v3196 = vsel %vm485, %v3141, 0.0
        %v3197 = vsel %vm485, %v3144, 0.0
        %v3198 = vsel %vm485, %v3147, 0.0
        %v3199 = vsel %vm485, %v3150, 0.0
        %v3200 = vsel %vm485, %v3153, 0.0
        %v3201 = vsel %vm485, %v3156, 0.0
        %v3202 = vsel %vm485, %v3159, 0.0
        %v3203 = vsel %vm485, %v3162, 0.0
        %v3204 = vcombine.low %v3188, %v3190
        %v3205 = vcombine.high %v3188, %v3190
        %v3207 = vunpack.c.l.s4 1983009808
        %v3208 = vunpack.c.0.s8 %v3207
        %v3209 = vlaneseq
        %v3210 = vshrl.u32 %v3209, 7
        %v3211 = vsub.s32 %v3208, %v3210
        %v3212 = vrot.slane %v3204, %v3211
        %v3214 = vunpack.c.l.s4 1983009808
        %v3215 = vunpack.c.0.s8 %v3214
        %v3216 = vlaneseq
        %v3217 = vshrl.u32 %v3216, 7
        %v3218 = vsub.s32 %v3215, %v3217
        %v3219 = vrot.slane %v3205, %v3218
        %v3220 = vcombine.low %v3189, %v3191
        %v3221 = vcombine.high %v3189, %v3191
        %v3223 = vunpack.c.l.s4 1983009808
        %v3224 = vunpack.c.0.s8 %v3223
        %v3225 = vlaneseq
        %v3226 = vshrl.u32 %v3225, 7
        %v3227 = vsub.s32 %v3224, %v3226
        %v3228 = vrot.slane %v3220, %v3227
        %v3230 = vunpack.c.l.s4 1983009808
        %v3231 = vunpack.c.0.s8 %v3230
        %v3232 = vlaneseq
        %v3233 = vshrl.u32 %v3232, 7
        %v3234 = vsub.s32 %v3231, %v3233
        %v3235 = vrot.slane %v3221, %v3234
        %v3236 = vcombine.low %v3192, %v3194
        %v3237 = vcombine.high %v3192, %v3194
        %v3239 = vunpack.c.l.s4 1983009808
        %v3240 = vunpack.c.0.s8 %v3239
        %v3241 = vlaneseq
        %v3242 = vshrl.u32 %v3241, 7
        %v3243 = vsub.s32 %v3240, %v3242
        %v3244 = vrot.slane %v3236, %v3243
        %v3246 = vunpack.c.l.s4 1983009808
        %v3247 = vunpack.c.0.s8 %v3246
        %v3248 = vlaneseq
        %v3249 = vshrl.u32 %v3248, 7
        %v3250 = vsub.s32 %v3247, %v3249
        %v3251 = vrot.slane %v3237, %v3250
        %v3252 = vcombine.low %v3193, %v3195
        %v3253 = vcombine.high %v3193, %v3195
        %v3255 = vunpack.c.l.s4 1983009808
        %v3256 = vunpack.c.0.s8 %v3255
        %v3257 = vlaneseq
        %v3258 = vshrl.u32 %v3257, 7
        %v3259 = vsub.s32 %v3256, %v3258
        %v3260 = vrot.slane %v3252, %v3259
        %v3262 = vunpack.c.l.s4 1983009808
        %v3263 = vunpack.c.0.s8 %v3262
        %v3264 = vlaneseq
        %v3265 = vshrl.u32 %v3264, 7
        %v3266 = vsub.s32 %v3263, %v3265
        %v3267 = vrot.slane %v3253, %v3266
        %v3268 = vcombine.low %v3212, %v3228
        %v3269 = vcombine.high %v3212, %v3228
        %v3271 = vunpack.c.l.s4 1934713408
        %v3272 = vunpack.c.0.s8 %v3271
        %v3273 = vlaneseq
        %v3274 = vshrl.u32 %v3273, 7
        %v3275 = vsub.s32 %v3272, %v3274
        %v3276 = vrot.slane %v3268, %v3275
        %v3278 = vunpack.c.l.s4 1934713408
        %v3279 = vunpack.c.0.s8 %v3278
        %v3280 = vlaneseq
        %v3281 = vshrl.u32 %v3280, 7
        %v3282 = vsub.s32 %v3279, %v3281
        %v3283 = vrot.slane %v3269, %v3282
        %v3284 = vcombine.low %v3219, %v3235
        %v3285 = vcombine.high %v3219, %v3235
        %v3287 = vunpack.c.l.s4 1934713408
        %v3288 = vunpack.c.0.s8 %v3287
        %v3289 = vlaneseq
        %v3290 = vshrl.u32 %v3289, 7
        %v3291 = vsub.s32 %v3288, %v3290
        %v3292 = vrot.slane %v3284, %v3291
        %v3294 = vunpack.c.l.s4 1934713408
        %v3295 = vunpack.c.0.s8 %v3294
        %v3296 = vlaneseq
        %v3297 = vshrl.u32 %v3296, 7
        %v3298 = vsub.s32 %v3295, %v3297
        %v3299 = vrot.slane %v3285, %v3298
        %v3300 = vcombine.low %v3244, %v3260
        %v3301 = vcombine.high %v3244, %v3260
        %v3303 = vunpack.c.l.s4 1934713408
        %v3304 = vunpack.c.0.s8 %v3303
        %v3305 = vlaneseq
        %v3306 = vshrl.u32 %v3305, 7
        %v3307 = vsub.s32 %v3304, %v3306
        %v3308 = vrot.slane %v3300, %v3307
        %v3310 = vunpack.c.l.s4 1934713408
        %v3311 = vunpack.c.0.s8 %v3310
        %v3312 = vlaneseq
        %v3313 = vshrl.u32 %v3312, 7
        %v3314 = vsub.s32 %v3311, %v3313
        %v3315 = vrot.slane %v3301, %v3314
        %v3316 = vcombine.low %v3251, %v3267
        %v3317 = vcombine.high %v3251, %v3267
        %v3319 = vunpack.c.l.s4 1934713408
        %v3320 = vunpack.c.0.s8 %v3319
        %v3321 = vlaneseq
        %v3322 = vshrl.u32 %v3321, 7
        %v3323 = vsub.s32 %v3320, %v3322
        %v3324 = vrot.slane %v3316, %v3323
        %v3326 = vunpack.c.l.s4 1934713408
        %v3327 = vunpack.c.0.s8 %v3326
        %v3328 = vlaneseq
        %v3329 = vshrl.u32 %v3328, 7
        %v3330 = vsub.s32 %v3327, %v3329
        %v3331 = vrot.slane %v3317, %v3330
        %v3332 = vcombine.low %v3276, %v3308
        %v3333 = vcombine.high %v3276, %v3308
        %v3334 = vcombine.low %v3283, %v3315
        %v3335 = vcombine.high %v3283, %v3315
        %v3336 = vcombine.low %v3292, %v3324
        %v3337 = vcombine.high %v3292, %v3324
        %v3338 = vcombine.low %v3299, %v3331
        %v3339 = vcombine.high %v3299, %v3331
        %v3340 = vcombine.low %v3142, %v3148
        %v3341 = vcombine.high %v3142, %v3148
        %v3343 = vunpack.c.l.s4 1983009808
        %v3344 = vunpack.c.0.s8 %v3343
        %v3345 = vlaneseq
        %v3346 = vshrl.u32 %v3345, 7
        %v3347 = vsub.s32 %v3344, %v3346
        %v3348 = vrot.slane %v3340, %v3347
        %v3350 = vunpack.c.l.s4 1983009808
        %v3351 = vunpack.c.0.s8 %v3350
        %v3352 = vlaneseq
        %v3353 = vshrl.u32 %v3352, 7
        %v3354 = vsub.s32 %v3351, %v3353
        %v3355 = vrot.slane %v3341, %v3354
        %v3356 = vcombine.low %v3145, %v3151
        %v3357 = vcombine.high %v3145, %v3151
        %v3359 = vunpack.c.l.s4 1983009808
        %v3360 = vunpack.c.0.s8 %v3359
        %v3361 = vlaneseq
        %v3362 = vshrl.u32 %v3361, 7
        %v3363 = vsub.s32 %v3360, %v3362
        %v3364 = vrot.slane %v3356, %v3363
        %v3366 = vunpack.c.l.s4 1983009808
        %v3367 = vunpack.c.0.s8 %v3366
        %v3368 = vlaneseq
        %v3369 = vshrl.u32 %v3368, 7
        %v3370 = vsub.s32 %v3367, %v3369
        %v3371 = vrot.slane %v3357, %v3370
        %v3372 = vcombine.low %v3154, %v3160
        %v3373 = vcombine.high %v3154, %v3160
        %v3375 = vunpack.c.l.s4 1983009808
        %v3376 = vunpack.c.0.s8 %v3375
        %v3377 = vlaneseq
        %v3378 = vshrl.u32 %v3377, 7
        %v3379 = vsub.s32 %v3376, %v3378
        %v3380 = vrot.slane %v3372, %v3379
        %v3382 = vunpack.c.l.s4 1983009808
        %v3383 = vunpack.c.0.s8 %v3382
        %v3384 = vlaneseq
        %v3385 = vshrl.u32 %v3384, 7
        %v3386 = vsub.s32 %v3383, %v3385
        %v3387 = vrot.slane %v3373, %v3386
        %v3388 = vcombine.low %v3157, %v3163
        %v3389 = vcombine.high %v3157, %v3163
        %v3391 = vunpack.c.l.s4 1983009808
        %v3392 = vunpack.c.0.s8 %v3391
        %v3393 = vlaneseq
        %v3394 = vshrl.u32 %v3393, 7
        %v3395 = vsub.s32 %v3392, %v3394
        %v3396 = vrot.slane %v3388, %v3395
        %v3398 = vunpack.c.l.s4 1983009808
        %v3399 = vunpack.c.0.s8 %v3398
        %v3400 = vlaneseq
        %v3401 = vshrl.u32 %v3400, 7
        %v3402 = vsub.s32 %v3399, %v3401
        %v3403 = vrot.slane %v3389, %v3402
        %v3404 = vcombine.low %v3348, %v3364
        %v3405 = vcombine.high %v3348, %v3364
        %v3407 = vunpack.c.l.s4 1934713408
        %v3408 = vunpack.c.0.s8 %v3407
        %v3409 = vlaneseq
        %v3410 = vshrl.u32 %v3409, 7
        %v3411 = vsub.s32 %v3408, %v3410
        %v3412 = vrot.slane %v3404, %v3411
        %v3414 = vunpack.c.l.s4 1934713408
        %v3415 = vunpack.c.0.s8 %v3414
        %v3416 = vlaneseq
        %v3417 = vshrl.u32 %v3416, 7
        %v3418 = vsub.s32 %v3415, %v3417
        %v3419 = vrot.slane %v3405, %v3418
        %v3420 = vcombine.low %v3355, %v3371
        %v3421 = vcombine.high %v3355, %v3371
        %v3423 = vunpack.c.l.s4 1934713408
        %v3424 = vunpack.c.0.s8 %v3423
        %v3425 = vlaneseq
        %v3426 = vshrl.u32 %v3425, 7
        %v3427 = vsub.s32 %v3424, %v3426
        %v3428 = vrot.slane %v3420, %v3427
        %v3430 = vunpack.c.l.s4 1934713408
        %v3431 = vunpack.c.0.s8 %v3430
        %v3432 = vlaneseq
        %v3433 = vshrl.u32 %v3432, 7
        %v3434 = vsub.s32 %v3431, %v3433
        %v3435 = vrot.slane %v3421, %v3434
        %v3436 = vcombine.low %v3380, %v3396
        %v3437 = vcombine.high %v3380, %v3396
        %v3439 = vunpack.c.l.s4 1934713408
        %v3440 = vunpack.c.0.s8 %v3439
        %v3441 = vlaneseq
        %v3442 = vshrl.u32 %v3441, 7
        %v3443 = vsub.s32 %v3440, %v3442
        %v3444 = vrot.slane %v3436, %v3443
        %v3446 = vunpack.c.l.s4 1934713408
        %v3447 = vunpack.c.0.s8 %v3446
        %v3448 = vlaneseq
        %v3449 = vshrl.u32 %v3448, 7
        %v3450 = vsub.s32 %v3447, %v3449
        %v3451 = vrot.slane %v3437, %v3450
        %v3452 = vcombine.low %v3387, %v3403
        %v3453 = vcombine.high %v3387, %v3403
        %v3455 = vunpack.c.l.s4 1934713408
        %v3456 = vunpack.c.0.s8 %v3455
        %v3457 = vlaneseq
        %v3458 = vshrl.u32 %v3457, 7
        %v3459 = vsub.s32 %v3456, %v3458
        %v3460 = vrot.slane %v3452, %v3459
        %v3462 = vunpack.c.l.s4 1934713408
        %v3463 = vunpack.c.0.s8 %v3462
        %v3464 = vlaneseq
        %v3465 = vshrl.u32 %v3464, 7
        %v3466 = vsub.s32 %v3463, %v3465
        %v3467 = vrot.slane %v3453, %v3466
        %v3468 = vcombine.low %v3412, %v3444
        %v3469 = vcombine.high %v3412, %v3444
        %v3470 = vcombine.low %v3419, %v3451
        %v3471 = vcombine.high %v3419, %v3451
        %v3472 = vcombine.low %v3428, %v3460
        %v3473 = vcombine.high %v3428, %v3460
        %v3474 = vcombine.low %v3435, %v3467
        %v3475 = vcombine.high %v3435, %v3467
        %3477 = vrot.lane.b32.xlu0 %v3333, 16
        %v3478 = vpop.permute.xlu0 %3477
        %3481 = vrot.lane.b32.xlu0 %v3334, 32
        %v3482 = vpop.permute.xlu0 %3481
        %3485 = vrot.lane.b32.xlu0 %v3335, 48
        %v3486 = vpop.permute.xlu0 %3485
        %3489 = vrot.lane.b32.xlu0 %v3336, 64
        %v3490 = vpop.permute.xlu0 %3489
        %3493 = vrot.lane.b32.xlu0 %v3337, 80
        %v3494 = vpop.permute.xlu0 %3493
        %3497 = vrot.lane.b32.xlu0 %v3338, 96
        %v3498 = vpop.permute.xlu0 %3497
        %3501 = vrot.lane.b32.xlu0 %v3339, 112
        %v3502 = vpop.permute.xlu0 %3501
        %3505 = vrot.lane.b32.xlu0 %v3469, 16
        %v3506 = vpop.permute.xlu0 %3505
        %3509 = vrot.lane.b32.xlu0 %v3470, 32
        %v3510 = vpop.permute.xlu0 %3509
        %3513 = vrot.lane.b32.xlu0 %v3471, 48
        %v3514 = vpop.permute.xlu0 %3513
        %3517 = vrot.lane.b32.xlu0 %v3472, 64
        %v3518 = vpop.permute.xlu0 %3517
        %3521 = vrot.lane.b32.xlu0 %v3473, 80
        %v3522 = vpop.permute.xlu0 %3521
        %3525 = vrot.lane.b32.xlu0 %v3474, 96
        %v3526 = vpop.permute.xlu0 %3525
        %3529 = vrot.lane.b32.xlu0 %v3475, 112
        %v3530 = vpop.permute.xlu0 %3529
        %v3532 = vsel %vm710, %v3332, %v3478
        %v3533 = vsel %vm712, %v3532, %v3482
        %v3534 = vsel %vm714, %v3533, %v3486
        %v3535 = vsel %vm716, %v3534, %v3490
        %v3536 = vsel %vm718, %v3535, %v3494
        %v3537 = vsel %vm720, %v3536, %v3498
        %v3538 = vsel %vm722, %v3537, %v3502
        %v3539 = vsel %vm710, %v3468, %v3506
        %v3540 = vsel %vm712, %v3539, %v3510
        %v3541 = vsel %vm714, %v3540, %v3514
        %v3542 = vsel %vm716, %v3541, %v3518
        %v3543 = vsel %vm718, %v3542, %v3522
        %v3544 = vsel %vm720, %v3543, %v3526
        %v3545 = vsel %vm722, %v3544, %v3530
        %3554 = vrot.lane.b32.xlu0 %v3188, 127
        %v3555 = vpop.permute.xlu0 %3554
        %3556 = vrot.lane.b32.xlu0 %v3142, 127
        %v3557 = vpop.permute.xlu0 %3556
        %3558 = vrot.lane.b32.xlu0 %v3189, 127
        %v3559 = vpop.permute.xlu0 %3558
        %3560 = vrot.lane.b32.xlu0 %v3145, 127
        %v3561 = vpop.permute.xlu0 %3560
        %3562 = vrot.lane.b32.xlu0 %v3190, 127
        %v3563 = vpop.permute.xlu0 %3562
        %3564 = vrot.lane.b32.xlu0 %v3148, 127
        %v3565 = vpop.permute.xlu0 %3564
        %3566 = vrot.lane.b32.xlu0 %v3191, 127
        %v3567 = vpop.permute.xlu0 %3566
        %3568 = vrot.lane.b32.xlu0 %v3151, 127
        %v3569 = vpop.permute.xlu0 %3568
        %3570 = vrot.lane.b32.xlu0 %v3192, 127
        %v3571 = vpop.permute.xlu0 %3570
        %3572 = vrot.lane.b32.xlu0 %v3154, 127
        %v3573 = vpop.permute.xlu0 %3572
        %3574 = vrot.lane.b32.xlu0 %v3193, 127
        %v3575 = vpop.permute.xlu0 %3574
        %3576 = vrot.lane.b32.xlu0 %v3157, 127
        %v3577 = vpop.permute.xlu0 %3576
        %3578 = vrot.lane.b32.xlu0 %v3194, 127
        %v3579 = vpop.permute.xlu0 %3578
        %3580 = vrot.lane.b32.xlu0 %v3160, 127
        %v3581 = vpop.permute.xlu0 %3580
        %3582 = vrot.lane.b32.xlu0 %v3195, 127
        %v3583 = vpop.permute.xlu0 %3582
        %3584 = vrot.lane.b32.xlu0 %v3163, 127
        %v3585 = vpop.permute.xlu0 %3584
        %v3602 = vcombine.low %v3555, %v3563
        %v3603 = vcombine.high %v3555, %v3563
        %v3605 = vunpack.c.l.s4 1983009808
        %v3606 = vunpack.c.0.s8 %v3605
        %v3607 = vlaneseq
        %v3608 = vshrl.u32 %v3607, 7
        %v3609 = vsub.s32 %v3606, %v3608
        %v3610 = vrot.slane %v3602, %v3609
        %v3612 = vunpack.c.l.s4 1983009808
        %v3613 = vunpack.c.0.s8 %v3612
        %v3614 = vlaneseq
        %v3615 = vshrl.u32 %v3614, 7
        %v3616 = vsub.s32 %v3613, %v3615
        %v3617 = vrot.slane %v3603, %v3616
        %v3618 = vcombine.low %v3559, %v3567
        %v3619 = vcombine.high %v3559, %v3567
        %v3621 = vunpack.c.l.s4 1983009808
        %v3622 = vunpack.c.0.s8 %v3621
        %v3623 = vlaneseq
        %v3624 = vshrl.u32 %v3623, 7
        %v3625 = vsub.s32 %v3622, %v3624
        %v3626 = vrot.slane %v3618, %v3625
        %v3628 = vunpack.c.l.s4 1983009808
        %v3629 = vunpack.c.0.s8 %v3628
        %v3630 = vlaneseq
        %v3631 = vshrl.u32 %v3630, 7
        %v3632 = vsub.s32 %v3629, %v3631
        %v3633 = vrot.slane %v3619, %v3632
        %v3634 = vcombine.low %v3571, %v3579
        %v3635 = vcombine.high %v3571, %v3579
        %v3637 = vunpack.c.l.s4 1983009808
        %v3638 = vunpack.c.0.s8 %v3637
        %v3639 = vlaneseq
        %v3640 = vshrl.u32 %v3639, 7
        %v3641 = vsub.s32 %v3638, %v3640
        %v3642 = vrot.slane %v3634, %v3641
        %v3644 = vunpack.c.l.s4 1983009808
        %v3645 = vunpack.c.0.s8 %v3644
        %v3646 = vlaneseq
        %v3647 = vshrl.u32 %v3646, 7
        %v3648 = vsub.s32 %v3645, %v3647
        %v3649 = vrot.slane %v3635, %v3648
        %v3650 = vcombine.low %v3575, %v3583
        %v3651 = vcombine.high %v3575, %v3583
        %v3653 = vunpack.c.l.s4 1983009808
        %v3654 = vunpack.c.0.s8 %v3653
        %v3655 = vlaneseq
        %v3656 = vshrl.u32 %v3655, 7
        %v3657 = vsub.s32 %v3654, %v3656
        %v3658 = vrot.slane %v3650, %v3657
        %v3660 = vunpack.c.l.s4 1983009808
        %v3661 = vunpack.c.0.s8 %v3660
        %v3662 = vlaneseq
        %v3663 = vshrl.u32 %v3662, 7
        %v3664 = vsub.s32 %v3661, %v3663
        %v3665 = vrot.slane %v3651, %v3664
        %v3666 = vcombine.low %v3610, %v3626
        %v3667 = vcombine.high %v3610, %v3626
        %v3669 = vunpack.c.l.s4 1934713408
        %v3670 = vunpack.c.0.s8 %v3669
        %v3671 = vlaneseq
        %v3672 = vshrl.u32 %v3671, 7
        %v3673 = vsub.s32 %v3670, %v3672
        %v3674 = vrot.slane %v3666, %v3673
        %v3676 = vunpack.c.l.s4 1934713408
        %v3677 = vunpack.c.0.s8 %v3676
        %v3678 = vlaneseq
        %v3679 = vshrl.u32 %v3678, 7
        %v3680 = vsub.s32 %v3677, %v3679
        %v3681 = vrot.slane %v3667, %v3680
        %v3682 = vcombine.low %v3617, %v3633
        %v3683 = vcombine.high %v3617, %v3633
        %v3685 = vunpack.c.l.s4 1934713408
        %v3686 = vunpack.c.0.s8 %v3685
        %v3687 = vlaneseq
        %v3688 = vshrl.u32 %v3687, 7
        %v3689 = vsub.s32 %v3686, %v3688
        %v3690 = vrot.slane %v3682, %v3689
        %v3692 = vunpack.c.l.s4 1934713408
        %v3693 = vunpack.c.0.s8 %v3692
        %v3694 = vlaneseq
        %v3695 = vshrl.u32 %v3694, 7
        %v3696 = vsub.s32 %v3693, %v3695
        %v3697 = vrot.slane %v3683, %v3696
        %v3698 = vcombine.low %v3642, %v3658
        %v3699 = vcombine.high %v3642, %v3658
        %v3701 = vunpack.c.l.s4 1934713408
        %v3702 = vunpack.c.0.s8 %v3701
        %v3703 = vlaneseq
        %v3704 = vshrl.u32 %v3703, 7
        %v3705 = vsub.s32 %v3702, %v3704
        %v3706 = vrot.slane %v3698, %v3705
        %v3708 = vunpack.c.l.s4 1934713408
        %v3709 = vunpack.c.0.s8 %v3708
        %v3710 = vlaneseq
        %v3711 = vshrl.u32 %v3710, 7
        %v3712 = vsub.s32 %v3709, %v3711
        %v3713 = vrot.slane %v3699, %v3712
        %v3714 = vcombine.low %v3649, %v3665
        %v3715 = vcombine.high %v3649, %v3665
        %v3717 = vunpack.c.l.s4 1934713408
        %v3718 = vunpack.c.0.s8 %v3717
        %v3719 = vlaneseq
        %v3720 = vshrl.u32 %v3719, 7
        %v3721 = vsub.s32 %v3718, %v3720
        %v3722 = vrot.slane %v3714, %v3721
        %v3724 = vunpack.c.l.s4 1934713408
        %v3725 = vunpack.c.0.s8 %v3724
        %v3726 = vlaneseq
        %v3727 = vshrl.u32 %v3726, 7
        %v3728 = vsub.s32 %v3725, %v3727
        %v3729 = vrot.slane %v3715, %v3728
        %v3730 = vcombine.low %v3674, %v3706
        %v3731 = vcombine.high %v3674, %v3706
        %v3732 = vcombine.low %v3681, %v3713
        %v3733 = vcombine.high %v3681, %v3713
        %v3734 = vcombine.low %v3690, %v3722
        %v3735 = vcombine.high %v3690, %v3722
        %v3736 = vcombine.low %v3697, %v3729
        %v3737 = vcombine.high %v3697, %v3729
        %v3738 = vcombine.low %v3557, %v3565
        %v3739 = vcombine.high %v3557, %v3565
        %v3741 = vunpack.c.l.s4 1983009808
        %v3742 = vunpack.c.0.s8 %v3741
        %v3743 = vlaneseq
        %v3744 = vshrl.u32 %v3743, 7
        %v3745 = vsub.s32 %v3742, %v3744
        %v3746 = vrot.slane %v3738, %v3745
        %v3748 = vunpack.c.l.s4 1983009808
        %v3749 = vunpack.c.0.s8 %v3748
        %v3750 = vlaneseq
        %v3751 = vshrl.u32 %v3750, 7
        %v3752 = vsub.s32 %v3749, %v3751
        %v3753 = vrot.slane %v3739, %v3752
        %v3754 = vcombine.low %v3561, %v3569
        %v3755 = vcombine.high %v3561, %v3569
        %v3757 = vunpack.c.l.s4 1983009808
        %v3758 = vunpack.c.0.s8 %v3757
        %v3759 = vlaneseq
        %v3760 = vshrl.u32 %v3759, 7
        %v3761 = vsub.s32 %v3758, %v3760
        %v3762 = vrot.slane %v3754, %v3761
        %v3764 = vunpack.c.l.s4 1983009808
        %v3765 = vunpack.c.0.s8 %v3764
        %v3766 = vlaneseq
        %v3767 = vshrl.u32 %v3766, 7
        %v3768 = vsub.s32 %v3765, %v3767
        %v3769 = vrot.slane %v3755, %v3768
        %v3770 = vcombine.low %v3573, %v3581
        %v3771 = vcombine.high %v3573, %v3581
        %v3773 = vunpack.c.l.s4 1983009808
        %v3774 = vunpack.c.0.s8 %v3773
        %v3775 = vlaneseq
        %v3776 = vshrl.u32 %v3775, 7
        %v3777 = vsub.s32 %v3774, %v3776
        %v3778 = vrot.slane %v3770, %v3777
        %v3780 = vunpack.c.l.s4 1983009808
        %v3781 = vunpack.c.0.s8 %v3780
        %v3782 = vlaneseq
        %v3783 = vshrl.u32 %v3782, 7
        %v3784 = vsub.s32 %v3781, %v3783
        %v3785 = vrot.slane %v3771, %v3784
        %v3786 = vcombine.low %v3577, %v3585
        %v3787 = vcombine.high %v3577, %v3585
        %v3789 = vunpack.c.l.s4 1983009808
        %v3790 = vunpack.c.0.s8 %v3789
        %v3791 = vlaneseq
        %v3792 = vshrl.u32 %v3791, 7
        %v3793 = vsub.s32 %v3790, %v3792
        %v3794 = vrot.slane %v3786, %v3793
        %v3796 = vunpack.c.l.s4 1983009808
        %v3797 = vunpack.c.0.s8 %v3796
        %v3798 = vlaneseq
        %v3799 = vshrl.u32 %v3798, 7
        %v3800 = vsub.s32 %v3797, %v3799
        %v3801 = vrot.slane %v3787, %v3800
        %v3802 = vcombine.low %v3746, %v3762
        %v3803 = vcombine.high %v3746, %v3762
        %v3805 = vunpack.c.l.s4 1934713408
        %v3806 = vunpack.c.0.s8 %v3805
        %v3807 = vlaneseq
        %v3808 = vshrl.u32 %v3807, 7
        %v3809 = vsub.s32 %v3806, %v3808
        %v3810 = vrot.slane %v3802, %v3809
        %v3812 = vunpack.c.l.s4 1934713408
        %v3813 = vunpack.c.0.s8 %v3812
        %v3814 = vlaneseq
        %v3815 = vshrl.u32 %v3814, 7
        %v3816 = vsub.s32 %v3813, %v3815
        %v3817 = vrot.slane %v3803, %v3816
        %v3818 = vcombine.low %v3753, %v3769
        %v3819 = vcombine.high %v3753, %v3769
        %v3821 = vunpack.c.l.s4 1934713408
        %v3822 = vunpack.c.0.s8 %v3821
        %v3823 = vlaneseq
        %v3824 = vshrl.u32 %v3823, 7
        %v3825 = vsub.s32 %v3822, %v3824
        %v3826 = vrot.slane %v3818, %v3825
        %v3828 = vunpack.c.l.s4 1934713408
        %v3829 = vunpack.c.0.s8 %v3828
        %v3830 = vlaneseq
        %v3831 = vshrl.u32 %v3830, 7
        %v3832 = vsub.s32 %v3829, %v3831
        %v3833 = vrot.slane %v3819, %v3832
        %v3834 = vcombine.low %v3778, %v3794
        %v3835 = vcombine.high %v3778, %v3794
        %v3837 = vunpack.c.l.s4 1934713408
        %v3838 = vunpack.c.0.s8 %v3837
        %v3839 = vlaneseq
        %v3840 = vshrl.u32 %v3839, 7
        %v3841 = vsub.s32 %v3838, %v3840
        %v3842 = vrot.slane %v3834, %v3841
        %v3844 = vunpack.c.l.s4 1934713408
        %v3845 = vunpack.c.0.s8 %v3844
        %v3846 = vlaneseq
        %v3847 = vshrl.u32 %v3846, 7
        %v3848 = vsub.s32 %v3845, %v3847
        %v3849 = vrot.slane %v3835, %v3848
        %v3850 = vcombine.low %v3785, %v3801
        %v3851 = vcombine.high %v3785, %v3801
        %v3853 = vunpack.c.l.s4 1934713408
        %v3854 = vunpack.c.0.s8 %v3853
        %v3855 = vlaneseq
        %v3856 = vshrl.u32 %v3855, 7
        %v3857 = vsub.s32 %v3854, %v3856
        %v3858 = vrot.slane %v3850, %v3857
        %v3860 = vunpack.c.l.s4 1934713408
        %v3861 = vunpack.c.0.s8 %v3860
        %v3862 = vlaneseq
        %v3863 = vshrl.u32 %v3862, 7
        %v3864 = vsub.s32 %v3861, %v3863
        %v3865 = vrot.slane %v3851, %v3864
        %v3866 = vcombine.low %v3810, %v3842
        %v3867 = vcombine.high %v3810, %v3842
        %v3868 = vcombine.low %v3817, %v3849
        %v3869 = vcombine.high %v3817, %v3849
        %v3870 = vcombine.low %v3826, %v3858
        %v3871 = vcombine.high %v3826, %v3858
        %v3872 = vcombine.low %v3833, %v3865
        %v3873 = vcombine.high %v3833, %v3865
        %3875 = vrot.lane.b32.xlu0 %v3731, 16
        %v3876 = vpop.permute.xlu0 %3875
        %3879 = vrot.lane.b32.xlu0 %v3732, 32
        %v3880 = vpop.permute.xlu0 %3879
        %3883 = vrot.lane.b32.xlu0 %v3733, 48
        %v3884 = vpop.permute.xlu0 %3883
        %3887 = vrot.lane.b32.xlu0 %v3734, 64
        %v3888 = vpop.permute.xlu0 %3887
        %3891 = vrot.lane.b32.xlu0 %v3735, 80
        %v3892 = vpop.permute.xlu0 %3891
        %3895 = vrot.lane.b32.xlu0 %v3736, 96
        %v3896 = vpop.permute.xlu0 %3895
        %3899 = vrot.lane.b32.xlu0 %v3737, 112
        %v3900 = vpop.permute.xlu0 %3899
        %3903 = vrot.lane.b32.xlu0 %v3867, 16
        %v3904 = vpop.permute.xlu0 %3903
        %3907 = vrot.lane.b32.xlu0 %v3868, 32
        %v3908 = vpop.permute.xlu0 %3907
        %3911 = vrot.lane.b32.xlu0 %v3869, 48
        %v3912 = vpop.permute.xlu0 %3911
        %3915 = vrot.lane.b32.xlu0 %v3870, 64
        %v3916 = vpop.permute.xlu0 %3915
        %3919 = vrot.lane.b32.xlu0 %v3871, 80
        %v3920 = vpop.permute.xlu0 %3919
        %3923 = vrot.lane.b32.xlu0 %v3872, 96
        %v3924 = vpop.permute.xlu0 %3923
        %3927 = vrot.lane.b32.xlu0 %v3873, 112
        %v3928 = vpop.permute.xlu0 %3927
        %v3930 = vsel %vm710, %v3730, %v3876
        %v3931 = vsel %vm712, %v3930, %v3880
        %v3932 = vsel %vm714, %v3931, %v3884
        %v3933 = vsel %vm716, %v3932, %v3888
        %v3934 = vsel %vm718, %v3933, %v3892
        %v3935 = vsel %vm720, %v3934, %v3896
        %v3936 = vsel %vm722, %v3935, %v3900
        %v3937 = vsel %vm710, %v3866, %v3904
        %v3938 = vsel %vm712, %v3937, %v3908
        %v3939 = vsel %vm714, %v3938, %v3912
        %v3940 = vsel %vm716, %v3939, %v3916
        %v3941 = vsel %vm718, %v3940, %v3920
        %v3942 = vsel %vm720, %v3941, %v3924
        %v3943 = vsel %vm722, %v3942, %v3928
        %3944 = vrot.lane.b32.xlu0 %v3188, 126
        %v3945 = vpop.permute.xlu0 %3944
        %3946 = vrot.lane.b32.xlu0 %v3142, 126
        %v3947 = vpop.permute.xlu0 %3946
        %3948 = vrot.lane.b32.xlu0 %v3189, 126
        %v3949 = vpop.permute.xlu0 %3948
        %3950 = vrot.lane.b32.xlu0 %v3145, 126
        %v3951 = vpop.permute.xlu0 %3950
        %3952 = vrot.lane.b32.xlu0 %v3190, 126
        %v3953 = vpop.permute.xlu0 %3952
        %3954 = vrot.lane.b32.xlu0 %v3148, 126
        %v3955 = vpop.permute.xlu0 %3954
        %3956 = vrot.lane.b32.xlu0 %v3191, 126
        %v3957 = vpop.permute.xlu0 %3956
        %3958 = vrot.lane.b32.xlu0 %v3151, 126
        %v3959 = vpop.permute.xlu0 %3958
        %3960 = vrot.lane.b32.xlu0 %v3192, 126
        %v3961 = vpop.permute.xlu0 %3960
        %3962 = vrot.lane.b32.xlu0 %v3154, 126
        %v3963 = vpop.permute.xlu0 %3962
        %3964 = vrot.lane.b32.xlu0 %v3193, 126
        %v3965 = vpop.permute.xlu0 %3964
        %3966 = vrot.lane.b32.xlu0 %v3157, 126
        %v3967 = vpop.permute.xlu0 %3966
        %3968 = vrot.lane.b32.xlu0 %v3194, 126
        %v3969 = vpop.permute.xlu0 %3968
        %3970 = vrot.lane.b32.xlu0 %v3160, 126
        %v3971 = vpop.permute.xlu0 %3970
        %3972 = vrot.lane.b32.xlu0 %v3195, 126
        %v3973 = vpop.permute.xlu0 %3972
        %3974 = vrot.lane.b32.xlu0 %v3163, 126
        %v3975 = vpop.permute.xlu0 %3974
        %v3992 = vcombine.low %v3945, %v3953
        %v3993 = vcombine.high %v3945, %v3953
        %v3995 = vunpack.c.l.s4 1983009808
        %v3996 = vunpack.c.0.s8 %v3995
        %v3997 = vlaneseq
        %v3998 = vshrl.u32 %v3997, 7
        %v3999 = vsub.s32 %v3996, %v3998
        %v4000 = vrot.slane %v3992, %v3999
        %v4002 = vunpack.c.l.s4 1983009808
        %v4003 = vunpack.c.0.s8 %v4002
        %v4004 = vlaneseq
        %v4005 = vshrl.u32 %v4004, 7
        %v4006 = vsub.s32 %v4003, %v4005
        %v4007 = vrot.slane %v3993, %v4006
        %v4008 = vcombine.low %v3949, %v3957
        %v4009 = vcombine.high %v3949, %v3957
        %v4011 = vunpack.c.l.s4 1983009808
        %v4012 = vunpack.c.0.s8 %v4011
        %v4013 = vlaneseq
        %v4014 = vshrl.u32 %v4013, 7
        %v4015 = vsub.s32 %v4012, %v4014
        %v4016 = vrot.slane %v4008, %v4015
        %v4018 = vunpack.c.l.s4 1983009808
        %v4019 = vunpack.c.0.s8 %v4018
        %v4020 = vlaneseq
        %v4021 = vshrl.u32 %v4020, 7
        %v4022 = vsub.s32 %v4019, %v4021
        %v4023 = vrot.slane %v4009, %v4022
        %v4024 = vcombine.low %v3961, %v3969
        %v4025 = vcombine.high %v3961, %v3969
        %v4027 = vunpack.c.l.s4 1983009808
        %v4028 = vunpack.c.0.s8 %v4027
        %v4029 = vlaneseq
        %v4030 = vshrl.u32 %v4029, 7
        %v4031 = vsub.s32 %v4028, %v4030
        %v4032 = vrot.slane %v4024, %v4031
        %v4034 = vunpack.c.l.s4 1983009808
        %v4035 = vunpack.c.0.s8 %v4034
        %v4036 = vlaneseq
        %v4037 = vshrl.u32 %v4036, 7
        %v4038 = vsub.s32 %v4035, %v4037
        %v4039 = vrot.slane %v4025, %v4038
        %v4040 = vcombine.low %v3965, %v3973
        %v4041 = vcombine.high %v3965, %v3973
        %v4043 = vunpack.c.l.s4 1983009808
        %v4044 = vunpack.c.0.s8 %v4043
        %v4045 = vlaneseq
        %v4046 = vshrl.u32 %v4045, 7
        %v4047 = vsub.s32 %v4044, %v4046
        %v4048 = vrot.slane %v4040, %v4047
        %v4050 = vunpack.c.l.s4 1983009808
        %v4051 = vunpack.c.0.s8 %v4050
        %v4052 = vlaneseq
        %v4053 = vshrl.u32 %v4052, 7
        %v4054 = vsub.s32 %v4051, %v4053
        %v4055 = vrot.slane %v4041, %v4054
        %v4056 = vcombine.low %v4000, %v4016
        %v4057 = vcombine.high %v4000, %v4016
        %v4059 = vunpack.c.l.s4 1934713408
        %v4060 = vunpack.c.0.s8 %v4059
        %v4061 = vlaneseq
        %v4062 = vshrl.u32 %v4061, 7
        %v4063 = vsub.s32 %v4060, %v4062
        %v4064 = vrot.slane %v4056, %v4063
        %v4066 = vunpack.c.l.s4 1934713408
        %v4067 = vunpack.c.0.s8 %v4066
        %v4068 = vlaneseq
        %v4069 = vshrl.u32 %v4068, 7
        %v4070 = vsub.s32 %v4067, %v4069
        %v4071 = vrot.slane %v4057, %v4070
        %v4072 = vcombine.low %v4007, %v4023
        %v4073 = vcombine.high %v4007, %v4023
        %v4075 = vunpack.c.l.s4 1934713408
        %v4076 = vunpack.c.0.s8 %v4075
        %v4077 = vlaneseq
        %v4078 = vshrl.u32 %v4077, 7
        %v4079 = vsub.s32 %v4076, %v4078
        %v4080 = vrot.slane %v4072, %v4079
        %v4082 = vunpack.c.l.s4 1934713408
        %v4083 = vunpack.c.0.s8 %v4082
        %v4084 = vlaneseq
        %v4085 = vshrl.u32 %v4084, 7
        %v4086 = vsub.s32 %v4083, %v4085
        %v4087 = vrot.slane %v4073, %v4086
        %v4088 = vcombine.low %v4032, %v4048
        %v4089 = vcombine.high %v4032, %v4048
        %v4091 = vunpack.c.l.s4 1934713408
        %v4092 = vunpack.c.0.s8 %v4091
        %v4093 = vlaneseq
        %v4094 = vshrl.u32 %v4093, 7
        %v4095 = vsub.s32 %v4092, %v4094
        %v4096 = vrot.slane %v4088, %v4095
        %v4098 = vunpack.c.l.s4 1934713408
        %v4099 = vunpack.c.0.s8 %v4098
        %v4100 = vlaneseq
        %v4101 = vshrl.u32 %v4100, 7
        %v4102 = vsub.s32 %v4099, %v4101
        %v4103 = vrot.slane %v4089, %v4102
        %v4104 = vcombine.low %v4039, %v4055
        %v4105 = vcombine.high %v4039, %v4055
        %v4107 = vunpack.c.l.s4 1934713408
        %v4108 = vunpack.c.0.s8 %v4107
        %v4109 = vlaneseq
        %v4110 = vshrl.u32 %v4109, 7
        %v4111 = vsub.s32 %v4108, %v4110
        %v4112 = vrot.slane %v4104, %v4111
        %v4114 = vunpack.c.l.s4 1934713408
        %v4115 = vunpack.c.0.s8 %v4114
        %v4116 = vlaneseq
        %v4117 = vshrl.u32 %v4116, 7
        %v4118 = vsub.s32 %v4115, %v4117
        %v4119 = vrot.slane %v4105, %v4118
        %v4120 = vcombine.low %v4064, %v4096
        %v4121 = vcombine.high %v4064, %v4096
        %v4122 = vcombine.low %v4071, %v4103
        %v4123 = vcombine.high %v4071, %v4103
        %v4124 = vcombine.low %v4080, %v4112
        %v4125 = vcombine.high %v4080, %v4112
        %v4126 = vcombine.low %v4087, %v4119
        %v4127 = vcombine.high %v4087, %v4119
        %v4128 = vcombine.low %v3947, %v3955
        %v4129 = vcombine.high %v3947, %v3955
        %v4131 = vunpack.c.l.s4 1983009808
        %v4132 = vunpack.c.0.s8 %v4131
        %v4133 = vlaneseq
        %v4134 = vshrl.u32 %v4133, 7
        %v4135 = vsub.s32 %v4132, %v4134
        %v4136 = vrot.slane %v4128, %v4135
        %v4138 = vunpack.c.l.s4 1983009808
        %v4139 = vunpack.c.0.s8 %v4138
        %v4140 = vlaneseq
        %v4141 = vshrl.u32 %v4140, 7
        %v4142 = vsub.s32 %v4139, %v4141
        %v4143 = vrot.slane %v4129, %v4142
        %v4144 = vcombine.low %v3951, %v3959
        %v4145 = vcombine.high %v3951, %v3959
        %v4147 = vunpack.c.l.s4 1983009808
        %v4148 = vunpack.c.0.s8 %v4147
        %v4149 = vlaneseq
        %v4150 = vshrl.u32 %v4149, 7
        %v4151 = vsub.s32 %v4148, %v4150
        %v4152 = vrot.slane %v4144, %v4151
        %v4154 = vunpack.c.l.s4 1983009808
        %v4155 = vunpack.c.0.s8 %v4154
        %v4156 = vlaneseq
        %v4157 = vshrl.u32 %v4156, 7
        %v4158 = vsub.s32 %v4155, %v4157
        %v4159 = vrot.slane %v4145, %v4158
        %v4160 = vcombine.low %v3963, %v3971
        %v4161 = vcombine.high %v3963, %v3971
        %v4163 = vunpack.c.l.s4 1983009808
        %v4164 = vunpack.c.0.s8 %v4163
        %v4165 = vlaneseq
        %v4166 = vshrl.u32 %v4165, 7
        %v4167 = vsub.s32 %v4164, %v4166
        %v4168 = vrot.slane %v4160, %v4167
        %v4170 = vunpack.c.l.s4 1983009808
        %v4171 = vunpack.c.0.s8 %v4170
        %v4172 = vlaneseq
        %v4173 = vshrl.u32 %v4172, 7
        %v4174 = vsub.s32 %v4171, %v4173
        %v4175 = vrot.slane %v4161, %v4174
        %v4176 = vcombine.low %v3967, %v3975
        %v4177 = vcombine.high %v3967, %v3975
        %v4179 = vunpack.c.l.s4 1983009808
        %v4180 = vunpack.c.0.s8 %v4179
        %v4181 = vlaneseq
        %v4182 = vshrl.u32 %v4181, 7
        %v4183 = vsub.s32 %v4180, %v4182
        %v4184 = vrot.slane %v4176, %v4183
        %v4186 = vunpack.c.l.s4 1983009808
        %v4187 = vunpack.c.0.s8 %v4186
        %v4188 = vlaneseq
        %v4189 = vshrl.u32 %v4188, 7
        %v4190 = vsub.s32 %v4187, %v4189
        %v4191 = vrot.slane %v4177, %v4190
        %v4192 = vcombine.low %v4136, %v4152
        %v4193 = vcombine.high %v4136, %v4152
        %v4195 = vunpack.c.l.s4 1934713408
        %v4196 = vunpack.c.0.s8 %v4195
        %v4197 = vlaneseq
        %v4198 = vshrl.u32 %v4197, 7
        %v4199 = vsub.s32 %v4196, %v4198
        %v4200 = vrot.slane %v4192, %v4199
        %v4202 = vunpack.c.l.s4 1934713408
        %v4203 = vunpack.c.0.s8 %v4202
        %v4204 = vlaneseq
        %v4205 = vshrl.u32 %v4204, 7
        %v4206 = vsub.s32 %v4203, %v4205
        %v4207 = vrot.slane %v4193, %v4206
        %v4208 = vcombine.low %v4143, %v4159
        %v4209 = vcombine.high %v4143, %v4159
        %v4211 = vunpack.c.l.s4 1934713408
        %v4212 = vunpack.c.0.s8 %v4211
        %v4213 = vlaneseq
        %v4214 = vshrl.u32 %v4213, 7
        %v4215 = vsub.s32 %v4212, %v4214
        %v4216 = vrot.slane %v4208, %v4215
        %v4218 = vunpack.c.l.s4 1934713408
        %v4219 = vunpack.c.0.s8 %v4218
        %v4220 = vlaneseq
        %v4221 = vshrl.u32 %v4220, 7
        %v4222 = vsub.s32 %v4219, %v4221
        %v4223 = vrot.slane %v4209, %v4222
        %v4224 = vcombine.low %v4168, %v4184
        %v4225 = vcombine.high %v4168, %v4184
        %v4227 = vunpack.c.l.s4 1934713408
        %v4228 = vunpack.c.0.s8 %v4227
        %v4229 = vlaneseq
        %v4230 = vshrl.u32 %v4229, 7
        %v4231 = vsub.s32 %v4228, %v4230
        %v4232 = vrot.slane %v4224, %v4231
        %v4234 = vunpack.c.l.s4 1934713408
        %v4235 = vunpack.c.0.s8 %v4234
        %v4236 = vlaneseq
        %v4237 = vshrl.u32 %v4236, 7
        %v4238 = vsub.s32 %v4235, %v4237
        %v4239 = vrot.slane %v4225, %v4238
        %v4240 = vcombine.low %v4175, %v4191
        %v4241 = vcombine.high %v4175, %v4191
        %v4243 = vunpack.c.l.s4 1934713408
        %v4244 = vunpack.c.0.s8 %v4243
        %v4245 = vlaneseq
        %v4246 = vshrl.u32 %v4245, 7
        %v4247 = vsub.s32 %v4244, %v4246
        %v4248 = vrot.slane %v4240, %v4247
        %v4250 = vunpack.c.l.s4 1934713408
        %v4251 = vunpack.c.0.s8 %v4250
        %v4252 = vlaneseq
        %v4253 = vshrl.u32 %v4252, 7
        %v4254 = vsub.s32 %v4251, %v4253
        %v4255 = vrot.slane %v4241, %v4254
        %v4256 = vcombine.low %v4200, %v4232
        %v4257 = vcombine.high %v4200, %v4232
        %v4258 = vcombine.low %v4207, %v4239
        %v4259 = vcombine.high %v4207, %v4239
        %v4260 = vcombine.low %v4216, %v4248
        %v4261 = vcombine.high %v4216, %v4248
        %v4262 = vcombine.low %v4223, %v4255
        %v4263 = vcombine.high %v4223, %v4255
        %4265 = vrot.lane.b32.xlu0 %v4121, 16
        %v4266 = vpop.permute.xlu0 %4265
        %4269 = vrot.lane.b32.xlu0 %v4122, 32
        %v4270 = vpop.permute.xlu0 %4269
        %4273 = vrot.lane.b32.xlu0 %v4123, 48
        %v4274 = vpop.permute.xlu0 %4273
        %4277 = vrot.lane.b32.xlu0 %v4124, 64
        %v4278 = vpop.permute.xlu0 %4277
        %4281 = vrot.lane.b32.xlu0 %v4125, 80
        %v4282 = vpop.permute.xlu0 %4281
        %4285 = vrot.lane.b32.xlu0 %v4126, 96
        %v4286 = vpop.permute.xlu0 %4285
        %4289 = vrot.lane.b32.xlu0 %v4127, 112
        %v4290 = vpop.permute.xlu0 %4289
        %4293 = vrot.lane.b32.xlu0 %v4257, 16
        %v4294 = vpop.permute.xlu0 %4293
        %4297 = vrot.lane.b32.xlu0 %v4258, 32
        %v4298 = vpop.permute.xlu0 %4297
        %4301 = vrot.lane.b32.xlu0 %v4259, 48
        %v4302 = vpop.permute.xlu0 %4301
        %4305 = vrot.lane.b32.xlu0 %v4260, 64
        %v4306 = vpop.permute.xlu0 %4305
        %4309 = vrot.lane.b32.xlu0 %v4261, 80
        %v4310 = vpop.permute.xlu0 %4309
        %4313 = vrot.lane.b32.xlu0 %v4262, 96
        %v4314 = vpop.permute.xlu0 %4313
        %4317 = vrot.lane.b32.xlu0 %v4263, 112
        %v4318 = vpop.permute.xlu0 %4317
        %v4320 = vsel %vm710, %v4120, %v4266
        %v4321 = vsel %vm712, %v4320, %v4270
        %v4322 = vsel %vm714, %v4321, %v4274
        %v4323 = vsel %vm716, %v4322, %v4278
        %v4324 = vsel %vm718, %v4323, %v4282
        %v4325 = vsel %vm720, %v4324, %v4286
        %v4326 = vsel %vm722, %v4325, %v4290
        %v4327 = vsel %vm710, %v4256, %v4294
        %v4328 = vsel %vm712, %v4327, %v4298
        %v4329 = vsel %vm714, %v4328, %v4302
        %v4330 = vsel %vm716, %v4329, %v4306
        %v4331 = vsel %vm718, %v4330, %v4310
        %v4332 = vsel %vm720, %v4331, %v4314
        %v4333 = vsel %vm722, %v4332, %v4318
        %v4342 = vrot.slane %v3188, 1
        %v4343 = vrot.slane %v3142, 1
        %v4344 = vsel %vm1199, %v4342, %v4343
        %v4345 = vrot.slane %v3196, 1
        %v4346 = vsel %vm1199, %v4343, %v4345
        %v4347 = vrot.slane %v3189, 1
        %v4348 = vrot.slane %v3145, 1
        %v4349 = vsel %vm1199, %v4347, %v4348
        %v4350 = vrot.slane %v3197, 1
        %v4351 = vsel %vm1199, %v4348, %v4350
        %v4352 = vrot.slane %v3190, 1
        %v4353 = vrot.slane %v3148, 1
        %v4354 = vsel %vm1199, %v4352, %v4353
        %v4355 = vrot.slane %v3198, 1
        %v4356 = vsel %vm1199, %v4353, %v4355
        %v4357 = vrot.slane %v3191, 1
        %v4358 = vrot.slane %v3151, 1
        %v4359 = vsel %vm1199, %v4357, %v4358
        %v4360 = vrot.slane %v3199, 1
        %v4361 = vsel %vm1199, %v4358, %v4360
        %v4362 = vrot.slane %v3192, 1
        %v4363 = vrot.slane %v3154, 1
        %v4364 = vsel %vm1199, %v4362, %v4363
        %v4365 = vrot.slane %v3200, 1
        %v4366 = vsel %vm1199, %v4363, %v4365
        %v4367 = vrot.slane %v3193, 1
        %v4368 = vrot.slane %v3157, 1
        %v4369 = vsel %vm1199, %v4367, %v4368
        %v4370 = vrot.slane %v3201, 1
        %v4371 = vsel %vm1199, %v4368, %v4370
        %v4372 = vrot.slane %v3194, 1
        %v4373 = vrot.slane %v3160, 1
        %v4374 = vsel %vm1199, %v4372, %v4373
        %v4375 = vrot.slane %v3202, 1
        %v4376 = vsel %vm1199, %v4373, %v4375
        %v4377 = vrot.slane %v3195, 1
        %v4378 = vrot.slane %v3163, 1
        %v4379 = vsel %vm1199, %v4377, %v4378
        %v4380 = vrot.slane %v3203, 1
        %v4381 = vsel %vm1199, %v4378, %v4380
        %v4398 = vcombine.low %v4344, %v4354
        %v4399 = vcombine.high %v4344, %v4354
        %v4401 = vunpack.c.l.s4 1983009808
        %v4402 = vunpack.c.0.s8 %v4401
        %v4403 = vlaneseq
        %v4404 = vshrl.u32 %v4403, 7
        %v4405 = vsub.s32 %v4402, %v4404
        %v4406 = vrot.slane %v4398, %v4405
        %v4408 = vunpack.c.l.s4 1983009808
        %v4409 = vunpack.c.0.s8 %v4408
        %v4410 = vlaneseq
        %v4411 = vshrl.u32 %v4410, 7
        %v4412 = vsub.s32 %v4409, %v4411
        %v4413 = vrot.slane %v4399, %v4412
        %v4414 = vcombine.low %v4349, %v4359
        %v4415 = vcombine.high %v4349, %v4359
        %v4417 = vunpack.c.l.s4 1983009808
        %v4418 = vunpack.c.0.s8 %v4417
        %v4419 = vlaneseq
        %v4420 = vshrl.u32 %v4419, 7
        %v4421 = vsub.s32 %v4418, %v4420
        %v4422 = vrot.slane %v4414, %v4421
        %v4424 = vunpack.c.l.s4 1983009808
        %v4425 = vunpack.c.0.s8 %v4424
        %v4426 = vlaneseq
        %v4427 = vshrl.u32 %v4426, 7
        %v4428 = vsub.s32 %v4425, %v4427
        %v4429 = vrot.slane %v4415, %v4428
        %v4430 = vcombine.low %v4364, %v4374
        %v4431 = vcombine.high %v4364, %v4374
        %v4433 = vunpack.c.l.s4 1983009808
        %v4434 = vunpack.c.0.s8 %v4433
        %v4435 = vlaneseq
        %v4436 = vshrl.u32 %v4435, 7
        %v4437 = vsub.s32 %v4434, %v4436
        %v4438 = vrot.slane %v4430, %v4437
        %v4440 = vunpack.c.l.s4 1983009808
        %v4441 = vunpack.c.0.s8 %v4440
        %v4442 = vlaneseq
        %v4443 = vshrl.u32 %v4442, 7
        %v4444 = vsub.s32 %v4441, %v4443
        %v4445 = vrot.slane %v4431, %v4444
        %v4446 = vcombine.low %v4369, %v4379
        %v4447 = vcombine.high %v4369, %v4379
        %v4449 = vunpack.c.l.s4 1983009808
        %v4450 = vunpack.c.0.s8 %v4449
        %v4451 = vlaneseq
        %v4452 = vshrl.u32 %v4451, 7
        %v4453 = vsub.s32 %v4450, %v4452
        %v4454 = vrot.slane %v4446, %v4453
        %v4456 = vunpack.c.l.s4 1983009808
        %v4457 = vunpack.c.0.s8 %v4456
        %v4458 = vlaneseq
        %v4459 = vshrl.u32 %v4458, 7
        %v4460 = vsub.s32 %v4457, %v4459
        %v4461 = vrot.slane %v4447, %v4460
        %v4462 = vcombine.low %v4406, %v4422
        %v4463 = vcombine.high %v4406, %v4422
        %v4465 = vunpack.c.l.s4 1934713408
        %v4466 = vunpack.c.0.s8 %v4465
        %v4467 = vlaneseq
        %v4468 = vshrl.u32 %v4467, 7
        %v4469 = vsub.s32 %v4466, %v4468
        %v4470 = vrot.slane %v4462, %v4469
        %v4472 = vunpack.c.l.s4 1934713408
        %v4473 = vunpack.c.0.s8 %v4472
        %v4474 = vlaneseq
        %v4475 = vshrl.u32 %v4474, 7
        %v4476 = vsub.s32 %v4473, %v4475
        %v4477 = vrot.slane %v4463, %v4476
        %v4478 = vcombine.low %v4413, %v4429
        %v4479 = vcombine.high %v4413, %v4429
        %v4481 = vunpack.c.l.s4 1934713408
        %v4482 = vunpack.c.0.s8 %v4481
        %v4483 = vlaneseq
        %v4484 = vshrl.u32 %v4483, 7
        %v4485 = vsub.s32 %v4482, %v4484
        %v4486 = vrot.slane %v4478, %v4485
        %v4488 = vunpack.c.l.s4 1934713408
        %v4489 = vunpack.c.0.s8 %v4488
        %v4490 = vlaneseq
        %v4491 = vshrl.u32 %v4490, 7
        %v4492 = vsub.s32 %v4489, %v4491
        %v4493 = vrot.slane %v4479, %v4492
        %v4494 = vcombine.low %v4438, %v4454
        %v4495 = vcombine.high %v4438, %v4454
        %v4497 = vunpack.c.l.s4 1934713408
        %v4498 = vunpack.c.0.s8 %v4497
        %v4499 = vlaneseq
        %v4500 = vshrl.u32 %v4499, 7
        %v4501 = vsub.s32 %v4498, %v4500
        %v4502 = vrot.slane %v4494, %v4501
        %v4504 = vunpack.c.l.s4 1934713408
        %v4505 = vunpack.c.0.s8 %v4504
        %v4506 = vlaneseq
        %v4507 = vshrl.u32 %v4506, 7
        %v4508 = vsub.s32 %v4505, %v4507
        %v4509 = vrot.slane %v4495, %v4508
        %v4510 = vcombine.low %v4445, %v4461
        %v4511 = vcombine.high %v4445, %v4461
        %v4513 = vunpack.c.l.s4 1934713408
        %v4514 = vunpack.c.0.s8 %v4513
        %v4515 = vlaneseq
        %v4516 = vshrl.u32 %v4515, 7
        %v4517 = vsub.s32 %v4514, %v4516
        %v4518 = vrot.slane %v4510, %v4517
        %v4520 = vunpack.c.l.s4 1934713408
        %v4521 = vunpack.c.0.s8 %v4520
        %v4522 = vlaneseq
        %v4523 = vshrl.u32 %v4522, 7
        %v4524 = vsub.s32 %v4521, %v4523
        %v4525 = vrot.slane %v4511, %v4524
        %v4526 = vcombine.low %v4470, %v4502
        %v4527 = vcombine.high %v4470, %v4502
        %v4528 = vcombine.low %v4477, %v4509
        %v4529 = vcombine.high %v4477, %v4509
        %v4530 = vcombine.low %v4486, %v4518
        %v4531 = vcombine.high %v4486, %v4518
        %v4532 = vcombine.low %v4493, %v4525
        %v4533 = vcombine.high %v4493, %v4525
        %v4534 = vcombine.low %v4346, %v4356
        %v4535 = vcombine.high %v4346, %v4356
        %v4537 = vunpack.c.l.s4 1983009808
        %v4538 = vunpack.c.0.s8 %v4537
        %v4539 = vlaneseq
        %v4540 = vshrl.u32 %v4539, 7
        %v4541 = vsub.s32 %v4538, %v4540
        %v4542 = vrot.slane %v4534, %v4541
        %v4544 = vunpack.c.l.s4 1983009808
        %v4545 = vunpack.c.0.s8 %v4544
        %v4546 = vlaneseq
        %v4547 = vshrl.u32 %v4546, 7
        %v4548 = vsub.s32 %v4545, %v4547
        %v4549 = vrot.slane %v4535, %v4548
        %v4550 = vcombine.low %v4351, %v4361
        %v4551 = vcombine.high %v4351, %v4361
        %v4553 = vunpack.c.l.s4 1983009808
        %v4554 = vunpack.c.0.s8 %v4553
        %v4555 = vlaneseq
        %v4556 = vshrl.u32 %v4555, 7
        %v4557 = vsub.s32 %v4554, %v4556
        %v4558 = vrot.slane %v4550, %v4557
        %v4560 = vunpack.c.l.s4 1983009808
        %v4561 = vunpack.c.0.s8 %v4560
        %v4562 = vlaneseq
        %v4563 = vshrl.u32 %v4562, 7
        %v4564 = vsub.s32 %v4561, %v4563
        %v4565 = vrot.slane %v4551, %v4564
        %v4566 = vcombine.low %v4366, %v4376
        %v4567 = vcombine.high %v4366, %v4376
        %v4569 = vunpack.c.l.s4 1983009808
        %v4570 = vunpack.c.0.s8 %v4569
        %v4571 = vlaneseq
        %v4572 = vshrl.u32 %v4571, 7
        %v4573 = vsub.s32 %v4570, %v4572
        %v4574 = vrot.slane %v4566, %v4573
        %v4576 = vunpack.c.l.s4 1983009808
        %v4577 = vunpack.c.0.s8 %v4576
        %v4578 = vlaneseq
        %v4579 = vshrl.u32 %v4578, 7
        %v4580 = vsub.s32 %v4577, %v4579
        %v4581 = vrot.slane %v4567, %v4580
        %v4582 = vcombine.low %v4371, %v4381
        %v4583 = vcombine.high %v4371, %v4381
        %v4585 = vunpack.c.l.s4 1983009808
        %v4586 = vunpack.c.0.s8 %v4585
        %v4587 = vlaneseq
        %v4588 = vshrl.u32 %v4587, 7
        %v4589 = vsub.s32 %v4586, %v4588
        %v4590 = vrot.slane %v4582, %v4589
        %v4592 = vunpack.c.l.s4 1983009808
        %v4593 = vunpack.c.0.s8 %v4592
        %v4594 = vlaneseq
        %v4595 = vshrl.u32 %v4594, 7
        %v4596 = vsub.s32 %v4593, %v4595
        %v4597 = vrot.slane %v4583, %v4596
        %v4598 = vcombine.low %v4542, %v4558
        %v4599 = vcombine.high %v4542, %v4558
        %v4601 = vunpack.c.l.s4 1934713408
        %v4602 = vunpack.c.0.s8 %v4601
        %v4603 = vlaneseq
        %v4604 = vshrl.u32 %v4603, 7
        %v4605 = vsub.s32 %v4602, %v4604
        %v4606 = vrot.slane %v4598, %v4605
        %v4608 = vunpack.c.l.s4 1934713408
        %v4609 = vunpack.c.0.s8 %v4608
        %v4610 = vlaneseq
        %v4611 = vshrl.u32 %v4610, 7
        %v4612 = vsub.s32 %v4609, %v4611
        %v4613 = vrot.slane %v4599, %v4612
        %v4614 = vcombine.low %v4549, %v4565
        %v4615 = vcombine.high %v4549, %v4565
        %v4617 = vunpack.c.l.s4 1934713408
        %v4618 = vunpack.c.0.s8 %v4617
        %v4619 = vlaneseq
        %v4620 = vshrl.u32 %v4619, 7
        %v4621 = vsub.s32 %v4618, %v4620
        %v4622 = vrot.slane %v4614, %v4621
        %v4624 = vunpack.c.l.s4 1934713408
        %v4625 = vunpack.c.0.s8 %v4624
        %v4626 = vlaneseq
        %v4627 = vshrl.u32 %v4626, 7
        %v4628 = vsub.s32 %v4625, %v4627
        %v4629 = vrot.slane %v4615, %v4628
        %v4630 = vcombine.low %v4574, %v4590
        %v4631 = vcombine.high %v4574, %v4590
        %v4633 = vunpack.c.l.s4 1934713408
        %v4634 = vunpack.c.0.s8 %v4633
        %v4635 = vlaneseq
        %v4636 = vshrl.u32 %v4635, 7
        %v4637 = vsub.s32 %v4634, %v4636
        %v4638 = vrot.slane %v4630, %v4637
        %v4640 = vunpack.c.l.s4 1934713408
        %v4641 = vunpack.c.0.s8 %v4640
        %v4642 = vlaneseq
        %v4643 = vshrl.u32 %v4642, 7
        %v4644 = vsub.s32 %v4641, %v4643
        %v4645 = vrot.slane %v4631, %v4644
        %v4646 = vcombine.low %v4581, %v4597
        %v4647 = vcombine.high %v4581, %v4597
        %v4649 = vunpack.c.l.s4 1934713408
        %v4650 = vunpack.c.0.s8 %v4649
        %v4651 = vlaneseq
        %v4652 = vshrl.u32 %v4651, 7
        %v4653 = vsub.s32 %v4650, %v4652
        %v4654 = vrot.slane %v4646, %v4653
        %v4656 = vunpack.c.l.s4 1934713408
        %v4657 = vunpack.c.0.s8 %v4656
        %v4658 = vlaneseq
        %v4659 = vshrl.u32 %v4658, 7
        %v4660 = vsub.s32 %v4657, %v4659
        %v4661 = vrot.slane %v4647, %v4660
        %v4662 = vcombine.low %v4606, %v4638
        %v4663 = vcombine.high %v4606, %v4638
        %v4664 = vcombine.low %v4613, %v4645
        %v4665 = vcombine.high %v4613, %v4645
        %v4666 = vcombine.low %v4622, %v4654
        %v4667 = vcombine.high %v4622, %v4654
        %v4668 = vcombine.low %v4629, %v4661
        %v4669 = vcombine.high %v4629, %v4661
        %4671 = vrot.lane.b32.xlu0 %v4527, 16
        %v4672 = vpop.permute.xlu0 %4671
        %4675 = vrot.lane.b32.xlu0 %v4528, 32
        %v4676 = vpop.permute.xlu0 %4675
        %4679 = vrot.lane.b32.xlu0 %v4529, 48
        %v4680 = vpop.permute.xlu0 %4679
        %4683 = vrot.lane.b32.xlu0 %v4530, 64
        %v4684 = vpop.permute.xlu0 %4683
        %4687 = vrot.lane.b32.xlu0 %v4531, 80
        %v4688 = vpop.permute.xlu0 %4687
        %4691 = vrot.lane.b32.xlu0 %v4532, 96
        %v4692 = vpop.permute.xlu0 %4691
        %4695 = vrot.lane.b32.xlu0 %v4533, 112
        %v4696 = vpop.permute.xlu0 %4695
        %4699 = vrot.lane.b32.xlu0 %v4663, 16
        %v4700 = vpop.permute.xlu0 %4699
        %4703 = vrot.lane.b32.xlu0 %v4664, 32
        %v4704 = vpop.permute.xlu0 %4703
        %4707 = vrot.lane.b32.xlu0 %v4665, 48
        %v4708 = vpop.permute.xlu0 %4707
        %4711 = vrot.lane.b32.xlu0 %v4666, 64
        %v4712 = vpop.permute.xlu0 %4711
        %4715 = vrot.lane.b32.xlu0 %v4667, 80
        %v4716 = vpop.permute.xlu0 %4715
        %4719 = vrot.lane.b32.xlu0 %v4668, 96
        %v4720 = vpop.permute.xlu0 %4719
        %4723 = vrot.lane.b32.xlu0 %v4669, 112
        %v4724 = vpop.permute.xlu0 %4723
        %v4726 = vsel %vm710, %v4526, %v4672
        %v4727 = vsel %vm712, %v4726, %v4676
        %v4728 = vsel %vm714, %v4727, %v4680
        %v4729 = vsel %vm716, %v4728, %v4684
        %v4730 = vsel %vm718, %v4729, %v4688
        %v4731 = vsel %vm720, %v4730, %v4692
        %v4732 = vsel %vm722, %v4731, %v4696
        %v4733 = vsel %vm710, %v4662, %v4700
        %v4734 = vsel %vm712, %v4733, %v4704
        %v4735 = vsel %vm714, %v4734, %v4708
        %v4736 = vsel %vm716, %v4735, %v4712
        %v4737 = vsel %vm718, %v4736, %v4716
        %v4738 = vsel %vm720, %v4737, %v4720
        %v4739 = vsel %vm722, %v4738, %v4724
        %4740 = vrot.lane.b32.xlu0 %v4344, 127
        %v4741 = vpop.permute.xlu0 %4740
        %4742 = vrot.lane.b32.xlu0 %v4346, 127
        %v4743 = vpop.permute.xlu0 %4742
        %4744 = vrot.lane.b32.xlu0 %v4349, 127
        %v4745 = vpop.permute.xlu0 %4744
        %4746 = vrot.lane.b32.xlu0 %v4351, 127
        %v4747 = vpop.permute.xlu0 %4746
        %4748 = vrot.lane.b32.xlu0 %v4354, 127
        %v4749 = vpop.permute.xlu0 %4748
        %4750 = vrot.lane.b32.xlu0 %v4356, 127
        %v4751 = vpop.permute.xlu0 %4750
        %4752 = vrot.lane.b32.xlu0 %v4359, 127
        %v4753 = vpop.permute.xlu0 %4752
        %4754 = vrot.lane.b32.xlu0 %v4361, 127
        %v4755 = vpop.permute.xlu0 %4754
        %4756 = vrot.lane.b32.xlu0 %v4364, 127
        %v4757 = vpop.permute.xlu0 %4756
        %4758 = vrot.lane.b32.xlu0 %v4366, 127
        %v4759 = vpop.permute.xlu0 %4758
        %4760 = vrot.lane.b32.xlu0 %v4369, 127
        %v4761 = vpop.permute.xlu0 %4760
        %4762 = vrot.lane.b32.xlu0 %v4371, 127
        %v4763 = vpop.permute.xlu0 %4762
        %4764 = vrot.lane.b32.xlu0 %v4374, 127
        %v4765 = vpop.permute.xlu0 %4764
        %4766 = vrot.lane.b32.xlu0 %v4376, 127
        %v4767 = vpop.permute.xlu0 %4766
        %4768 = vrot.lane.b32.xlu0 %v4379, 127
        %v4769 = vpop.permute.xlu0 %4768
        %4770 = vrot.lane.b32.xlu0 %v4381, 127
        %v4771 = vpop.permute.xlu0 %4770
        %v4788 = vcombine.low %v4741, %v4749
        %v4789 = vcombine.high %v4741, %v4749
        %v4791 = vunpack.c.l.s4 1983009808
        %v4792 = vunpack.c.0.s8 %v4791
        %v4793 = vlaneseq
        %v4794 = vshrl.u32 %v4793, 7
        %v4795 = vsub.s32 %v4792, %v4794
        %v4796 = vrot.slane %v4788, %v4795
        %v4798 = vunpack.c.l.s4 1983009808
        %v4799 = vunpack.c.0.s8 %v4798
        %v4800 = vlaneseq
        %v4801 = vshrl.u32 %v4800, 7
        %v4802 = vsub.s32 %v4799, %v4801
        %v4803 = vrot.slane %v4789, %v4802
        %v4804 = vcombine.low %v4745, %v4753
        %v4805 = vcombine.high %v4745, %v4753
        %v4807 = vunpack.c.l.s4 1983009808
        %v4808 = vunpack.c.0.s8 %v4807
        %v4809 = vlaneseq
        %v4810 = vshrl.u32 %v4809, 7
        %v4811 = vsub.s32 %v4808, %v4810
        %v4812 = vrot.slane %v4804, %v4811
        %v4814 = vunpack.c.l.s4 1983009808
        %v4815 = vunpack.c.0.s8 %v4814
        %v4816 = vlaneseq
        %v4817 = vshrl.u32 %v4816, 7
        %v4818 = vsub.s32 %v4815, %v4817
        %v4819 = vrot.slane %v4805, %v4818
        %v4820 = vcombine.low %v4757, %v4765
        %v4821 = vcombine.high %v4757, %v4765
        %v4823 = vunpack.c.l.s4 1983009808
        %v4824 = vunpack.c.0.s8 %v4823
        %v4825 = vlaneseq
        %v4826 = vshrl.u32 %v4825, 7
        %v4827 = vsub.s32 %v4824, %v4826
        %v4828 = vrot.slane %v4820, %v4827
        %v4830 = vunpack.c.l.s4 1983009808
        %v4831 = vunpack.c.0.s8 %v4830
        %v4832 = vlaneseq
        %v4833 = vshrl.u32 %v4832, 7
        %v4834 = vsub.s32 %v4831, %v4833
        %v4835 = vrot.slane %v4821, %v4834
        %v4836 = vcombine.low %v4761, %v4769
        %v4837 = vcombine.high %v4761, %v4769
        %v4839 = vunpack.c.l.s4 1983009808
        %v4840 = vunpack.c.0.s8 %v4839
        %v4841 = vlaneseq
        %v4842 = vshrl.u32 %v4841, 7
        %v4843 = vsub.s32 %v4840, %v4842
        %v4844 = vrot.slane %v4836, %v4843
        %v4846 = vunpack.c.l.s4 1983009808
        %v4847 = vunpack.c.0.s8 %v4846
        %v4848 = vlaneseq
        %v4849 = vshrl.u32 %v4848, 7
        %v4850 = vsub.s32 %v4847, %v4849
        %v4851 = vrot.slane %v4837, %v4850
        %v4852 = vcombine.low %v4796, %v4812
        %v4853 = vcombine.high %v4796, %v4812
        %v4855 = vunpack.c.l.s4 1934713408
        %v4856 = vunpack.c.0.s8 %v4855
        %v4857 = vlaneseq
        %v4858 = vshrl.u32 %v4857, 7
        %v4859 = vsub.s32 %v4856, %v4858
        %v4860 = vrot.slane %v4852, %v4859
        %v4862 = vunpack.c.l.s4 1934713408
        %v4863 = vunpack.c.0.s8 %v4862
        %v4864 = vlaneseq
        %v4865 = vshrl.u32 %v4864, 7
        %v4866 = vsub.s32 %v4863, %v4865
        %v4867 = vrot.slane %v4853, %v4866
        %v4868 = vcombine.low %v4803, %v4819
        %v4869 = vcombine.high %v4803, %v4819
        %v4871 = vunpack.c.l.s4 1934713408
        %v4872 = vunpack.c.0.s8 %v4871
        %v4873 = vlaneseq
        %v4874 = vshrl.u32 %v4873, 7
        %v4875 = vsub.s32 %v4872, %v4874
        %v4876 = vrot.slane %v4868, %v4875
        %v4878 = vunpack.c.l.s4 1934713408
        %v4879 = vunpack.c.0.s8 %v4878
        %v4880 = vlaneseq
        %v4881 = vshrl.u32 %v4880, 7
        %v4882 = vsub.s32 %v4879, %v4881
        %v4883 = vrot.slane %v4869, %v4882
        %v4884 = vcombine.low %v4828, %v4844
        %v4885 = vcombine.high %v4828, %v4844
        %v4887 = vunpack.c.l.s4 1934713408
        %v4888 = vunpack.c.0.s8 %v4887
        %v4889 = vlaneseq
        %v4890 = vshrl.u32 %v4889, 7
        %v4891 = vsub.s32 %v4888, %v4890
        %v4892 = vrot.slane %v4884, %v4891
        %v4894 = vunpack.c.l.s4 1934713408
        %v4895 = vunpack.c.0.s8 %v4894
        %v4896 = vlaneseq
        %v4897 = vshrl.u32 %v4896, 7
        %v4898 = vsub.s32 %v4895, %v4897
        %v4899 = vrot.slane %v4885, %v4898
        %v4900 = vcombine.low %v4835, %v4851
        %v4901 = vcombine.high %v4835, %v4851
        %v4903 = vunpack.c.l.s4 1934713408
        %v4904 = vunpack.c.0.s8 %v4903
        %v4905 = vlaneseq
        %v4906 = vshrl.u32 %v4905, 7
        %v4907 = vsub.s32 %v4904, %v4906
        %v4908 = vrot.slane %v4900, %v4907
        %v4910 = vunpack.c.l.s4 1934713408
        %v4911 = vunpack.c.0.s8 %v4910
        %v4912 = vlaneseq
        %v4913 = vshrl.u32 %v4912, 7
        %v4914 = vsub.s32 %v4911, %v4913
        %v4915 = vrot.slane %v4901, %v4914
        %v4916 = vcombine.low %v4860, %v4892
        %v4917 = vcombine.high %v4860, %v4892
        %v4918 = vcombine.low %v4867, %v4899
        %v4919 = vcombine.high %v4867, %v4899
        %v4920 = vcombine.low %v4876, %v4908
        %v4921 = vcombine.high %v4876, %v4908
        %v4922 = vcombine.low %v4883, %v4915
        %v4923 = vcombine.high %v4883, %v4915
        %v4924 = vcombine.low %v4743, %v4751
        %v4925 = vcombine.high %v4743, %v4751
        %v4927 = vunpack.c.l.s4 1983009808
        %v4928 = vunpack.c.0.s8 %v4927
        %v4929 = vlaneseq
        %v4930 = vshrl.u32 %v4929, 7
        %v4931 = vsub.s32 %v4928, %v4930
        %v4932 = vrot.slane %v4924, %v4931
        %v4934 = vunpack.c.l.s4 1983009808
        %v4935 = vunpack.c.0.s8 %v4934
        %v4936 = vlaneseq
        %v4937 = vshrl.u32 %v4936, 7
        %v4938 = vsub.s32 %v4935, %v4937
        %v4939 = vrot.slane %v4925, %v4938
        %v4940 = vcombine.low %v4747, %v4755
        %v4941 = vcombine.high %v4747, %v4755
        %v4943 = vunpack.c.l.s4 1983009808
        %v4944 = vunpack.c.0.s8 %v4943
        %v4945 = vlaneseq
        %v4946 = vshrl.u32 %v4945, 7
        %v4947 = vsub.s32 %v4944, %v4946
        %v4948 = vrot.slane %v4940, %v4947
        %v4950 = vunpack.c.l.s4 1983009808
        %v4951 = vunpack.c.0.s8 %v4950
        %v4952 = vlaneseq
        %v4953 = vshrl.u32 %v4952, 7
        %v4954 = vsub.s32 %v4951, %v4953
        %v4955 = vrot.slane %v4941, %v4954
        %v4956 = vcombine.low %v4759, %v4767
        %v4957 = vcombine.high %v4759, %v4767
        %v4959 = vunpack.c.l.s4 1983009808
        %v4960 = vunpack.c.0.s8 %v4959
        %v4961 = vlaneseq
        %v4962 = vshrl.u32 %v4961, 7
        %v4963 = vsub.s32 %v4960, %v4962
        %v4964 = vrot.slane %v4956, %v4963
        %v4966 = vunpack.c.l.s4 1983009808
        %v4967 = vunpack.c.0.s8 %v4966
        %v4968 = vlaneseq
        %v4969 = vshrl.u32 %v4968, 7
        %v4970 = vsub.s32 %v4967, %v4969
        %v4971 = vrot.slane %v4957, %v4970
        %v4972 = vcombine.low %v4763, %v4771
        %v4973 = vcombine.high %v4763, %v4771
        %v4975 = vunpack.c.l.s4 1983009808
        %v4976 = vunpack.c.0.s8 %v4975
        %v4977 = vlaneseq
        %v4978 = vshrl.u32 %v4977, 7
        %v4979 = vsub.s32 %v4976, %v4978
        %v4980 = vrot.slane %v4972, %v4979
        %v4982 = vunpack.c.l.s4 1983009808
        %v4983 = vunpack.c.0.s8 %v4982
        %v4984 = vlaneseq
        %v4985 = vshrl.u32 %v4984, 7
        %v4986 = vsub.s32 %v4983, %v4985
        %v4987 = vrot.slane %v4973, %v4986
        %v4988 = vcombine.low %v4932, %v4948
        %v4989 = vcombine.high %v4932, %v4948
        %v4991 = vunpack.c.l.s4 1934713408
        %v4992 = vunpack.c.0.s8 %v4991
        %v4993 = vlaneseq
        %v4994 = vshrl.u32 %v4993, 7
        %v4995 = vsub.s32 %v4992, %v4994
        %v4996 = vrot.slane %v4988, %v4995
        %v4998 = vunpack.c.l.s4 1934713408
        %v4999 = vunpack.c.0.s8 %v4998
        %v5000 = vlaneseq
        %v5001 = vshrl.u32 %v5000, 7
        %v5002 = vsub.s32 %v4999, %v5001
        %v5003 = vrot.slane %v4989, %v5002
        %v5004 = vcombine.low %v4939, %v4955
        %v5005 = vcombine.high %v4939, %v4955
        %v5007 = vunpack.c.l.s4 1934713408
        %v5008 = vunpack.c.0.s8 %v5007
        %v5009 = vlaneseq
        %v5010 = vshrl.u32 %v5009, 7
        %v5011 = vsub.s32 %v5008, %v5010
        %v5012 = vrot.slane %v5004, %v5011
        %v5014 = vunpack.c.l.s4 1934713408
        %v5015 = vunpack.c.0.s8 %v5014
        %v5016 = vlaneseq
        %v5017 = vshrl.u32 %v5016, 7
        %v5018 = vsub.s32 %v5015, %v5017
        %v5019 = vrot.slane %v5005, %v5018
        %v5020 = vcombine.low %v4964, %v4980
        %v5021 = vcombine.high %v4964, %v4980
        %v5023 = vunpack.c.l.s4 1934713408
        %v5024 = vunpack.c.0.s8 %v5023
        %v5025 = vlaneseq
        %v5026 = vshrl.u32 %v5025, 7
        %v5027 = vsub.s32 %v5024, %v5026
        %v5028 = vrot.slane %v5020, %v5027
        %v5030 = vunpack.c.l.s4 1934713408
        %v5031 = vunpack.c.0.s8 %v5030
        %v5032 = vlaneseq
        %v5033 = vshrl.u32 %v5032, 7
        %v5034 = vsub.s32 %v5031, %v5033
        %v5035 = vrot.slane %v5021, %v5034
        %v5036 = vcombine.low %v4971, %v4987
        %v5037 = vcombine.high %v4971, %v4987
        %v5039 = vunpack.c.l.s4 1934713408
        %v5040 = vunpack.c.0.s8 %v5039
        %v5041 = vlaneseq
        %v5042 = vshrl.u32 %v5041, 7
        %v5043 = vsub.s32 %v5040, %v5042
        %v5044 = vrot.slane %v5036, %v5043
        %v5046 = vunpack.c.l.s4 1934713408
        %v5047 = vunpack.c.0.s8 %v5046
        %v5048 = vlaneseq
        %v5049 = vshrl.u32 %v5048, 7
        %v5050 = vsub.s32 %v5047, %v5049
        %v5051 = vrot.slane %v5037, %v5050
        %v5052 = vcombine.low %v4996, %v5028
        %v5053 = vcombine.high %v4996, %v5028
        %v5054 = vcombine.low %v5003, %v5035
        %v5055 = vcombine.high %v5003, %v5035
        %v5056 = vcombine.low %v5012, %v5044
        %v5057 = vcombine.high %v5012, %v5044
        %v5058 = vcombine.low %v5019, %v5051
        %v5059 = vcombine.high %v5019, %v5051
        %5061 = vrot.lane.b32.xlu0 %v4917, 16
        %v5062 = vpop.permute.xlu0 %5061
        %5065 = vrot.lane.b32.xlu0 %v4918, 32
        %v5066 = vpop.permute.xlu0 %5065
        %5069 = vrot.lane.b32.xlu0 %v4919, 48
        %v5070 = vpop.permute.xlu0 %5069
        %5073 = vrot.lane.b32.xlu0 %v4920, 64
        %v5074 = vpop.permute.xlu0 %5073
        %5077 = vrot.lane.b32.xlu0 %v4921, 80
        %v5078 = vpop.permute.xlu0 %5077
        %5081 = vrot.lane.b32.xlu0 %v4922, 96
        %v5082 = vpop.permute.xlu0 %5081
        %5085 = vrot.lane.b32.xlu0 %v4923, 112
        %v5086 = vpop.permute.xlu0 %5085
        %5089 = vrot.lane.b32.xlu0 %v5053, 16
        %v5090 = vpop.permute.xlu0 %5089
        %5093 = vrot.lane.b32.xlu0 %v5054, 32
        %v5094 = vpop.permute.xlu0 %5093
        %5097 = vrot.lane.b32.xlu0 %v5055, 48
        %v5098 = vpop.permute.xlu0 %5097
        %5101 = vrot.lane.b32.xlu0 %v5056, 64
        %v5102 = vpop.permute.xlu0 %5101
        %5105 = vrot.lane.b32.xlu0 %v5057, 80
        %v5106 = vpop.permute.xlu0 %5105
        %5109 = vrot.lane.b32.xlu0 %v5058, 96
        %v5110 = vpop.permute.xlu0 %5109
        %5113 = vrot.lane.b32.xlu0 %v5059, 112
        %v5114 = vpop.permute.xlu0 %5113
        %v5116 = vsel %vm710, %v4916, %v5062
        %v5117 = vsel %vm712, %v5116, %v5066
        %v5118 = vsel %vm714, %v5117, %v5070
        %v5119 = vsel %vm716, %v5118, %v5074
        %v5120 = vsel %vm718, %v5119, %v5078
        %v5121 = vsel %vm720, %v5120, %v5082
        %v5122 = vsel %vm722, %v5121, %v5086
        %v5123 = vsel %vm710, %v5052, %v5090
        %v5124 = vsel %vm712, %v5123, %v5094
        %v5125 = vsel %vm714, %v5124, %v5098
        %v5126 = vsel %vm716, %v5125, %v5102
        %v5127 = vsel %vm718, %v5126, %v5106
        %v5128 = vsel %vm720, %v5127, %v5110
        %v5129 = vsel %vm722, %v5128, %v5114
        %5130 = vrot.lane.b32.xlu0 %v4344, 126
        %v5131 = vpop.permute.xlu0 %5130
        %5132 = vrot.lane.b32.xlu0 %v4346, 126
        %v5133 = vpop.permute.xlu0 %5132
        %5134 = vrot.lane.b32.xlu0 %v4349, 126
        %v5135 = vpop.permute.xlu0 %5134
        %5136 = vrot.lane.b32.xlu0 %v4351, 126
        %v5137 = vpop.permute.xlu0 %5136
        %5138 = vrot.lane.b32.xlu0 %v4354, 126
        %v5139 = vpop.permute.xlu0 %5138
        %5140 = vrot.lane.b32.xlu0 %v4356, 126
        %v5141 = vpop.permute.xlu0 %5140
        %5142 = vrot.lane.b32.xlu0 %v4359, 126
        %v5143 = vpop.permute.xlu0 %5142
        %5144 = vrot.lane.b32.xlu0 %v4361, 126
        %v5145 = vpop.permute.xlu0 %5144
        %5146 = vrot.lane.b32.xlu0 %v4364, 126
        %v5147 = vpop.permute.xlu0 %5146
        %5148 = vrot.lane.b32.xlu0 %v4366, 126
        %v5149 = vpop.permute.xlu0 %5148
        %5150 = vrot.lane.b32.xlu0 %v4369, 126
        %v5151 = vpop.permute.xlu0 %5150
        %5152 = vrot.lane.b32.xlu0 %v4371, 126
        %v5153 = vpop.permute.xlu0 %5152
        %5154 = vrot.lane.b32.xlu0 %v4374, 126
        %v5155 = vpop.permute.xlu0 %5154
        %5156 = vrot.lane.b32.xlu0 %v4376, 126
        %v5157 = vpop.permute.xlu0 %5156
        %5158 = vrot.lane.b32.xlu0 %v4379, 126
        %v5159 = vpop.permute.xlu0 %5158
        %5160 = vrot.lane.b32.xlu0 %v4381, 126
        %v5161 = vpop.permute.xlu0 %5160
        %v5178 = vcombine.low %v5131, %v5139
        %v5179 = vcombine.high %v5131, %v5139
        %v5181 = vunpack.c.l.s4 1983009808
        %v5182 = vunpack.c.0.s8 %v5181
        %v5183 = vlaneseq
        %v5184 = vshrl.u32 %v5183, 7
        %v5185 = vsub.s32 %v5182, %v5184
        %v5186 = vrot.slane %v5178, %v5185
        %v5188 = vunpack.c.l.s4 1983009808
        %v5189 = vunpack.c.0.s8 %v5188
        %v5190 = vlaneseq
        %v5191 = vshrl.u32 %v5190, 7
        %v5192 = vsub.s32 %v5189, %v5191
        %v5193 = vrot.slane %v5179, %v5192
        %v5194 = vcombine.low %v5135, %v5143
        %v5195 = vcombine.high %v5135, %v5143
        %v5197 = vunpack.c.l.s4 1983009808
        %v5198 = vunpack.c.0.s8 %v5197
        %v5199 = vlaneseq
        %v5200 = vshrl.u32 %v5199, 7
        %v5201 = vsub.s32 %v5198, %v5200
        %v5202 = vrot.slane %v5194, %v5201
        %v5204 = vunpack.c.l.s4 1983009808
        %v5205 = vunpack.c.0.s8 %v5204
        %v5206 = vlaneseq
        %v5207 = vshrl.u32 %v5206, 7
        %v5208 = vsub.s32 %v5205, %v5207
        %v5209 = vrot.slane %v5195, %v5208
        %v5210 = vcombine.low %v5147, %v5155
        %v5211 = vcombine.high %v5147, %v5155
        %v5213 = vunpack.c.l.s4 1983009808
        %v5214 = vunpack.c.0.s8 %v5213
        %v5215 = vlaneseq
        %v5216 = vshrl.u32 %v5215, 7
        %v5217 = vsub.s32 %v5214, %v5216
        %v5218 = vrot.slane %v5210, %v5217
        %v5220 = vunpack.c.l.s4 1983009808
        %v5221 = vunpack.c.0.s8 %v5220
        %v5222 = vlaneseq
        %v5223 = vshrl.u32 %v5222, 7
        %v5224 = vsub.s32 %v5221, %v5223
        %v5225 = vrot.slane %v5211, %v5224
        %v5226 = vcombine.low %v5151, %v5159
        %v5227 = vcombine.high %v5151, %v5159
        %v5229 = vunpack.c.l.s4 1983009808
        %v5230 = vunpack.c.0.s8 %v5229
        %v5231 = vlaneseq
        %v5232 = vshrl.u32 %v5231, 7
        %v5233 = vsub.s32 %v5230, %v5232
        %v5234 = vrot.slane %v5226, %v5233
        %v5236 = vunpack.c.l.s4 1983009808
        %v5237 = vunpack.c.0.s8 %v5236
        %v5238 = vlaneseq
        %v5239 = vshrl.u32 %v5238, 7
        %v5240 = vsub.s32 %v5237, %v5239
        %v5241 = vrot.slane %v5227, %v5240
        %v5242 = vcombine.low %v5186, %v5202
        %v5243 = vcombine.high %v5186, %v5202
        %v5245 = vunpack.c.l.s4 1934713408
        %v5246 = vunpack.c.0.s8 %v5245
        %v5247 = vlaneseq
        %v5248 = vshrl.u32 %v5247, 7
        %v5249 = vsub.s32 %v5246, %v5248
        %v5250 = vrot.slane %v5242, %v5249
        %v5252 = vunpack.c.l.s4 1934713408
        %v5253 = vunpack.c.0.s8 %v5252
        %v5254 = vlaneseq
        %v5255 = vshrl.u32 %v5254, 7
        %v5256 = vsub.s32 %v5253, %v5255
        %v5257 = vrot.slane %v5243, %v5256
        %v5258 = vcombine.low %v5193, %v5209
        %v5259 = vcombine.high %v5193, %v5209
        %v5261 = vunpack.c.l.s4 1934713408
        %v5262 = vunpack.c.0.s8 %v5261
        %v5263 = vlaneseq
        %v5264 = vshrl.u32 %v5263, 7
        %v5265 = vsub.s32 %v5262, %v5264
        %v5266 = vrot.slane %v5258, %v5265
        %v5268 = vunpack.c.l.s4 1934713408
        %v5269 = vunpack.c.0.s8 %v5268
        %v5270 = vlaneseq
        %v5271 = vshrl.u32 %v5270, 7
        %v5272 = vsub.s32 %v5269, %v5271
        %v5273 = vrot.slane %v5259, %v5272
        %v5274 = vcombine.low %v5218, %v5234
        %v5275 = vcombine.high %v5218, %v5234
        %v5277 = vunpack.c.l.s4 1934713408
        %v5278 = vunpack.c.0.s8 %v5277
        %v5279 = vlaneseq
        %v5280 = vshrl.u32 %v5279, 7
        %v5281 = vsub.s32 %v5278, %v5280
        %v5282 = vrot.slane %v5274, %v5281
        %v5284 = vunpack.c.l.s4 1934713408
        %v5285 = vunpack.c.0.s8 %v5284
        %v5286 = vlaneseq
        %v5287 = vshrl.u32 %v5286, 7
        %v5288 = vsub.s32 %v5285, %v5287
        %v5289 = vrot.slane %v5275, %v5288
        %v5290 = vcombine.low %v5225, %v5241
        %v5291 = vcombine.high %v5225, %v5241
        %v5293 = vunpack.c.l.s4 1934713408
        %v5294 = vunpack.c.0.s8 %v5293
        %v5295 = vlaneseq
        %v5296 = vshrl.u32 %v5295, 7
        %v5297 = vsub.s32 %v5294, %v5296
        %v5298 = vrot.slane %v5290, %v5297
        %v5300 = vunpack.c.l.s4 1934713408
        %v5301 = vunpack.c.0.s8 %v5300
        %v5302 = vlaneseq
        %v5303 = vshrl.u32 %v5302, 7
        %v5304 = vsub.s32 %v5301, %v5303
        %v5305 = vrot.slane %v5291, %v5304
        %v5306 = vcombine.low %v5250, %v5282
        %v5307 = vcombine.high %v5250, %v5282
        %v5308 = vcombine.low %v5257, %v5289
        %v5309 = vcombine.high %v5257, %v5289
        %v5310 = vcombine.low %v5266, %v5298
        %v5311 = vcombine.high %v5266, %v5298
        %v5312 = vcombine.low %v5273, %v5305
        %v5313 = vcombine.high %v5273, %v5305
        %v5314 = vcombine.low %v5133, %v5141
        %v5315 = vcombine.high %v5133, %v5141
        %v5317 = vunpack.c.l.s4 1983009808
        %v5318 = vunpack.c.0.s8 %v5317
        %v5319 = vlaneseq
        %v5320 = vshrl.u32 %v5319, 7
        %v5321 = vsub.s32 %v5318, %v5320
        %v5322 = vrot.slane %v5314, %v5321
        %v5324 = vunpack.c.l.s4 1983009808
        %v5325 = vunpack.c.0.s8 %v5324
        %v5326 = vlaneseq
        %v5327 = vshrl.u32 %v5326, 7
        %v5328 = vsub.s32 %v5325, %v5327
        %v5329 = vrot.slane %v5315, %v5328
        %v5330 = vcombine.low %v5137, %v5145
        %v5331 = vcombine.high %v5137, %v5145
        %v5333 = vunpack.c.l.s4 1983009808
        %v5334 = vunpack.c.0.s8 %v5333
        %v5335 = vlaneseq
        %v5336 = vshrl.u32 %v5335, 7
        %v5337 = vsub.s32 %v5334, %v5336
        %v5338 = vrot.slane %v5330, %v5337
        %v5340 = vunpack.c.l.s4 1983009808
        %v5341 = vunpack.c.0.s8 %v5340
        %v5342 = vlaneseq
        %v5343 = vshrl.u32 %v5342, 7
        %v5344 = vsub.s32 %v5341, %v5343
        %v5345 = vrot.slane %v5331, %v5344
        %v5346 = vcombine.low %v5149, %v5157
        %v5347 = vcombine.high %v5149, %v5157
        %v5349 = vunpack.c.l.s4 1983009808
        %v5350 = vunpack.c.0.s8 %v5349
        %v5351 = vlaneseq
        %v5352 = vshrl.u32 %v5351, 7
        %v5353 = vsub.s32 %v5350, %v5352
        %v5354 = vrot.slane %v5346, %v5353
        %v5356 = vunpack.c.l.s4 1983009808
        %v5357 = vunpack.c.0.s8 %v5356
        %v5358 = vlaneseq
        %v5359 = vshrl.u32 %v5358, 7
        %v5360 = vsub.s32 %v5357, %v5359
        %v5361 = vrot.slane %v5347, %v5360
        %v5362 = vcombine.low %v5153, %v5161
        %v5363 = vcombine.high %v5153, %v5161
        %v5365 = vunpack.c.l.s4 1983009808
        %v5366 = vunpack.c.0.s8 %v5365
        %v5367 = vlaneseq
        %v5368 = vshrl.u32 %v5367, 7
        %v5369 = vsub.s32 %v5366, %v5368
        %v5370 = vrot.slane %v5362, %v5369
        %v5372 = vunpack.c.l.s4 1983009808
        %v5373 = vunpack.c.0.s8 %v5372
        %v5374 = vlaneseq
        %v5375 = vshrl.u32 %v5374, 7
        %v5376 = vsub.s32 %v5373, %v5375
        %v5377 = vrot.slane %v5363, %v5376
        %v5378 = vcombine.low %v5322, %v5338
        %v5379 = vcombine.high %v5322, %v5338
        %v5381 = vunpack.c.l.s4 1934713408
        %v5382 = vunpack.c.0.s8 %v5381
        %v5383 = vlaneseq
        %v5384 = vshrl.u32 %v5383, 7
        %v5385 = vsub.s32 %v5382, %v5384
        %v5386 = vrot.slane %v5378, %v5385
        %v5388 = vunpack.c.l.s4 1934713408
        %v5389 = vunpack.c.0.s8 %v5388
        %v5390 = vlaneseq
        %v5391 = vshrl.u32 %v5390, 7
        %v5392 = vsub.s32 %v5389, %v5391
        %v5393 = vrot.slane %v5379, %v5392
        %v5394 = vcombine.low %v5329, %v5345
        %v5395 = vcombine.high %v5329, %v5345
        %v5397 = vunpack.c.l.s4 1934713408
        %v5398 = vunpack.c.0.s8 %v5397
        %v5399 = vlaneseq
        %v5400 = vshrl.u32 %v5399, 7
        %v5401 = vsub.s32 %v5398, %v5400
        %v5402 = vrot.slane %v5394, %v5401
        %v5404 = vunpack.c.l.s4 1934713408
        %v5405 = vunpack.c.0.s8 %v5404
        %v5406 = vlaneseq
        %v5407 = vshrl.u32 %v5406, 7
        %v5408 = vsub.s32 %v5405, %v5407
        %v5409 = vrot.slane %v5395, %v5408
        %v5410 = vcombine.low %v5354, %v5370
        %v5411 = vcombine.high %v5354, %v5370
        %v5413 = vunpack.c.l.s4 1934713408
        %v5414 = vunpack.c.0.s8 %v5413
        %v5415 = vlaneseq
        %v5416 = vshrl.u32 %v5415, 7
        %v5417 = vsub.s32 %v5414, %v5416
        %v5418 = vrot.slane %v5410, %v5417
        %v5420 = vunpack.c.l.s4 1934713408
        %v5421 = vunpack.c.0.s8 %v5420
        %v5422 = vlaneseq
        %v5423 = vshrl.u32 %v5422, 7
        %v5424 = vsub.s32 %v5421, %v5423
        %v5425 = vrot.slane %v5411, %v5424
        %v5426 = vcombine.low %v5361, %v5377
        %v5427 = vcombine.high %v5361, %v5377
        %v5429 = vunpack.c.l.s4 1934713408
        %v5430 = vunpack.c.0.s8 %v5429
        %v5431 = vlaneseq
        %v5432 = vshrl.u32 %v5431, 7
        %v5433 = vsub.s32 %v5430, %v5432
        %v5434 = vrot.slane %v5426, %v5433
        %v5436 = vunpack.c.l.s4 1934713408
        %v5437 = vunpack.c.0.s8 %v5436
        %v5438 = vlaneseq
        %v5439 = vshrl.u32 %v5438, 7
        %v5440 = vsub.s32 %v5437, %v5439
        %v5441 = vrot.slane %v5427, %v5440
        %v5442 = vcombine.low %v5386, %v5418
        %v5443 = vcombine.high %v5386, %v5418
        %v5444 = vcombine.low %v5393, %v5425
        %v5445 = vcombine.high %v5393, %v5425
        %v5446 = vcombine.low %v5402, %v5434
        %v5447 = vcombine.high %v5402, %v5434
        %v5448 = vcombine.low %v5409, %v5441
        %v5449 = vcombine.high %v5409, %v5441
        %5451 = vrot.lane.b32.xlu0 %v5307, 16
        %v5452 = vpop.permute.xlu0 %5451
        %5455 = vrot.lane.b32.xlu0 %v5308, 32
        %v5456 = vpop.permute.xlu0 %5455
        %5459 = vrot.lane.b32.xlu0 %v5309, 48
        %v5460 = vpop.permute.xlu0 %5459
        %5463 = vrot.lane.b32.xlu0 %v5310, 64
        %v5464 = vpop.permute.xlu0 %5463
        %5467 = vrot.lane.b32.xlu0 %v5311, 80
        %v5468 = vpop.permute.xlu0 %5467
        %5471 = vrot.lane.b32.xlu0 %v5312, 96
        %v5472 = vpop.permute.xlu0 %5471
        %5475 = vrot.lane.b32.xlu0 %v5313, 112
        %v5476 = vpop.permute.xlu0 %5475
        %5479 = vrot.lane.b32.xlu0 %v5443, 16
        %v5480 = vpop.permute.xlu0 %5479
        %5483 = vrot.lane.b32.xlu0 %v5444, 32
        %v5484 = vpop.permute.xlu0 %5483
        %5487 = vrot.lane.b32.xlu0 %v5445, 48
        %v5488 = vpop.permute.xlu0 %5487
        %5491 = vrot.lane.b32.xlu0 %v5446, 64
        %v5492 = vpop.permute.xlu0 %5491
        %5495 = vrot.lane.b32.xlu0 %v5447, 80
        %v5496 = vpop.permute.xlu0 %5495
        %5499 = vrot.lane.b32.xlu0 %v5448, 96
        %v5500 = vpop.permute.xlu0 %5499
        %5503 = vrot.lane.b32.xlu0 %v5449, 112
        %v5504 = vpop.permute.xlu0 %5503
        %v5506 = vsel %vm710, %v5306, %v5452
        %v5507 = vsel %vm712, %v5506, %v5456
        %v5508 = vsel %vm714, %v5507, %v5460
        %v5509 = vsel %vm716, %v5508, %v5464
        %v5510 = vsel %vm718, %v5509, %v5468
        %v5511 = vsel %vm720, %v5510, %v5472
        %v5512 = vsel %vm722, %v5511, %v5476
        %v5513 = vsel %vm710, %v5442, %v5480
        %v5514 = vsel %vm712, %v5513, %v5484
        %v5515 = vsel %vm714, %v5514, %v5488
        %v5516 = vsel %vm716, %v5515, %v5492
        %v5517 = vsel %vm718, %v5516, %v5496
        %v5518 = vsel %vm720, %v5517, %v5500
        %v5519 = vsel %vm722, %v5518, %v5504
        %v5520 = vrot.slane %v3188, 2
        %v5521 = vrot.slane %v3142, 2
        %v5522 = vsel %vm1894, %v5520, %v5521
        %v5523 = vrot.slane %v3196, 2
        %v5524 = vsel %vm1894, %v5521, %v5523
        %v5525 = vrot.slane %v3189, 2
        %v5526 = vrot.slane %v3145, 2
        %v5527 = vsel %vm1894, %v5525, %v5526
        %v5528 = vrot.slane %v3197, 2
        %v5529 = vsel %vm1894, %v5526, %v5528
        %v5530 = vrot.slane %v3190, 2
        %v5531 = vrot.slane %v3148, 2
        %v5532 = vsel %vm1894, %v5530, %v5531
        %v5533 = vrot.slane %v3198, 2
        %v5534 = vsel %vm1894, %v5531, %v5533
        %v5535 = vrot.slane %v3191, 2
        %v5536 = vrot.slane %v3151, 2
        %v5537 = vsel %vm1894, %v5535, %v5536
        %v5538 = vrot.slane %v3199, 2
        %v5539 = vsel %vm1894, %v5536, %v5538
        %v5540 = vrot.slane %v3192, 2
        %v5541 = vrot.slane %v3154, 2
        %v5542 = vsel %vm1894, %v5540, %v5541
        %v5543 = vrot.slane %v3200, 2
        %v5544 = vsel %vm1894, %v5541, %v5543
        %v5545 = vrot.slane %v3193, 2
        %v5546 = vrot.slane %v3157, 2
        %v5547 = vsel %vm1894, %v5545, %v5546
        %v5548 = vrot.slane %v3201, 2
        %v5549 = vsel %vm1894, %v5546, %v5548
        %v5550 = vrot.slane %v3194, 2
        %v5551 = vrot.slane %v3160, 2
        %v5552 = vsel %vm1894, %v5550, %v5551
        %v5553 = vrot.slane %v3202, 2
        %v5554 = vsel %vm1894, %v5551, %v5553
        %v5555 = vrot.slane %v3195, 2
        %v5556 = vrot.slane %v3163, 2
        %v5557 = vsel %vm1894, %v5555, %v5556
        %v5558 = vrot.slane %v3203, 2
        %v5559 = vsel %vm1894, %v5556, %v5558
        %v5576 = vcombine.low %v5522, %v5532
        %v5577 = vcombine.high %v5522, %v5532
        %v5579 = vunpack.c.l.s4 1983009808
        %v5580 = vunpack.c.0.s8 %v5579
        %v5581 = vlaneseq
        %v5582 = vshrl.u32 %v5581, 7
        %v5583 = vsub.s32 %v5580, %v5582
        %v5584 = vrot.slane %v5576, %v5583
        %v5586 = vunpack.c.l.s4 1983009808
        %v5587 = vunpack.c.0.s8 %v5586
        %v5588 = vlaneseq
        %v5589 = vshrl.u32 %v5588, 7
        %v5590 = vsub.s32 %v5587, %v5589
        %v5591 = vrot.slane %v5577, %v5590
        %v5592 = vcombine.low %v5527, %v5537
        %v5593 = vcombine.high %v5527, %v5537
        %v5595 = vunpack.c.l.s4 1983009808
        %v5596 = vunpack.c.0.s8 %v5595
        %v5597 = vlaneseq
        %v5598 = vshrl.u32 %v5597, 7
        %v5599 = vsub.s32 %v5596, %v5598
        %v5600 = vrot.slane %v5592, %v5599
        %v5602 = vunpack.c.l.s4 1983009808
        %v5603 = vunpack.c.0.s8 %v5602
        %v5604 = vlaneseq
        %v5605 = vshrl.u32 %v5604, 7
        %v5606 = vsub.s32 %v5603, %v5605
        %v5607 = vrot.slane %v5593, %v5606
        %v5608 = vcombine.low %v5542, %v5552
        %v5609 = vcombine.high %v5542, %v5552
        %v5611 = vunpack.c.l.s4 1983009808
        %v5612 = vunpack.c.0.s8 %v5611
        %v5613 = vlaneseq
        %v5614 = vshrl.u32 %v5613, 7
        %v5615 = vsub.s32 %v5612, %v5614
        %v5616 = vrot.slane %v5608, %v5615
        %v5618 = vunpack.c.l.s4 1983009808
        %v5619 = vunpack.c.0.s8 %v5618
        %v5620 = vlaneseq
        %v5621 = vshrl.u32 %v5620, 7
        %v5622 = vsub.s32 %v5619, %v5621
        %v5623 = vrot.slane %v5609, %v5622
        %v5624 = vcombine.low %v5547, %v5557
        %v5625 = vcombine.high %v5547, %v5557
        %v5627 = vunpack.c.l.s4 1983009808
        %v5628 = vunpack.c.0.s8 %v5627
        %v5629 = vlaneseq
        %v5630 = vshrl.u32 %v5629, 7
        %v5631 = vsub.s32 %v5628, %v5630
        %v5632 = vrot.slane %v5624, %v5631
        %v5634 = vunpack.c.l.s4 1983009808
        %v5635 = vunpack.c.0.s8 %v5634
        %v5636 = vlaneseq
        %v5637 = vshrl.u32 %v5636, 7
        %v5638 = vsub.s32 %v5635, %v5637
        %v5639 = vrot.slane %v5625, %v5638
        %v5640 = vcombine.low %v5584, %v5600
        %v5641 = vcombine.high %v5584, %v5600
        %v5643 = vunpack.c.l.s4 1934713408
        %v5644 = vunpack.c.0.s8 %v5643
        %v5645 = vlaneseq
        %v5646 = vshrl.u32 %v5645, 7
        %v5647 = vsub.s32 %v5644, %v5646
        %v5648 = vrot.slane %v5640, %v5647
        %v5650 = vunpack.c.l.s4 1934713408
        %v5651 = vunpack.c.0.s8 %v5650
        %v5652 = vlaneseq
        %v5653 = vshrl.u32 %v5652, 7
        %v5654 = vsub.s32 %v5651, %v5653
        %v5655 = vrot.slane %v5641, %v5654
        %v5656 = vcombine.low %v5591, %v5607
        %v5657 = vcombine.high %v5591, %v5607
        %v5659 = vunpack.c.l.s4 1934713408
        %v5660 = vunpack.c.0.s8 %v5659
        %v5661 = vlaneseq
        %v5662 = vshrl.u32 %v5661, 7
        %v5663 = vsub.s32 %v5660, %v5662
        %v5664 = vrot.slane %v5656, %v5663
        %v5666 = vunpack.c.l.s4 1934713408
        %v5667 = vunpack.c.0.s8 %v5666
        %v5668 = vlaneseq
        %v5669 = vshrl.u32 %v5668, 7
        %v5670 = vsub.s32 %v5667, %v5669
        %v5671 = vrot.slane %v5657, %v5670
        %v5672 = vcombine.low %v5616, %v5632
        %v5673 = vcombine.high %v5616, %v5632
        %v5675 = vunpack.c.l.s4 1934713408
        %v5676 = vunpack.c.0.s8 %v5675
        %v5677 = vlaneseq
        %v5678 = vshrl.u32 %v5677, 7
        %v5679 = vsub.s32 %v5676, %v5678
        %v5680 = vrot.slane %v5672, %v5679
        %v5682 = vunpack.c.l.s4 1934713408
        %v5683 = vunpack.c.0.s8 %v5682
        %v5684 = vlaneseq
        %v5685 = vshrl.u32 %v5684, 7
        %v5686 = vsub.s32 %v5683, %v5685
        %v5687 = vrot.slane %v5673, %v5686
        %v5688 = vcombine.low %v5623, %v5639
        %v5689 = vcombine.high %v5623, %v5639
        %v5691 = vunpack.c.l.s4 1934713408
        %v5692 = vunpack.c.0.s8 %v5691
        %v5693 = vlaneseq
        %v5694 = vshrl.u32 %v5693, 7
        %v5695 = vsub.s32 %v5692, %v5694
        %v5696 = vrot.slane %v5688, %v5695
        %v5698 = vunpack.c.l.s4 1934713408
        %v5699 = vunpack.c.0.s8 %v5698
        %v5700 = vlaneseq
        %v5701 = vshrl.u32 %v5700, 7
        %v5702 = vsub.s32 %v5699, %v5701
        %v5703 = vrot.slane %v5689, %v5702
        %v5704 = vcombine.low %v5648, %v5680
        %v5705 = vcombine.high %v5648, %v5680
        %v5706 = vcombine.low %v5655, %v5687
        %v5707 = vcombine.high %v5655, %v5687
        %v5708 = vcombine.low %v5664, %v5696
        %v5709 = vcombine.high %v5664, %v5696
        %v5710 = vcombine.low %v5671, %v5703
        %v5711 = vcombine.high %v5671, %v5703
        %v5712 = vcombine.low %v5524, %v5534
        %v5713 = vcombine.high %v5524, %v5534
        %v5715 = vunpack.c.l.s4 1983009808
        %v5716 = vunpack.c.0.s8 %v5715
        %v5717 = vlaneseq
        %v5718 = vshrl.u32 %v5717, 7
        %v5719 = vsub.s32 %v5716, %v5718
        %v5720 = vrot.slane %v5712, %v5719
        %v5722 = vunpack.c.l.s4 1983009808
        %v5723 = vunpack.c.0.s8 %v5722
        %v5724 = vlaneseq
        %v5725 = vshrl.u32 %v5724, 7
        %v5726 = vsub.s32 %v5723, %v5725
        %v5727 = vrot.slane %v5713, %v5726
        %v5728 = vcombine.low %v5529, %v5539
        %v5729 = vcombine.high %v5529, %v5539
        %v5731 = vunpack.c.l.s4 1983009808
        %v5732 = vunpack.c.0.s8 %v5731
        %v5733 = vlaneseq
        %v5734 = vshrl.u32 %v5733, 7
        %v5735 = vsub.s32 %v5732, %v5734
        %v5736 = vrot.slane %v5728, %v5735
        %v5738 = vunpack.c.l.s4 1983009808
        %v5739 = vunpack.c.0.s8 %v5738
        %v5740 = vlaneseq
        %v5741 = vshrl.u32 %v5740, 7
        %v5742 = vsub.s32 %v5739, %v5741
        %v5743 = vrot.slane %v5729, %v5742
        %v5744 = vcombine.low %v5544, %v5554
        %v5745 = vcombine.high %v5544, %v5554
        %v5747 = vunpack.c.l.s4 1983009808
        %v5748 = vunpack.c.0.s8 %v5747
        %v5749 = vlaneseq
        %v5750 = vshrl.u32 %v5749, 7
        %v5751 = vsub.s32 %v5748, %v5750
        %v5752 = vrot.slane %v5744, %v5751
        %v5754 = vunpack.c.l.s4 1983009808
        %v5755 = vunpack.c.0.s8 %v5754
        %v5756 = vlaneseq
        %v5757 = vshrl.u32 %v5756, 7
        %v5758 = vsub.s32 %v5755, %v5757
        %v5759 = vrot.slane %v5745, %v5758
        %v5760 = vcombine.low %v5549, %v5559
        %v5761 = vcombine.high %v5549, %v5559
        %v5763 = vunpack.c.l.s4 1983009808
        %v5764 = vunpack.c.0.s8 %v5763
        %v5765 = vlaneseq
        %v5766 = vshrl.u32 %v5765, 7
        %v5767 = vsub.s32 %v5764, %v5766
        %v5768 = vrot.slane %v5760, %v5767
        %v5770 = vunpack.c.l.s4 1983009808
        %v5771 = vunpack.c.0.s8 %v5770
        %v5772 = vlaneseq
        %v5773 = vshrl.u32 %v5772, 7
        %v5774 = vsub.s32 %v5771, %v5773
        %v5775 = vrot.slane %v5761, %v5774
        %v5776 = vcombine.low %v5720, %v5736
        %v5777 = vcombine.high %v5720, %v5736
        %v5779 = vunpack.c.l.s4 1934713408
        %v5780 = vunpack.c.0.s8 %v5779
        %v5781 = vlaneseq
        %v5782 = vshrl.u32 %v5781, 7
        %v5783 = vsub.s32 %v5780, %v5782
        %v5784 = vrot.slane %v5776, %v5783
        %v5786 = vunpack.c.l.s4 1934713408
        %v5787 = vunpack.c.0.s8 %v5786
        %v5788 = vlaneseq
        %v5789 = vshrl.u32 %v5788, 7
        %v5790 = vsub.s32 %v5787, %v5789
        %v5791 = vrot.slane %v5777, %v5790
        %v5792 = vcombine.low %v5727, %v5743
        %v5793 = vcombine.high %v5727, %v5743
        %v5795 = vunpack.c.l.s4 1934713408
        %v5796 = vunpack.c.0.s8 %v5795
        %v5797 = vlaneseq
        %v5798 = vshrl.u32 %v5797, 7
        %v5799 = vsub.s32 %v5796, %v5798
        %v5800 = vrot.slane %v5792, %v5799
        %v5802 = vunpack.c.l.s4 1934713408
        %v5803 = vunpack.c.0.s8 %v5802
        %v5804 = vlaneseq
        %v5805 = vshrl.u32 %v5804, 7
        %v5806 = vsub.s32 %v5803, %v5805
        %v5807 = vrot.slane %v5793, %v5806
        %v5808 = vcombine.low %v5752, %v5768
        %v5809 = vcombine.high %v5752, %v5768
        %v5811 = vunpack.c.l.s4 1934713408
        %v5812 = vunpack.c.0.s8 %v5811
        %v5813 = vlaneseq
        %v5814 = vshrl.u32 %v5813, 7
        %v5815 = vsub.s32 %v5812, %v5814
        %v5816 = vrot.slane %v5808, %v5815
        %v5818 = vunpack.c.l.s4 1934713408
        %v5819 = vunpack.c.0.s8 %v5818
        %v5820 = vlaneseq
        %v5821 = vshrl.u32 %v5820, 7
        %v5822 = vsub.s32 %v5819, %v5821
        %v5823 = vrot.slane %v5809, %v5822
        %v5824 = vcombine.low %v5759, %v5775
        %v5825 = vcombine.high %v5759, %v5775
        %v5827 = vunpack.c.l.s4 1934713408
        %v5828 = vunpack.c.0.s8 %v5827
        %v5829 = vlaneseq
        %v5830 = vshrl.u32 %v5829, 7
        %v5831 = vsub.s32 %v5828, %v5830
        %v5832 = vrot.slane %v5824, %v5831
        %v5834 = vunpack.c.l.s4 1934713408
        %v5835 = vunpack.c.0.s8 %v5834
        %v5836 = vlaneseq
        %v5837 = vshrl.u32 %v5836, 7
        %v5838 = vsub.s32 %v5835, %v5837
        %v5839 = vrot.slane %v5825, %v5838
        %v5840 = vcombine.low %v5784, %v5816
        %v5841 = vcombine.high %v5784, %v5816
        %v5842 = vcombine.low %v5791, %v5823
        %v5843 = vcombine.high %v5791, %v5823
        %v5844 = vcombine.low %v5800, %v5832
        %v5845 = vcombine.high %v5800, %v5832
        %v5846 = vcombine.low %v5807, %v5839
        %v5847 = vcombine.high %v5807, %v5839
        %5849 = vrot.lane.b32.xlu0 %v5705, 16
        %v5850 = vpop.permute.xlu0 %5849
        %5853 = vrot.lane.b32.xlu0 %v5706, 32
        %v5854 = vpop.permute.xlu0 %5853
        %5857 = vrot.lane.b32.xlu0 %v5707, 48
        %v5858 = vpop.permute.xlu0 %5857
        %5861 = vrot.lane.b32.xlu0 %v5708, 64
        %v5862 = vpop.permute.xlu0 %5861
        %5865 = vrot.lane.b32.xlu0 %v5709, 80
        %v5866 = vpop.permute.xlu0 %5865
        %5869 = vrot.lane.b32.xlu0 %v5710, 96
        %v5870 = vpop.permute.xlu0 %5869
        %5873 = vrot.lane.b32.xlu0 %v5711, 112
        %v5874 = vpop.permute.xlu0 %5873
        %5877 = vrot.lane.b32.xlu0 %v5841, 16
        %v5878 = vpop.permute.xlu0 %5877
        %5881 = vrot.lane.b32.xlu0 %v5842, 32
        %v5882 = vpop.permute.xlu0 %5881
        %5885 = vrot.lane.b32.xlu0 %v5843, 48
        %v5886 = vpop.permute.xlu0 %5885
        %5889 = vrot.lane.b32.xlu0 %v5844, 64
        %v5890 = vpop.permute.xlu0 %5889
        %5893 = vrot.lane.b32.xlu0 %v5845, 80
        %v5894 = vpop.permute.xlu0 %5893
        %5897 = vrot.lane.b32.xlu0 %v5846, 96
        %v5898 = vpop.permute.xlu0 %5897
        %5901 = vrot.lane.b32.xlu0 %v5847, 112
        %v5902 = vpop.permute.xlu0 %5901
        %v5904 = vsel %vm710, %v5704, %v5850
        %v5905 = vsel %vm712, %v5904, %v5854
        %v5906 = vsel %vm714, %v5905, %v5858
        %v5907 = vsel %vm716, %v5906, %v5862
        %v5908 = vsel %vm718, %v5907, %v5866
        %v5909 = vsel %vm720, %v5908, %v5870
        %v5910 = vsel %vm722, %v5909, %v5874
        %v5911 = vsel %vm710, %v5840, %v5878
        %v5912 = vsel %vm712, %v5911, %v5882
        %v5913 = vsel %vm714, %v5912, %v5886
        %v5914 = vsel %vm716, %v5913, %v5890
        %v5915 = vsel %vm718, %v5914, %v5894
        %v5916 = vsel %vm720, %v5915, %v5898
        %v5917 = vsel %vm722, %v5916, %v5902
        %5918 = vrot.lane.b32.xlu0 %v5522, 127
        %v5919 = vpop.permute.xlu0 %5918
        %5920 = vrot.lane.b32.xlu0 %v5524, 127
        %v5921 = vpop.permute.xlu0 %5920
        %5922 = vrot.lane.b32.xlu0 %v5527, 127
        %v5923 = vpop.permute.xlu0 %5922
        %5924 = vrot.lane.b32.xlu0 %v5529, 127
        %v5925 = vpop.permute.xlu0 %5924
        %5926 = vrot.lane.b32.xlu0 %v5532, 127
        %v5927 = vpop.permute.xlu0 %5926
        %5928 = vrot.lane.b32.xlu0 %v5534, 127
        %v5929 = vpop.permute.xlu0 %5928
        %5930 = vrot.lane.b32.xlu0 %v5537, 127
        %v5931 = vpop.permute.xlu0 %5930
        %5932 = vrot.lane.b32.xlu0 %v5539, 127
        %v5933 = vpop.permute.xlu0 %5932
        %5934 = vrot.lane.b32.xlu0 %v5542, 127
        %v5935 = vpop.permute.xlu0 %5934
        %5936 = vrot.lane.b32.xlu0 %v5544, 127
        %v5937 = vpop.permute.xlu0 %5936
        %5938 = vrot.lane.b32.xlu0 %v5547, 127
        %v5939 = vpop.permute.xlu0 %5938
        %5940 = vrot.lane.b32.xlu0 %v5549, 127
        %v5941 = vpop.permute.xlu0 %5940
        %5942 = vrot.lane.b32.xlu0 %v5552, 127
        %v5943 = vpop.permute.xlu0 %5942
        %5944 = vrot.lane.b32.xlu0 %v5554, 127
        %v5945 = vpop.permute.xlu0 %5944
        %5946 = vrot.lane.b32.xlu0 %v5557, 127
        %v5947 = vpop.permute.xlu0 %5946
        %5948 = vrot.lane.b32.xlu0 %v5559, 127
        %v5949 = vpop.permute.xlu0 %5948
        %v5966 = vcombine.low %v5919, %v5927
        %v5967 = vcombine.high %v5919, %v5927
        %v5969 = vunpack.c.l.s4 1983009808
        %v5970 = vunpack.c.0.s8 %v5969
        %v5971 = vlaneseq
        %v5972 = vshrl.u32 %v5971, 7
        %v5973 = vsub.s32 %v5970, %v5972
        %v5974 = vrot.slane %v5966, %v5973
        %v5976 = vunpack.c.l.s4 1983009808
        %v5977 = vunpack.c.0.s8 %v5976
        %v5978 = vlaneseq
        %v5979 = vshrl.u32 %v5978, 7
        %v5980 = vsub.s32 %v5977, %v5979
        %v5981 = vrot.slane %v5967, %v5980
        %v5982 = vcombine.low %v5923, %v5931
        %v5983 = vcombine.high %v5923, %v5931
        %v5985 = vunpack.c.l.s4 1983009808
        %v5986 = vunpack.c.0.s8 %v5985
        %v5987 = vlaneseq
        %v5988 = vshrl.u32 %v5987, 7
        %v5989 = vsub.s32 %v5986, %v5988
        %v5990 = vrot.slane %v5982, %v5989
        %v5992 = vunpack.c.l.s4 1983009808
        %v5993 = vunpack.c.0.s8 %v5992
        %v5994 = vlaneseq
        %v5995 = vshrl.u32 %v5994, 7
        %v5996 = vsub.s32 %v5993, %v5995
        %v5997 = vrot.slane %v5983, %v5996
        %v5998 = vcombine.low %v5935, %v5943
        %v5999 = vcombine.high %v5935, %v5943
        %v6001 = vunpack.c.l.s4 1983009808
        %v6002 = vunpack.c.0.s8 %v6001
        %v6003 = vlaneseq
        %v6004 = vshrl.u32 %v6003, 7
        %v6005 = vsub.s32 %v6002, %v6004
        %v6006 = vrot.slane %v5998, %v6005
        %v6008 = vunpack.c.l.s4 1983009808
        %v6009 = vunpack.c.0.s8 %v6008
        %v6010 = vlaneseq
        %v6011 = vshrl.u32 %v6010, 7
        %v6012 = vsub.s32 %v6009, %v6011
        %v6013 = vrot.slane %v5999, %v6012
        %v6014 = vcombine.low %v5939, %v5947
        %v6015 = vcombine.high %v5939, %v5947
        %v6017 = vunpack.c.l.s4 1983009808
        %v6018 = vunpack.c.0.s8 %v6017
        %v6019 = vlaneseq
        %v6020 = vshrl.u32 %v6019, 7
        %v6021 = vsub.s32 %v6018, %v6020
        %v6022 = vrot.slane %v6014, %v6021
        %v6024 = vunpack.c.l.s4 1983009808
        %v6025 = vunpack.c.0.s8 %v6024
        %v6026 = vlaneseq
        %v6027 = vshrl.u32 %v6026, 7
        %v6028 = vsub.s32 %v6025, %v6027
        %v6029 = vrot.slane %v6015, %v6028
        %v6030 = vcombine.low %v5974, %v5990
        %v6031 = vcombine.high %v5974, %v5990
        %v6033 = vunpack.c.l.s4 1934713408
        %v6034 = vunpack.c.0.s8 %v6033
        %v6035 = vlaneseq
        %v6036 = vshrl.u32 %v6035, 7
        %v6037 = vsub.s32 %v6034, %v6036
        %v6038 = vrot.slane %v6030, %v6037
        %v6040 = vunpack.c.l.s4 1934713408
        %v6041 = vunpack.c.0.s8 %v6040
        %v6042 = vlaneseq
        %v6043 = vshrl.u32 %v6042, 7
        %v6044 = vsub.s32 %v6041, %v6043
        %v6045 = vrot.slane %v6031, %v6044
        %v6046 = vcombine.low %v5981, %v5997
        %v6047 = vcombine.high %v5981, %v5997
        %v6049 = vunpack.c.l.s4 1934713408
        %v6050 = vunpack.c.0.s8 %v6049
        %v6051 = vlaneseq
        %v6052 = vshrl.u32 %v6051, 7
        %v6053 = vsub.s32 %v6050, %v6052
        %v6054 = vrot.slane %v6046, %v6053
        %v6056 = vunpack.c.l.s4 1934713408
        %v6057 = vunpack.c.0.s8 %v6056
        %v6058 = vlaneseq
        %v6059 = vshrl.u32 %v6058, 7
        %v6060 = vsub.s32 %v6057, %v6059
        %v6061 = vrot.slane %v6047, %v6060
        %v6062 = vcombine.low %v6006, %v6022
        %v6063 = vcombine.high %v6006, %v6022
        %v6065 = vunpack.c.l.s4 1934713408
        %v6066 = vunpack.c.0.s8 %v6065
        %v6067 = vlaneseq
        %v6068 = vshrl.u32 %v6067, 7
        %v6069 = vsub.s32 %v6066, %v6068
        %v6070 = vrot.slane %v6062, %v6069
        %v6072 = vunpack.c.l.s4 1934713408
        %v6073 = vunpack.c.0.s8 %v6072
        %v6074 = vlaneseq
        %v6075 = vshrl.u32 %v6074, 7
        %v6076 = vsub.s32 %v6073, %v6075
        %v6077 = vrot.slane %v6063, %v6076
        %v6078 = vcombine.low %v6013, %v6029
        %v6079 = vcombine.high %v6013, %v6029
        %v6081 = vunpack.c.l.s4 1934713408
        %v6082 = vunpack.c.0.s8 %v6081
        %v6083 = vlaneseq
        %v6084 = vshrl.u32 %v6083, 7
        %v6085 = vsub.s32 %v6082, %v6084
        %v6086 = vrot.slane %v6078, %v6085
        %v6088 = vunpack.c.l.s4 1934713408
        %v6089 = vunpack.c.0.s8 %v6088
        %v6090 = vlaneseq
        %v6091 = vshrl.u32 %v6090, 7
        %v6092 = vsub.s32 %v6089, %v6091
        %v6093 = vrot.slane %v6079, %v6092
        %v6094 = vcombine.low %v6038, %v6070
        %v6095 = vcombine.high %v6038, %v6070
        %v6096 = vcombine.low %v6045, %v6077
        %v6097 = vcombine.high %v6045, %v6077
        %v6098 = vcombine.low %v6054, %v6086
        %v6099 = vcombine.high %v6054, %v6086
        %v6100 = vcombine.low %v6061, %v6093
        %v6101 = vcombine.high %v6061, %v6093
        %v6102 = vcombine.low %v5921, %v5929
        %v6103 = vcombine.high %v5921, %v5929
        %v6105 = vunpack.c.l.s4 1983009808
        %v6106 = vunpack.c.0.s8 %v6105
        %v6107 = vlaneseq
        %v6108 = vshrl.u32 %v6107, 7
        %v6109 = vsub.s32 %v6106, %v6108
        %v6110 = vrot.slane %v6102, %v6109
        %v6112 = vunpack.c.l.s4 1983009808
        %v6113 = vunpack.c.0.s8 %v6112
        %v6114 = vlaneseq
        %v6115 = vshrl.u32 %v6114, 7
        %v6116 = vsub.s32 %v6113, %v6115
        %v6117 = vrot.slane %v6103, %v6116
        %v6118 = vcombine.low %v5925, %v5933
        %v6119 = vcombine.high %v5925, %v5933
        %v6121 = vunpack.c.l.s4 1983009808
        %v6122 = vunpack.c.0.s8 %v6121
        %v6123 = vlaneseq
        %v6124 = vshrl.u32 %v6123, 7
        %v6125 = vsub.s32 %v6122, %v6124
        %v6126 = vrot.slane %v6118, %v6125
        %v6128 = vunpack.c.l.s4 1983009808
        %v6129 = vunpack.c.0.s8 %v6128
        %v6130 = vlaneseq
        %v6131 = vshrl.u32 %v6130, 7
        %v6132 = vsub.s32 %v6129, %v6131
        %v6133 = vrot.slane %v6119, %v6132
        %v6134 = vcombine.low %v5937, %v5945
        %v6135 = vcombine.high %v5937, %v5945
        %v6137 = vunpack.c.l.s4 1983009808
        %v6138 = vunpack.c.0.s8 %v6137
        %v6139 = vlaneseq
        %v6140 = vshrl.u32 %v6139, 7
        %v6141 = vsub.s32 %v6138, %v6140
        %v6142 = vrot.slane %v6134, %v6141
        %v6144 = vunpack.c.l.s4 1983009808
        %v6145 = vunpack.c.0.s8 %v6144
        %v6146 = vlaneseq
        %v6147 = vshrl.u32 %v6146, 7
        %v6148 = vsub.s32 %v6145, %v6147
        %v6149 = vrot.slane %v6135, %v6148
        %v6150 = vcombine.low %v5941, %v5949
        %v6151 = vcombine.high %v5941, %v5949
        %v6153 = vunpack.c.l.s4 1983009808
        %v6154 = vunpack.c.0.s8 %v6153
        %v6155 = vlaneseq
        %v6156 = vshrl.u32 %v6155, 7
        %v6157 = vsub.s32 %v6154, %v6156
        %v6158 = vrot.slane %v6150, %v6157
        %v6160 = vunpack.c.l.s4 1983009808
        %v6161 = vunpack.c.0.s8 %v6160
        %v6162 = vlaneseq
        %v6163 = vshrl.u32 %v6162, 7
        %v6164 = vsub.s32 %v6161, %v6163
        %v6165 = vrot.slane %v6151, %v6164
        %v6166 = vcombine.low %v6110, %v6126
        %v6167 = vcombine.high %v6110, %v6126
        %v6169 = vunpack.c.l.s4 1934713408
        %v6170 = vunpack.c.0.s8 %v6169
        %v6171 = vlaneseq
        %v6172 = vshrl.u32 %v6171, 7
        %v6173 = vsub.s32 %v6170, %v6172
        %v6174 = vrot.slane %v6166, %v6173
        %v6176 = vunpack.c.l.s4 1934713408
        %v6177 = vunpack.c.0.s8 %v6176
        %v6178 = vlaneseq
        %v6179 = vshrl.u32 %v6178, 7
        %v6180 = vsub.s32 %v6177, %v6179
        %v6181 = vrot.slane %v6167, %v6180
        %v6182 = vcombine.low %v6117, %v6133
        %v6183 = vcombine.high %v6117, %v6133
        %v6185 = vunpack.c.l.s4 1934713408
        %v6186 = vunpack.c.0.s8 %v6185
        %v6187 = vlaneseq
        %v6188 = vshrl.u32 %v6187, 7
        %v6189 = vsub.s32 %v6186, %v6188
        %v6190 = vrot.slane %v6182, %v6189
        %v6192 = vunpack.c.l.s4 1934713408
        %v6193 = vunpack.c.0.s8 %v6192
        %v6194 = vlaneseq
        %v6195 = vshrl.u32 %v6194, 7
        %v6196 = vsub.s32 %v6193, %v6195
        %v6197 = vrot.slane %v6183, %v6196
        %v6198 = vcombine.low %v6142, %v6158
        %v6199 = vcombine.high %v6142, %v6158
        %v6201 = vunpack.c.l.s4 1934713408
        %v6202 = vunpack.c.0.s8 %v6201
        %v6203 = vlaneseq
        %v6204 = vshrl.u32 %v6203, 7
        %v6205 = vsub.s32 %v6202, %v6204
        %v6206 = vrot.slane %v6198, %v6205
        %v6208 = vunpack.c.l.s4 1934713408
        %v6209 = vunpack.c.0.s8 %v6208
        %v6210 = vlaneseq
        %v6211 = vshrl.u32 %v6210, 7
        %v6212 = vsub.s32 %v6209, %v6211
        %v6213 = vrot.slane %v6199, %v6212
        %v6214 = vcombine.low %v6149, %v6165
        %v6215 = vcombine.high %v6149, %v6165
        %v6217 = vunpack.c.l.s4 1934713408
        %v6218 = vunpack.c.0.s8 %v6217
        %v6219 = vlaneseq
        %v6220 = vshrl.u32 %v6219, 7
        %v6221 = vsub.s32 %v6218, %v6220
        %v6222 = vrot.slane %v6214, %v6221
        %v6224 = vunpack.c.l.s4 1934713408
        %v6225 = vunpack.c.0.s8 %v6224
        %v6226 = vlaneseq
        %v6227 = vshrl.u32 %v6226, 7
        %v6228 = vsub.s32 %v6225, %v6227
        %v6229 = vrot.slane %v6215, %v6228
        %v6230 = vcombine.low %v6174, %v6206
        %v6231 = vcombine.high %v6174, %v6206
        %v6232 = vcombine.low %v6181, %v6213
        %v6233 = vcombine.high %v6181, %v6213
        %v6234 = vcombine.low %v6190, %v6222
        %v6235 = vcombine.high %v6190, %v6222
        %v6236 = vcombine.low %v6197, %v6229
        %v6237 = vcombine.high %v6197, %v6229
        %6239 = vrot.lane.b32.xlu0 %v6095, 16
        %v6240 = vpop.permute.xlu0 %6239
        %6243 = vrot.lane.b32.xlu0 %v6096, 32
        %v6244 = vpop.permute.xlu0 %6243
        %6247 = vrot.lane.b32.xlu0 %v6097, 48
        %v6248 = vpop.permute.xlu0 %6247
        %6251 = vrot.lane.b32.xlu0 %v6098, 64
        %v6252 = vpop.permute.xlu0 %6251
        %6255 = vrot.lane.b32.xlu0 %v6099, 80
        %v6256 = vpop.permute.xlu0 %6255
        %6259 = vrot.lane.b32.xlu0 %v6100, 96
        %v6260 = vpop.permute.xlu0 %6259
        %6263 = vrot.lane.b32.xlu0 %v6101, 112
        %v6264 = vpop.permute.xlu0 %6263
        %6267 = vrot.lane.b32.xlu0 %v6231, 16
        %v6268 = vpop.permute.xlu0 %6267
        %6271 = vrot.lane.b32.xlu0 %v6232, 32
        %v6272 = vpop.permute.xlu0 %6271
        %6275 = vrot.lane.b32.xlu0 %v6233, 48
        %v6276 = vpop.permute.xlu0 %6275
        %6279 = vrot.lane.b32.xlu0 %v6234, 64
        %v6280 = vpop.permute.xlu0 %6279
        %6283 = vrot.lane.b32.xlu0 %v6235, 80
        %v6284 = vpop.permute.xlu0 %6283
        %6287 = vrot.lane.b32.xlu0 %v6236, 96
        %v6288 = vpop.permute.xlu0 %6287
        %6291 = vrot.lane.b32.xlu0 %v6237, 112
        %v6292 = vpop.permute.xlu0 %6291
        %v6294 = vsel %vm710, %v6094, %v6240
        %v6295 = vsel %vm712, %v6294, %v6244
        %v6296 = vsel %vm714, %v6295, %v6248
        %v6297 = vsel %vm716, %v6296, %v6252
        %v6298 = vsel %vm718, %v6297, %v6256
        %v6299 = vsel %vm720, %v6298, %v6260
        %v6300 = vsel %vm722, %v6299, %v6264
        %v6301 = vsel %vm710, %v6230, %v6268
        %v6302 = vsel %vm712, %v6301, %v6272
        %v6303 = vsel %vm714, %v6302, %v6276
        %v6304 = vsel %vm716, %v6303, %v6280
        %v6305 = vsel %vm718, %v6304, %v6284
        %v6306 = vsel %vm720, %v6305, %v6288
        %v6307 = vsel %vm722, %v6306, %v6292
        %6308 = vrot.lane.b32.xlu0 %v5522, 126
        %v6309 = vpop.permute.xlu0 %6308
        %6310 = vrot.lane.b32.xlu0 %v5524, 126
        %v6311 = vpop.permute.xlu0 %6310
        %6312 = vrot.lane.b32.xlu0 %v5527, 126
        %v6313 = vpop.permute.xlu0 %6312
        %6314 = vrot.lane.b32.xlu0 %v5529, 126
        %v6315 = vpop.permute.xlu0 %6314
        %6316 = vrot.lane.b32.xlu0 %v5532, 126
        %v6317 = vpop.permute.xlu0 %6316
        %6318 = vrot.lane.b32.xlu0 %v5534, 126
        %v6319 = vpop.permute.xlu0 %6318
        %6320 = vrot.lane.b32.xlu0 %v5537, 126
        %v6321 = vpop.permute.xlu0 %6320
        %6322 = vrot.lane.b32.xlu0 %v5539, 126
        %v6323 = vpop.permute.xlu0 %6322
        %6324 = vrot.lane.b32.xlu0 %v5542, 126
        %v6325 = vpop.permute.xlu0 %6324
        %6326 = vrot.lane.b32.xlu0 %v5544, 126
        %v6327 = vpop.permute.xlu0 %6326
        %6328 = vrot.lane.b32.xlu0 %v5547, 126
        %v6329 = vpop.permute.xlu0 %6328
        %6330 = vrot.lane.b32.xlu0 %v5549, 126
        %v6331 = vpop.permute.xlu0 %6330
        %6332 = vrot.lane.b32.xlu0 %v5552, 126
        %v6333 = vpop.permute.xlu0 %6332
        %6334 = vrot.lane.b32.xlu0 %v5554, 126
        %v6335 = vpop.permute.xlu0 %6334
        %6336 = vrot.lane.b32.xlu0 %v5557, 126
        %v6337 = vpop.permute.xlu0 %6336
        %6338 = vrot.lane.b32.xlu0 %v5559, 126
        %v6339 = vpop.permute.xlu0 %6338
        %v6356 = vcombine.low %v6309, %v6317
        %v6357 = vcombine.high %v6309, %v6317
        %v6359 = vunpack.c.l.s4 1983009808
        %v6360 = vunpack.c.0.s8 %v6359
        %v6361 = vlaneseq
        %v6362 = vshrl.u32 %v6361, 7
        %v6363 = vsub.s32 %v6360, %v6362
        %v6364 = vrot.slane %v6356, %v6363
        %v6366 = vunpack.c.l.s4 1983009808
        %v6367 = vunpack.c.0.s8 %v6366
        %v6368 = vlaneseq
        %v6369 = vshrl.u32 %v6368, 7
        %v6370 = vsub.s32 %v6367, %v6369
        %v6371 = vrot.slane %v6357, %v6370
        %v6372 = vcombine.low %v6313, %v6321
        %v6373 = vcombine.high %v6313, %v6321
        %v6375 = vunpack.c.l.s4 1983009808
        %v6376 = vunpack.c.0.s8 %v6375
        %v6377 = vlaneseq
        %v6378 = vshrl.u32 %v6377, 7
        %v6379 = vsub.s32 %v6376, %v6378
        %v6380 = vrot.slane %v6372, %v6379
        %v6382 = vunpack.c.l.s4 1983009808
        %v6383 = vunpack.c.0.s8 %v6382
        %v6384 = vlaneseq
        %v6385 = vshrl.u32 %v6384, 7
        %v6386 = vsub.s32 %v6383, %v6385
        %v6387 = vrot.slane %v6373, %v6386
        %v6388 = vcombine.low %v6325, %v6333
        %v6389 = vcombine.high %v6325, %v6333
        %v6391 = vunpack.c.l.s4 1983009808
        %v6392 = vunpack.c.0.s8 %v6391
        %v6393 = vlaneseq
        %v6394 = vshrl.u32 %v6393, 7
        %v6395 = vsub.s32 %v6392, %v6394
        %v6396 = vrot.slane %v6388, %v6395
        %v6398 = vunpack.c.l.s4 1983009808
        %v6399 = vunpack.c.0.s8 %v6398
        %v6400 = vlaneseq
        %v6401 = vshrl.u32 %v6400, 7
        %v6402 = vsub.s32 %v6399, %v6401
        %v6403 = vrot.slane %v6389, %v6402
        %v6404 = vcombine.low %v6329, %v6337
        %v6405 = vcombine.high %v6329, %v6337
        %v6407 = vunpack.c.l.s4 1983009808
        %v6408 = vunpack.c.0.s8 %v6407
        %v6409 = vlaneseq
        %v6410 = vshrl.u32 %v6409, 7
        %v6411 = vsub.s32 %v6408, %v6410
        %v6412 = vrot.slane %v6404, %v6411
        %v6414 = vunpack.c.l.s4 1983009808
        %v6415 = vunpack.c.0.s8 %v6414
        %v6416 = vlaneseq
        %v6417 = vshrl.u32 %v6416, 7
        %v6418 = vsub.s32 %v6415, %v6417
        %v6419 = vrot.slane %v6405, %v6418
        %v6420 = vcombine.low %v6364, %v6380
        %v6421 = vcombine.high %v6364, %v6380
        %v6423 = vunpack.c.l.s4 1934713408
        %v6424 = vunpack.c.0.s8 %v6423
        %v6425 = vlaneseq
        %v6426 = vshrl.u32 %v6425, 7
        %v6427 = vsub.s32 %v6424, %v6426
        %v6428 = vrot.slane %v6420, %v6427
        %v6430 = vunpack.c.l.s4 1934713408
        %v6431 = vunpack.c.0.s8 %v6430
        %v6432 = vlaneseq
        %v6433 = vshrl.u32 %v6432, 7
        %v6434 = vsub.s32 %v6431, %v6433
        %v6435 = vrot.slane %v6421, %v6434
        %v6436 = vcombine.low %v6371, %v6387
        %v6437 = vcombine.high %v6371, %v6387
        %v6439 = vunpack.c.l.s4 1934713408
        %v6440 = vunpack.c.0.s8 %v6439
        %v6441 = vlaneseq
        %v6442 = vshrl.u32 %v6441, 7
        %v6443 = vsub.s32 %v6440, %v6442
        %v6444 = vrot.slane %v6436, %v6443
        %v6446 = vunpack.c.l.s4 1934713408
        %v6447 = vunpack.c.0.s8 %v6446
        %v6448 = vlaneseq
        %v6449 = vshrl.u32 %v6448, 7
        %v6450 = vsub.s32 %v6447, %v6449
        %v6451 = vrot.slane %v6437, %v6450
        %v6452 = vcombine.low %v6396, %v6412
        %v6453 = vcombine.high %v6396, %v6412
        %v6455 = vunpack.c.l.s4 1934713408
        %v6456 = vunpack.c.0.s8 %v6455
        %v6457 = vlaneseq
        %v6458 = vshrl.u32 %v6457, 7
        %v6459 = vsub.s32 %v6456, %v6458
        %v6460 = vrot.slane %v6452, %v6459
        %v6462 = vunpack.c.l.s4 1934713408
        %v6463 = vunpack.c.0.s8 %v6462
        %v6464 = vlaneseq
        %v6465 = vshrl.u32 %v6464, 7
        %v6466 = vsub.s32 %v6463, %v6465
        %v6467 = vrot.slane %v6453, %v6466
        %v6468 = vcombine.low %v6403, %v6419
        %v6469 = vcombine.high %v6403, %v6419
        %v6471 = vunpack.c.l.s4 1934713408
        %v6472 = vunpack.c.0.s8 %v6471
        %v6473 = vlaneseq
        %v6474 = vshrl.u32 %v6473, 7
        %v6475 = vsub.s32 %v6472, %v6474
        %v6476 = vrot.slane %v6468, %v6475
        %v6478 = vunpack.c.l.s4 1934713408
        %v6479 = vunpack.c.0.s8 %v6478
        %v6480 = vlaneseq
        %v6481 = vshrl.u32 %v6480, 7
        %v6482 = vsub.s32 %v6479, %v6481
        %v6483 = vrot.slane %v6469, %v6482
        %v6484 = vcombine.low %v6428, %v6460
        %v6485 = vcombine.high %v6428, %v6460
        %v6486 = vcombine.low %v6435, %v6467
        %v6487 = vcombine.high %v6435, %v6467
        %v6488 = vcombine.low %v6444, %v6476
        %v6489 = vcombine.high %v6444, %v6476
        %v6490 = vcombine.low %v6451, %v6483
        %v6491 = vcombine.high %v6451, %v6483
        %v6492 = vcombine.low %v6311, %v6319
        %v6493 = vcombine.high %v6311, %v6319
        %v6495 = vunpack.c.l.s4 1983009808
        %v6496 = vunpack.c.0.s8 %v6495
        %v6497 = vlaneseq
        %v6498 = vshrl.u32 %v6497, 7
        %v6499 = vsub.s32 %v6496, %v6498
        %v6500 = vrot.slane %v6492, %v6499
        %v6502 = vunpack.c.l.s4 1983009808
        %v6503 = vunpack.c.0.s8 %v6502
        %v6504 = vlaneseq
        %v6505 = vshrl.u32 %v6504, 7
        %v6506 = vsub.s32 %v6503, %v6505
        %v6507 = vrot.slane %v6493, %v6506
        %v6508 = vcombine.low %v6315, %v6323
        %v6509 = vcombine.high %v6315, %v6323
        %v6511 = vunpack.c.l.s4 1983009808
        %v6512 = vunpack.c.0.s8 %v6511
        %v6513 = vlaneseq
        %v6514 = vshrl.u32 %v6513, 7
        %v6515 = vsub.s32 %v6512, %v6514
        %v6516 = vrot.slane %v6508, %v6515
        %v6518 = vunpack.c.l.s4 1983009808
        %v6519 = vunpack.c.0.s8 %v6518
        %v6520 = vlaneseq
        %v6521 = vshrl.u32 %v6520, 7
        %v6522 = vsub.s32 %v6519, %v6521
        %v6523 = vrot.slane %v6509, %v6522
        %v6524 = vcombine.low %v6327, %v6335
        %v6525 = vcombine.high %v6327, %v6335
        %v6527 = vunpack.c.l.s4 1983009808
        %v6528 = vunpack.c.0.s8 %v6527
        %v6529 = vlaneseq
        %v6530 = vshrl.u32 %v6529, 7
        %v6531 = vsub.s32 %v6528, %v6530
        %v6532 = vrot.slane %v6524, %v6531
        %v6534 = vunpack.c.l.s4 1983009808
        %v6535 = vunpack.c.0.s8 %v6534
        %v6536 = vlaneseq
        %v6537 = vshrl.u32 %v6536, 7
        %v6538 = vsub.s32 %v6535, %v6537
        %v6539 = vrot.slane %v6525, %v6538
        %v6540 = vcombine.low %v6331, %v6339
        %v6541 = vcombine.high %v6331, %v6339
        %v6543 = vunpack.c.l.s4 1983009808
        %v6544 = vunpack.c.0.s8 %v6543
        %v6545 = vlaneseq
        %v6546 = vshrl.u32 %v6545, 7
        %v6547 = vsub.s32 %v6544, %v6546
        %v6548 = vrot.slane %v6540, %v6547
        %v6550 = vunpack.c.l.s4 1983009808
        %v6551 = vunpack.c.0.s8 %v6550
        %v6552 = vlaneseq
        %v6553 = vshrl.u32 %v6552, 7
        %v6554 = vsub.s32 %v6551, %v6553
        %v6555 = vrot.slane %v6541, %v6554
        %v6556 = vcombine.low %v6500, %v6516
        %v6557 = vcombine.high %v6500, %v6516
        %v6559 = vunpack.c.l.s4 1934713408
        %v6560 = vunpack.c.0.s8 %v6559
        %v6561 = vlaneseq
        %v6562 = vshrl.u32 %v6561, 7
        %v6563 = vsub.s32 %v6560, %v6562
        %v6564 = vrot.slane %v6556, %v6563
        %v6566 = vunpack.c.l.s4 1934713408
        %v6567 = vunpack.c.0.s8 %v6566
        %v6568 = vlaneseq
        %v6569 = vshrl.u32 %v6568, 7
        %v6570 = vsub.s32 %v6567, %v6569
        %v6571 = vrot.slane %v6557, %v6570
        %v6572 = vcombine.low %v6507, %v6523
        %v6573 = vcombine.high %v6507, %v6523
        %v6575 = vunpack.c.l.s4 1934713408
        %v6576 = vunpack.c.0.s8 %v6575
        %v6577 = vlaneseq
        %v6578 = vshrl.u32 %v6577, 7
        %v6579 = vsub.s32 %v6576, %v6578
        %v6580 = vrot.slane %v6572, %v6579
        %v6582 = vunpack.c.l.s4 1934713408
        %v6583 = vunpack.c.0.s8 %v6582
        %v6584 = vlaneseq
        %v6585 = vshrl.u32 %v6584, 7
        %v6586 = vsub.s32 %v6583, %v6585
        %v6587 = vrot.slane %v6573, %v6586
        %v6588 = vcombine.low %v6532, %v6548
        %v6589 = vcombine.high %v6532, %v6548
        %v6591 = vunpack.c.l.s4 1934713408
        %v6592 = vunpack.c.0.s8 %v6591
        %v6593 = vlaneseq
        %v6594 = vshrl.u32 %v6593, 7
        %v6595 = vsub.s32 %v6592, %v6594
        %v6596 = vrot.slane %v6588, %v6595
        %v6598 = vunpack.c.l.s4 1934713408
        %v6599 = vunpack.c.0.s8 %v6598
        %v6600 = vlaneseq
        %v6601 = vshrl.u32 %v6600, 7
        %v6602 = vsub.s32 %v6599, %v6601
        %v6603 = vrot.slane %v6589, %v6602
        %v6604 = vcombine.low %v6539, %v6555
        %v6605 = vcombine.high %v6539, %v6555
        %v6607 = vunpack.c.l.s4 1934713408
        %v6608 = vunpack.c.0.s8 %v6607
        %v6609 = vlaneseq
        %v6610 = vshrl.u32 %v6609, 7
        %v6611 = vsub.s32 %v6608, %v6610
        %v6612 = vrot.slane %v6604, %v6611
        %v6614 = vunpack.c.l.s4 1934713408
        %v6615 = vunpack.c.0.s8 %v6614
        %v6616 = vlaneseq
        %v6617 = vshrl.u32 %v6616, 7
        %v6618 = vsub.s32 %v6615, %v6617
        %v6619 = vrot.slane %v6605, %v6618
        %v6620 = vcombine.low %v6564, %v6596
        %v6621 = vcombine.high %v6564, %v6596
        %v6622 = vcombine.low %v6571, %v6603
        %v6623 = vcombine.high %v6571, %v6603
        %v6624 = vcombine.low %v6580, %v6612
        %v6625 = vcombine.high %v6580, %v6612
        %v6626 = vcombine.low %v6587, %v6619
        %v6627 = vcombine.high %v6587, %v6619
        %6629 = vrot.lane.b32.xlu0 %v6485, 16
        %v6630 = vpop.permute.xlu0 %6629
        %6633 = vrot.lane.b32.xlu0 %v6486, 32
        %v6634 = vpop.permute.xlu0 %6633
        %6637 = vrot.lane.b32.xlu0 %v6487, 48
        %v6638 = vpop.permute.xlu0 %6637
        %6641 = vrot.lane.b32.xlu0 %v6488, 64
        %v6642 = vpop.permute.xlu0 %6641
        %6645 = vrot.lane.b32.xlu0 %v6489, 80
        %v6646 = vpop.permute.xlu0 %6645
        %6649 = vrot.lane.b32.xlu0 %v6490, 96
        %v6650 = vpop.permute.xlu0 %6649
        %6653 = vrot.lane.b32.xlu0 %v6491, 112
        %v6654 = vpop.permute.xlu0 %6653
        %6657 = vrot.lane.b32.xlu0 %v6621, 16
        %v6658 = vpop.permute.xlu0 %6657
        %6661 = vrot.lane.b32.xlu0 %v6622, 32
        %v6662 = vpop.permute.xlu0 %6661
        %6665 = vrot.lane.b32.xlu0 %v6623, 48
        %v6666 = vpop.permute.xlu0 %6665
        %6669 = vrot.lane.b32.xlu0 %v6624, 64
        %v6670 = vpop.permute.xlu0 %6669
        %6673 = vrot.lane.b32.xlu0 %v6625, 80
        %v6674 = vpop.permute.xlu0 %6673
        %6677 = vrot.lane.b32.xlu0 %v6626, 96
        %v6678 = vpop.permute.xlu0 %6677
        %6681 = vrot.lane.b32.xlu0 %v6627, 112
        %v6682 = vpop.permute.xlu0 %6681
        %v6684 = vsel %vm710, %v6484, %v6630
        %v6685 = vsel %vm712, %v6684, %v6634
        %v6686 = vsel %vm714, %v6685, %v6638
        %v6687 = vsel %vm716, %v6686, %v6642
        %v6688 = vsel %vm718, %v6687, %v6646
        %v6689 = vsel %vm720, %v6688, %v6650
        %v6690 = vsel %vm722, %v6689, %v6654
        %v6691 = vsel %vm710, %v6620, %v6658
        %v6692 = vsel %vm712, %v6691, %v6662
        %v6693 = vsel %vm714, %v6692, %v6666
        %v6694 = vsel %vm716, %v6693, %v6670
        %v6695 = vsel %vm718, %v6694, %v6674
        %v6696 = vsel %vm720, %v6695, %v6678
        %v6697 = vsel %vm722, %v6696, %v6682
        %v6698 = vld [vmem:[%s3] sm:$0xff]
        %v6699 = vld [vmem:[%s4] sm:$0xff]
        %6701 = vset.pattern.permute.xlu0 0
        %6702 = vperm.xlu0 %6701, %v6699
        %v6703 = vpop.permute.xlu0 %6702
        %vm6705 = vcmask 588800
        %v6707 = vsel %vm6705, %v6698, 0
        %6709 = vmatprep.subr.mxu0 %v3545
        %6710 = vmatpush1.msra.mxu0 %v3538
        %6711 = vmatprep.subr.mxu0 %v3943
        %6712 = vmatpush1.msra.mxu0 %v3936
        %6713 = vmatprep.subr.mxu0 %v4333
        %6714 = vmatpush1.msra.mxu0 %v4326
        %6715 = vmatprep.subr.mxu0 %v4739
        %6716 = vmatpush1.msra.mxu0 %v4732
        %6717 = vmatprep.subr.mxu0 %v5129
        %6718 = vmatpush1.msra.mxu0 %v5122
        %6719 = vmatprep.subr.mxu0 %v5519
        %6720 = vmatpush1.msra.mxu0 %v5512
        %6721 = vmatprep.subr.mxu0 %v5917
        %6722 = vmatpush1.msra.mxu0 %v5910
        %6723 = vmatprep.subr.mxu0 %v6307
        %6724 = vmatpush1.msra.mxu0 %v6300
        %6725 = vmatprep.subr.mxu0 %v6697
        %6726 = vmatpush1.msra.mxu0 %v6690
        %6727 = vmatprep.subr.mxu0 0.0
        %6728 = vmatpush1.msra.mxu0 0.0
        %6729 = vmatprep.subr.mxu0 0.0
        %6730 = vmatpush1.msra.mxu0 0.0
        %6731 = vmatprep.subr.mxu0 0.0
        %6732 = vmatpush1.msra.mxu0 0.0
        %6733 = vmatprep.subr.mxu0 0.0
        %6734 = vmatpush1.msra.mxu0 0.0
        %6735 = vmatprep.subr.mxu0 0.0
        %6736 = vmatpush1.msra.mxu0 0.0
        %6737 = vmatprep.subr.mxu0 0.0
        %6738 = vmatpush1.msra.mxu0 0.0
        %6739 = vmatprep.subr.mxu0 0.0
        %6740 = vmatpush1.msra.mxu0 0.0
        %6741 = vmatprep.subr.mxu0 0.0
        %6742 = vmatpush1.msra.mxu0 0.0
        %6743 = vmatprep.subr.mxu0 0.0
        %6744 = vmatpush1.msra.mxu0 0.0
        %6745 = vmatprep.subr.mxu0 0.0
        %6746 = vmatpush1.msra.mxu0 0.0
        %6747 = vmatprep.subr.mxu0 0.0
        %6748 = vmatpush1.msra.mxu0 0.0
        %6749 = vmatprep.subr.mxu0 0.0
        %6750 = vmatpush1.msra.mxu0 0.0
        %6751 = vmatprep.subr.mxu0 0.0
        %6752 = vmatpush1.msra.mxu0 0.0
        %6753 = vmatprep.subr.mxu0 0.0
        %6754 = vmatpush1.msra.mxu0 0.0
        %6755 = vmatprep.subr.mxu0 0.0
        %6756 = vmatpush1.msra.mxu0 0.0
        %6757 = vmatprep.subr.mxu0 0.0
        %6758 = vmatpush1.msra.mxu0 0.0
        %6759 = vmatprep.subr.mxu0 0.0
        %6760 = vmatpush1.msra.mxu0 0.0
        %6761 = vmatprep.subr.mxu0 0.0
        %6762 = vmatpush1.msra.mxu0 0.0
        %6763 = vmatprep.subr.mxu0 0.0
        %6764 = vmatpush1.msra.mxu0 0.0
        %6765 = vmatprep.subr.mxu0 0.0
        %6766 = vmatpush1.msra.mxu0 0.0
        %6767 = vmatprep.subr.mxu0 0.0
        %6768 = vmatpush1.msra.mxu0 0.0
        %6769 = vmatprep.subr.mxu0 0.0
        %6770 = vmatpush1.msra.mxu0 0.0
        %6771 = vmatprep.subr.mxu0 0.0
        %6772 = vmatpush1.msra.mxu0 0.0
        %6773 = vmatprep.mubr.f32.mxu0 0.0
        %6774 = vmatmul.mubr.f32.gmra.mrb[0].mxu0 %v6707
        %v6775 = vpop.f32.mrb[0].mxu0
        %v6776 = vadd.f32 %v6703, %v6775
        %v6777 = vpop.f32.mrb[0].mxu0
        %v6778 = vadd.f32 %v6703, %v6777
        %6779 = vdwg.mxu0
        %v6780 = vmax.f32 %v6776, 0.0
        %v6781 = vmax.f32 %v6778, 0.0
        %6782 = vst [vmem:[%s230] sm:$0xff] %v6780
        %6783 = vst [vmem:[%s230 + $0x8] sm:$0xff] %v6781
        %s6784 = sand.u32 %s138, 1
        %s6785 = scalar_lea.sflag [#allocation4], %s6784
        %s6786 = sand.u32 %s138, 1
        %s6787 = smul.addr %s6786, 16
        %s6788 = scalar_lea.vmem [#allocation5], %s6787
        // Predicated region
        $region45: #{tpu_custom_call.1} parent=39 // pred_check
          %p6789 = pneg %p148
        $region46: #{tpu_custom_call.1} parent=39 // pred_check_branch
          %6791 = sbr.rel (%p6789) target = $region48
        $region47: #{tpu_custom_call.1} parent=39 // pred_region
          %s6793 = ssub.s32 256, 256
          %6794 = vsyncadd %s6785, %s6793
          %s6795 = smul.addr %s20, 2
          %s6796 = smul.addr %s6795, 128
          %s6797 = scalar_lea.hbm %s5, %s6796
          %s6799 = sshll.u32 %s6788, 4
          %s6800 = int_to_ptr.vmem [resolvable:$true] %s6799
          %6802 = dma.vmem_to_hbm [thread:$0]  %s6800, 256, %s6797, %s6785
        $region48: #{tpu_custom_call.1} parent=39 // pred_fallthru
          _
      $region40: #{tpu_custom_call.1} parent=5 // pred_fallthru
        _
      %p6803 = scmp.le.s32.totalorder 2, %s15
      // Predicated region
      $region49: #{tpu_custom_call.1} parent=5 // pred_check
        %p6804 = pneg %p6803
      $region50: #{tpu_custom_call.1} parent=5 // pred_check_branch
        %6806 = sbr.rel (%p6804) target = $region52
      $region51: #{tpu_custom_call.1} parent=5 // pred_region
        %s6807 = ssub.s32 %s15, 2
        // Predicated region
        $region53: #{tpu_custom_call.1} parent=51 // pred_check
          %p6808 = pneg %p154
        $region54: #{tpu_custom_call.1} parent=51 // pred_check_branch
          %6810 = sbr.rel (%p6808) target = $region56
        $region55: #{tpu_custom_call.1} parent=51 // pred_region
          %s6811 = sand.u32 %s139, 1
          %s6812 = scalar_lea.sflag [#allocation4], %s6811
          %s6813 = sand.u32 %s139, 1
          %s6814 = smul.addr %s6813, 16
          %s6815 = scalar_lea.vmem [#allocation5], %s6814
          %6816 = dma.done %s6812, 256
        $region56: #{tpu_custom_call.1} parent=51 // pred_fallthru
          _
      $region52: #{tpu_custom_call.1} parent=5 // pred_fallthru
        _
    $region6: #{tpu_custom_call.1} parent=1 // loop_footer
      %s19 = sadd.s32 1, %s15
    $region7: #{tpu_custom_call.1} parent=1 // loop_footer_branch
      %14 = sbr.rel target = $region3
    $region8: #{tpu_custom_call.1} parent=1 // loop_exit
      _
    %6817 = vsyncpa [#allocation3], 1
    %s6818 = scalar_lea.sflag [#allocation3], 1
    %6819 = vsyncpa %s6818, 1
    %6820 = vsyncpa [#allocation4], 1
    %s6821 = scalar_lea.sflag [#allocation4], 1
    %6822 = vsyncpa %s6821, 1

</llo_original>
